<compile_context>
chip_gen: v5e
topology: v5e:2x2
jax: 0.10.0
libtpu: 0.0.40
codegen_flags: <defaults>
</compile_context>

<pallas_src>
import functools

import jax
import jax.numpy as jnp
from jax.experimental import pallas as pl
from jax.experimental.pallas import tpu as pltpu


def _elementwise_dtype():
    """bf16 exp/VPU chain on chips with a bf16 vector path (v6e/v7x), f32 otherwise."""
    try:
        kind = jax.devices()[0].device_kind.lower()
    except Exception:
        return jnp.float32
    for tag in ("v6", "v7", "7x"):
        if tag in kind:
            return jnp.bfloat16
    return jnp.float32  # v5e / v4 / unknown: no bf16 VPU/EUP path -> keep f32


def _rbe_kernel(pos_ref, centers_ref, neg_inv2v_ref, emb_ref, out_ref,
                *, n_chr, compute_dtype):
    # pos_ref       : VMEM (Cb, TB, Lp, 1) f32  -- positions, rows sublane-major
    # centers_ref   : VMEM (Cn, K)         f32  -- resident whole table
    # neg_inv2v_ref : VMEM (Cn, K)         f32  -- resident: -0.5 * exp(-log_var)
    # emb_ref       : VMEM (Cb, K, D)      bf16 -- this chromosome block's embeddings
    # out_ref       : VMEM (TB, Cb, Lp, D) f32  -- direct (B, Cn, L, D) layout tile
    cb, tb, lp, _ = pos_ref.shape
    d = out_ref.shape[-1]
    tm = tb * lp
    ch_base = pl.program_id(0) * cb

    for c in range(cb):                              # unrolled, static trip count
        # Clamp for a ragged last chromosome block (results there are masked out).
        ch = jnp.minimum(ch_base + c, n_chr - 1)
        p = pos_ref[c].reshape(tm, 1)                # (TM, 1) f32, tile-aligned reshape
        cen = centers_ref[pl.ds(ch, 1), :]           # (1, K) f32
        n2v = neg_inv2v_ref[pl.ds(ch, 1), :]         # (1, K) f32

        # Quadratic kept in f32 (centers spacing ~1/K would be lost in bf16).
        diff = p - cen                               # (TM, K)
        arg = diff * diff * n2v                      # = -(p-c)^2 / (2 var), <= 0

        # EUP-bound chain: bf16 exps on v6e/v7x (packed), f32 on v5e.
        g = jnp.exp(arg.astype(compute_dtype))       # gaussian weights in [0, 1]
        # softmax over K: g bounded -> exp(g) cannot overflow, no row-max needed.
        e = jnp.exp(g)                               # un-normalized weights in [1, e]
        denom = jnp.sum(e.astype(jnp.float32), axis=-1, keepdims=True)   # (TM, 1)
        inv_norm = pl.reciprocal(denom, approx=True)                     # EUP slot

        # (TM, K) @ (K, D) on the MXU: bf16 operands, f32 accumulation.
        acc = jnp.dot(e.astype(jnp.bfloat16), emb_ref[c],
                      preferred_element_type=jnp.float32)                # (TM, D)
        out_ref[:, c, :, :] = ((acc * inv_norm)
                               .reshape(tb, lp, d).astype(out_ref.dtype))


def radial_basis_embedding_chr(chromosome, position, embeddings, centers,
                               log_variances, *, compute_dtype=None):
    """Forward pass of RadialBasisEmbeddingChr.

    chromosome   : (B,) int32  -- unused by the PyTorch forward; kept for parity.
    position     : (B, Cn, L) f32 -- Cn chromosomes used (PyTorch hardcodes 23).
    embeddings   : (C, K, D) f32
    centers      : (C, K)    f32  (the (1,1,C,K) parameter, squeezed)
    log_variances: (C, K)    f32  (the (1,1,C,K) parameter, squeezed)
    Returns (B, Cn*L, D) float32.
    """
    del chromosome  # not used by the reference forward
    B, Cn, L = position.shape
    C, K, D = embeddings.shape
    assert Cn <= C, "position references more chromosomes than parameters hold"
    # Perf note (not correctness): K, D not multiples of 128 -> lane-masked
    # stores / padded MXU tiles.

    if compute_dtype is None:
        compute_dtype = _elementwise_dtype()

    # Pad L to a sublane multiple so all in-kernel reshapes are tile-aligned.
    Lp = ((L + 7) // 8) * 8
    pos = position.astype(jnp.float32)
    if Lp != L:
        pos = jnp.pad(pos, ((0, 0), (0, 0), (0, Lp - L)))
    # (B, Cn, Lp) -> (Cn, B, Lp, 1): tiny input transpose; rows land sublane-major.
    pos_t = jnp.transpose(pos, (1, 0, 2))[..., None]

    centers_u = centers[:Cn].astype(jnp.float32)                           # (Cn, K)
    # Hoist exp(log_var), the divide and the sign out of the kernel.
    neg_inv2v_u = -0.5 * jnp.exp(-log_variances[:Cn].astype(jnp.float32))  # (Cn, K)
    # bf16 embeddings: half the HBM->VMEM bytes, MXU-native operands.
    emb_u = embeddings[:Cn].astype(jnp.bfloat16)                           # (Cn, K, D)

    # --- tiling --------------------------------------------------------------
    TM_TARGET = 256                                    # rows per matmul
    TB = max(1, min(B, TM_TARGET // Lp)) if Lp <= TM_TARGET else 1
    n_bt = pl.cdiv(B, TB)

    # Chromosomes per grid step, bounded by a conservative VMEM budget
    # (double-buffered blocks + f32 upper bound on elementwise temps).
    bytes_per_chr = (2 * K * D * 2                     # emb block (bf16), 2 buffers
                     + 2 * TB * Lp * 4                 # position block
                     + 2 * TB * Lp * D * 4             # output block
                     + 4 * TB * Lp * K * 4)            # elementwise temps
    VMEM_BUDGET = 8 * 1024 * 1024                      # safe on v5e/v6e/v7x defaults
    Cb = int(max(1, min(Cn, VMEM_BUDGET // max(1, bytes_per_chr))))
    n_cb = pl.cdiv(Cn, Cb)

    kernel = functools.partial(_rbe_kernel, n_chr=Cn, compute_dtype=compute_dtype)

    cost = pl.CostEstimate(
        flops=2 * Cn * B * Lp * K * D,
        transcendentals=2 * Cn * B * Lp * K,
        bytes_accessed=(n_bt * Cn * K * D * 2          # embedding blocks
                        + Cn * B * Lp * 4              # positions
                        + B * Cn * Lp * D * 4          # output
                        + 2 * Cn * K * 4),             # centers + variance tables
    )

    out4 = pl.pallas_call(
        kernel,
        out_shape=jax.ShapeDtypeStruct((B, Cn, Lp, D), jnp.float32),
        grid=(n_cb, n_bt),
        in_specs=[
            # positions: (Cb, TB, Lp, 1) tile per step
            pl.BlockSpec((Cb, TB, Lp, 1), lambda cb, bt: (cb, bt, 0, 0)),
            # centers / -1/(2 var): whole dense tables, VMEM-resident for the call
            pl.BlockSpec((Cn, K), lambda cb, bt: (0, 0)),
            pl.BlockSpec((Cn, K), lambda cb, bt: (0, 0)),
            # embedding block: fetched once per chromosome block (no bt dependence)
            pl.BlockSpec((Cb, K, D), lambda cb, bt: (cb, 0, 0)),
        ],
        # Output written directly in (B, Cn, L, D) layout -> no post-call transpose.
        out_specs=pl.BlockSpec((TB, Cb, Lp, D), lambda cb, bt: (bt, cb, 0, 0)),
        compiler_params=pltpu.CompilerParams(
            dimension_semantics=("parallel", "arbitrary")),
        cost_estimate=cost,
    )(pos_t, centers_u, neg_inv2v_u, emb_u)

    # (B, Cn, Lp, D) -> (B, Cn*L, D).  When L % 8 == 0 (no padding) this is a
    # free metadata reshape; otherwise it costs one slice copy.
    if Lp != L:
        out4 = out4[:, :, :L, :]
    return out4.reshape(B, Cn * L, D)


def radial_basis_embedding_chr_ref(position, embeddings, centers,
                                   log_variances):
    """Pure-JAX f32 reference matching the PyTorch forward semantics."""
    B, Cn, L = position.shape
    D = embeddings.shape[-1]
    c = centers[:Cn][None, :, None, :]                           # (1, Cn, 1, K)
    var = jnp.exp(log_variances[:Cn])[None, :, None, :]          # (1, Cn, 1, K)
    g = jnp.exp(-((position[..., None] - c) ** 2) / (2.0 * var))  # (B,Cn,L,K)
    w = jax.nn.softmax(g, axis=-1)
    out = jnp.einsum("bclk,ckd->bcld", w, embeddings[:Cn])       # (B, Cn, L, D)
    return out.reshape(B, Cn * L, D)


if __name__ == "__main__":
    # Small deterministic shapes consistent with the module
    # (forward hardcodes 23 chromosomes; K default is 512 -> shrunk for demo).
    n_chromosomes = 23     # C (and Cn used by the forward)
    n_emb_per_chr = 128    # K
    embedding_dim = 128    # D
    batch_size = 2         # B
    n_pos_per_chr = 8      # L  (positions per chromosome in the input)

    key = jax.random.PRNGKey(0)
    k_emb, k_pos = jax.random.split(key, 2)

    # Parameters, mirroring nn.Module __init__:
    #   embeddings    ~ randn(C, K, D)
    #   centers       = linspace(0, 1, K) tiled over chromosomes
    #   log_variances = full(C, K) with -5.0
    embeddings = jax.random.normal(
        k_emb, (n_chromosomes, n_emb_per_chr, embedding_dim),
        dtype=jnp.float32)
    centers = jnp.tile(
        jnp.linspace(0.0, 1.0, n_emb_per_chr, dtype=jnp.float32)[None, :],
        (n_chromosomes, 1))
    log_variances = jnp.full((n_chromosomes, n_emb_per_chr), -5.0,
                             dtype=jnp.float32)

    # Inputs. `chromosome` is unused by the forward (kept for signature parity).
    chromosome = jnp.arange(batch_size, dtype=jnp.int32) % n_chromosomes
    position = jax.random.uniform(
        k_pos, (batch_size, n_chromosomes, n_pos_per_chr), dtype=jnp.float32)

    out = radial_basis_embedding_chr(chromosome, position, embeddings,
                                     centers, log_variances)
    out = jax.block_until_ready(out)

    ref = radial_basis_embedding_chr_ref(position, embeddings, centers,
                                         log_variances)
    assert out.shape == (batch_size, n_chromosomes * n_pos_per_chr,
                         embedding_dim)
    max_err = jnp.max(jnp.abs(out - ref))
    # Tolerance covers the intentional bf16 matmul operands / bf16 exp chain
    # (f32 accumulation and f32 quadratic) and the approx reciprocal.
    assert jnp.allclose(out, ref, atol=2e-2, rtol=2e-2), (
        f"max abs err = {max_err}")

    print("KERNEL_OK")
</pallas_src>

<mosaic_0001>
module attributes {stable_mosaic.version = 11 : i64} {
  func.func @_rbe_kernel(%arg0: i32, %arg1: i32, %arg2: memref<23x2x8x1xf32, #tpu.memory_space<vmem>>, %arg3: memref<23x128xf32, #tpu.memory_space<vmem>>, %arg4: memref<23x128xf32, #tpu.memory_space<vmem>>, %arg5: memref<23x128x128xbf16, #tpu.memory_space<vmem>>, %arg6: memref<2x23x8x128xf32, #tpu.memory_space<vmem>>) attributes {dimension_semantics = [#tpu.dimension_semantics<parallel>, #tpu.dimension_semantics<arbitrary>], iteration_bounds = array<i64: 1, 1>, scalar_prefetch = 0 : i64, scratch_operands = 0 : i64, tpu.core_type = #tpu.core_type<tc>, window_params = [{transform_indices = @transform_0, window_bounds = array<i64: 23, 2, 8, 1>}, {pipeline_mode = #tpu.pipeline_mode<synchronous>, transform_indices = @transform_1, window_bounds = array<i64: 23, 128>}, {pipeline_mode = #tpu.pipeline_mode<synchronous>, transform_indices = @transform_2, window_bounds = array<i64: 23, 128>}, {transform_indices = @transform_3, window_bounds = array<i64: 23, 128, 128>}, {transform_indices = @transform_4, window_bounds = array<i64: 2, 23, 8, 128>}]} {
    %c23_i32 = arith.constant 23 : i32
    %0 = arith.muli %arg0, %c23_i32 : i32
    %c0_i32 = arith.constant 0 : i32
    %1 = arith.addi %0, %c0_i32 : i32
    %c22_i32 = arith.constant 22 : i32
    %2 = arith.minsi %1, %c22_i32 : i32
    %c0 = arith.constant 0 : index
    %c0_0 = arith.constant 0 : index
    %c0_1 = arith.constant 0 : index
    %c0_2 = arith.constant 0 : index
    %3 = vector.load %arg2[%c0, %c0_0, %c0_1, %c0_2] : memref<23x2x8x1xf32, #tpu.memory_space<vmem>>, vector<1x2x8x1xf32>
    %4 = vector.shape_cast %3 : vector<1x2x8x1xf32> to vector<2x8x1xf32>
    %5 = vector.shape_cast %4 : vector<2x8x1xf32> to vector<16x1xf32>
    %6 = arith.index_cast %2 : i32 to index
    %c0_3 = arith.constant 0 : index
    %7 = vector.load %arg3[%6, %c0_3] : memref<23x128xf32, #tpu.memory_space<vmem>>, vector<1x128xf32>
    %8 = arith.index_cast %2 : i32 to index
    %c0_4 = arith.constant 0 : index
    %9 = vector.load %arg4[%8, %c0_4] : memref<23x128xf32, #tpu.memory_space<vmem>>, vector<1x128xf32>
    %10 = vector.broadcast %5 : vector<16x1xf32> to vector<16x128xf32>
    %11 = vector.broadcast %7 : vector<1x128xf32> to vector<16x128xf32>
    %12 = arith.subf %10, %11 : vector<16x128xf32>
    %13 = arith.mulf %12, %12 : vector<16x128xf32>
    %14 = vector.broadcast %9 : vector<1x128xf32> to vector<16x128xf32>
    %15 = arith.mulf %13, %14 : vector<16x128xf32>
    %16 = math.exp %15 : vector<16x128xf32>
    %17 = math.exp %16 : vector<16x128xf32>
    %cst = arith.constant dense<0.000000e+00> : vector<16xf32>
    %18 = vector.multi_reduction <add>, %17, %cst [1] : vector<16x128xf32> to vector<16xf32>
    %19 = vector.shape_cast %18 : vector<16xf32> to vector<16x1xf32>
    %20 = tpu.reciprocal %19 {approx = true} : vector<16x1xf32> -> vector<16x1xf32>
    %21 = arith.truncf %17 : vector<16x128xf32> to vector<16x128xbf16>
    %c0_5 = arith.constant 0 : index
    %c0_6 = arith.constant 0 : index
    %c0_7 = arith.constant 0 : index
    %22 = vector.load %arg5[%c0_5, %c0_6, %c0_7] : memref<23x128x128xbf16, #tpu.memory_space<vmem>>, vector<1x128x128xbf16>
    %23 = vector.shape_cast %22 : vector<1x128x128xbf16> to vector<128x128xbf16>
    %cst_8 = arith.constant dense<0.000000e+00> : vector<16x128xf32>
    %24 = tpu.matmul %21, %23, %cst_8 {dimension_numbers = #tpu.dot_dimension_numbers<[1], [0], [0], [1], [0, 0, 1, 1], [], []>} : vector<16x128xbf16>, vector<128x128xbf16>, vector<16x128xf32> -> vector<16x128xf32>
    %25 = vector.broadcast %20 : vector<16x1xf32> to vector<16x128xf32>
    %26 = arith.mulf %24, %25 : vector<16x128xf32>
    %27 = vector.shape_cast %26 : vector<16x128xf32> to vector<2x8x128xf32>
    %c0_9 = arith.constant 0 : index
    %c0_10 = arith.constant 0 : index
    %c0_11 = arith.constant 0 : index
    %c0_12 = arith.constant 0 : index
    %28 = vector.load %arg6[%c0_9, %c0_10, %c0_11, %c0_12] : memref<2x23x8x128xf32, #tpu.memory_space<vmem>>, vector<2x1x8x128xf32>
    %29 = vector.shape_cast %28 : vector<2x1x8x128xf32> to vector<2x8x128xf32>
    %30 = vector.shape_cast %27 : vector<2x8x128xf32> to vector<2x1x8x128xf32>
    tpu.vector_store %arg6[%c0_9, %c0_10, %c0_11, %c0_12], %30 {strides = array<i32>} : memref<2x23x8x128xf32, #tpu.memory_space<vmem>>, vector<2x1x8x128xf32>,
    %c1_i32 = arith.constant 1 : i32
    %31 = arith.addi %0, %c1_i32 : i32
    %c22_i32_13 = arith.constant 22 : i32
    %32 = arith.minsi %31, %c22_i32_13 : i32
    %c1 = arith.constant 1 : index
    %c0_14 = arith.constant 0 : index
    %c0_15 = arith.constant 0 : index
    %c0_16 = arith.constant 0 : index
    %33 = vector.load %arg2[%c1, %c0_14, %c0_15, %c0_16] : memref<23x2x8x1xf32, #tpu.memory_space<vmem>>, vector<1x2x8x1xf32>
    %34 = vector.shape_cast %33 : vector<1x2x8x1xf32> to vector<2x8x1xf32>
    %35 = vector.shape_cast %34 : vector<2x8x1xf32> to vector<16x1xf32>
    %36 = arith.index_cast %32 : i32 to index
    %c0_17 = arith.constant 0 : index
    %37 = vector.load %arg3[%36, %c0_17] : memref<23x128xf32, #tpu.memory_space<vmem>>, vector<1x128xf32>
    %38 = arith.index_cast %32 : i32 to index
    %c0_18 = arith.constant 0 : index
    %39 = vector.load %arg4[%38, %c0_18] : memref<23x128xf32, #tpu.memory_space<vmem>>, vector<1x128xf32>
    %40 = vector.broadcast %35 : vector<16x1xf32> to vector<16x128xf32>
    %41 = vector.broadcast %37 : vector<1x128xf32> to vector<16x128xf32>
    %42 = arith.subf %40, %41 : vector<16x128xf32>
    %43 = arith.mulf %42, %42 : vector<16x128xf32>
    %44 = vector.broadcast %39 : vector<1x128xf32> to vector<16x128xf32>
    %45 = arith.mulf %43, %44 : vector<16x128xf32>
    %46 = math.exp %45 : vector<16x128xf32>
    %47 = math.exp %46 : vector<16x128xf32>
    %cst_19 = arith.constant dense<0.000000e+00> : vector<16xf32>
    %48 = vector.multi_reduction <add>, %47, %cst_19 [1] : vector<16x128xf32> to vector<16xf32>
    %49 = vector.shape_cast %48 : vector<16xf32> to vector<16x1xf32>
    %50 = tpu.reciprocal %49 {approx = true} : vector<16x1xf32> -> vector<16x1xf32>
    %51 = arith.truncf %47 : vector<16x128xf32> to vector<16x128xbf16>
    %c1_20 = arith.constant 1 : index
    %c0_21 = arith.constant 0 : index
    %c0_22 = arith.constant 0 : index
    %52 = vector.load %arg5[%c1_20, %c0_21, %c0_22] : memref<23x128x128xbf16, #tpu.memory_space<vmem>>, vector<1x128x128xbf16>
    %53 = vector.shape_cast %52 : vector<1x128x128xbf16> to vector<128x128xbf16>
    %cst_23 = arith.constant dense<0.000000e+00> : vector<16x128xf32>
    %54 = tpu.matmul %51, %53, %cst_23 {dimension_numbers = #tpu.dot_dimension_numbers<[1], [0], [0], [1], [0, 0, 1, 1], [], []>} : vector<16x128xbf16>, vector<128x128xbf16>, vector<16x128xf32> -> vector<16x128xf32>
    %55 = vector.broadcast %50 : vector<16x1xf32> to vector<16x128xf32>
    %56 = arith.mulf %54, %55 : vector<16x128xf32>
    %57 = vector.shape_cast %56 : vector<16x128xf32> to vector<2x8x128xf32>
    %c0_24 = arith.constant 0 : index
    %c1_25 = arith.constant 1 : index
    %c0_26 = arith.constant 0 : index
    %c0_27 = arith.constant 0 : index
    %58 = vector.load %arg6[%c0_24, %c1_25, %c0_26, %c0_27] : memref<2x23x8x128xf32, #tpu.memory_space<vmem>>, vector<2x1x8x128xf32>
    %59 = vector.shape_cast %58 : vector<2x1x8x128xf32> to vector<2x8x128xf32>
    %60 = vector.shape_cast %57 : vector<2x8x128xf32> to vector<2x1x8x128xf32>
    tpu.vector_store %arg6[%c0_24, %c1_25, %c0_26, %c0_27], %60 {strides = array<i32>} : memref<2x23x8x128xf32, #tpu.memory_space<vmem>>, vector<2x1x8x128xf32>,
    %c2_i32 = arith.constant 2 : i32
    %61 = arith.addi %0, %c2_i32 : i32
    %c22_i32_28 = arith.constant 22 : i32
    %62 = arith.minsi %61, %c22_i32_28 : i32
    %c2 = arith.constant 2 : index
    %c0_29 = arith.constant 0 : index
    %c0_30 = arith.constant 0 : index
    %c0_31 = arith.constant 0 : index
    %63 = vector.load %arg2[%c2, %c0_29, %c0_30, %c0_31] : memref<23x2x8x1xf32, #tpu.memory_space<vmem>>, vector<1x2x8x1xf32>
    %64 = vector.shape_cast %63 : vector<1x2x8x1xf32> to vector<2x8x1xf32>
    %65 = vector.shape_cast %64 : vector<2x8x1xf32> to vector<16x1xf32>
    %66 = arith.index_cast %62 : i32 to index
    %c0_32 = arith.constant 0 : index
    %67 = vector.load %arg3[%66, %c0_32] : memref<23x128xf32, #tpu.memory_space<vmem>>, vector<1x128xf32>
    %68 = arith.index_cast %62 : i32 to index
    %c0_33 = arith.constant 0 : index
    %69 = vector.load %arg4[%68, %c0_33] : memref<23x128xf32, #tpu.memory_space<vmem>>, vector<1x128xf32>
    %70 = vector.broadcast %65 : vector<16x1xf32> to vector<16x128xf32>
    %71 = vector.broadcast %67 : vector<1x128xf32> to vector<16x128xf32>
    %72 = arith.subf %70, %71 : vector<16x128xf32>
    %73 = arith.mulf %72, %72 : vector<16x128xf32>
    %74 = vector.broadcast %69 : vector<1x128xf32> to vector<16x128xf32>
    %75 = arith.mulf %73, %74 : vector<16x128xf32>
    %76 = math.exp %75 : vector<16x128xf32>
    %77 = math.exp %76 : vector<16x128xf32>
    %cst_34 = arith.constant dense<0.000000e+00> : vector<16xf32>
    %78 = vector.multi_reduction <add>, %77, %cst_34 [1] : vector<16x128xf32> to vector<16xf32>
    %79 = vector.shape_cast %78 : vector<16xf32> to vector<16x1xf32>
    %80 = tpu.reciprocal %79 {approx = true} : vector<16x1xf32> -> vector<16x1xf32>
    %81 = arith.truncf %77 : vector<16x128xf32> to vector<16x128xbf16>
    %c2_35 = arith.constant 2 : index
    %c0_36 = arith.constant 0 : index
    %c0_37 = arith.constant 0 : index
    %82 = vector.load %arg5[%c2_35, %c0_36, %c0_37] : memref<23x128x128xbf16, #tpu.memory_space<vmem>>, vector<1x128x128xbf16>
    %83 = vector.shape_cast %82 : vector<1x128x128xbf16> to vector<128x128xbf16>
    %cst_38 = arith.constant dense<0.000000e+00> : vector<16x128xf32>
    %84 = tpu.matmul %81, %83, %cst_38 {dimension_numbers = #tpu.dot_dimension_numbers<[1], [0], [0], [1], [0, 0, 1, 1], [], []>} : vector<16x128xbf16>, vector<128x128xbf16>, vector<16x128xf32> -> vector<16x128xf32>
    %85 = vector.broadcast %80 : vector<16x1xf32> to vector<16x128xf32>
    %86 = arith.mulf %84, %85 : vector<16x128xf32>
    %87 = vector.shape_cast %86 : vector<16x128xf32> to vector<2x8x128xf32>
    %c0_39 = arith.constant 0 : index
    %c2_40 = arith.constant 2 : index
    %c0_41 = arith.constant 0 : index
    %c0_42 = arith.constant 0 : index
    %88 = vector.load %arg6[%c0_39, %c2_40, %c0_41, %c0_42] : memref<2x23x8x128xf32, #tpu.memory_space<vmem>>, vector<2x1x8x128xf32>
    %89 = vector.shape_cast %88 : vector<2x1x8x128xf32> to vector<2x8x128xf32>
    %90 = vector.shape_cast %87 : vector<2x8x128xf32> to vector<2x1x8x128xf32>
    tpu.vector_store %arg6[%c0_39, %c2_40, %c0_41, %c0_42], %90 {strides = array<i32>} : memref<2x23x8x128xf32, #tpu.memory_space<vmem>>, vector<2x1x8x128xf32>,
    %c3_i32 = arith.constant 3 : i32
    %91 = arith.addi %0, %c3_i32 : i32
    %c22_i32_43 = arith.constant 22 : i32
    %92 = arith.minsi %91, %c22_i32_43 : i32
    %c3 = arith.constant 3 : index
    %c0_44 = arith.constant 0 : index
    %c0_45 = arith.constant 0 : index
    %c0_46 = arith.constant 0 : index
    %93 = vector.load %arg2[%c3, %c0_44, %c0_45, %c0_46] : memref<23x2x8x1xf32, #tpu.memory_space<vmem>>, vector<1x2x8x1xf32>
    %94 = vector.shape_cast %93 : vector<1x2x8x1xf32> to vector<2x8x1xf32>
    %95 = vector.shape_cast %94 : vector<2x8x1xf32> to vector<16x1xf32>
    %96 = arith.index_cast %92 : i32 to index
    %c0_47 = arith.constant 0 : index
    %97 = vector.load %arg3[%96, %c0_47] : memref<23x128xf32, #tpu.memory_space<vmem>>, vector<1x128xf32>
    %98 = arith.index_cast %92 : i32 to index
    %c0_48 = arith.constant 0 : index
    %99 = vector.load %arg4[%98, %c0_48] : memref<23x128xf32, #tpu.memory_space<vmem>>, vector<1x128xf32>
    %100 = vector.broadcast %95 : vector<16x1xf32> to vector<16x128xf32>
    %101 = vector.broadcast %97 : vector<1x128xf32> to vector<16x128xf32>
    %102 = arith.subf %100, %101 : vector<16x128xf32>
    %103 = arith.mulf %102, %102 : vector<16x128xf32>
    %104 = vector.broadcast %99 : vector<1x128xf32> to vector<16x128xf32>
    %105 = arith.mulf %103, %104 : vector<16x128xf32>
    %106 = math.exp %105 : vector<16x128xf32>
    %107 = math.exp %106 : vector<16x128xf32>
    %cst_49 = arith.constant dense<0.000000e+00> : vector<16xf32>
    %108 = vector.multi_reduction <add>, %107, %cst_49 [1] : vector<16x128xf32> to vector<16xf32>
    %109 = vector.shape_cast %108 : vector<16xf32> to vector<16x1xf32>
    %110 = tpu.reciprocal %109 {approx = true} : vector<16x1xf32> -> vector<16x1xf32>
    %111 = arith.truncf %107 : vector<16x128xf32> to vector<16x128xbf16>
    %c3_50 = arith.constant 3 : index
    %c0_51 = arith.constant 0 : index
    %c0_52 = arith.constant 0 : index
    %112 = vector.load %arg5[%c3_50, %c0_51, %c0_52] : memref<23x128x128xbf16, #tpu.memory_space<vmem>>, vector<1x128x128xbf16>
    %113 = vector.shape_cast %112 : vector<1x128x128xbf16> to vector<128x128xbf16>
    %cst_53 = arith.constant dense<0.000000e+00> : vector<16x128xf32>
    %114 = tpu.matmul %111, %113, %cst_53 {dimension_numbers = #tpu.dot_dimension_numbers<[1], [0], [0], [1], [0, 0, 1, 1], [], []>} : vector<16x128xbf16>, vector<128x128xbf16>, vector<16x128xf32> -> vector<16x128xf32>
    %115 = vector.broadcast %110 : vector<16x1xf32> to vector<16x128xf32>
    %116 = arith.mulf %114, %115 : vector<16x128xf32>
    %117 = vector.shape_cast %116 : vector<16x128xf32> to vector<2x8x128xf32>
    %c0_54 = arith.constant 0 : index
    %c3_55 = arith.constant 3 : index
    %c0_56 = arith.constant 0 : index
    %c0_57 = arith.constant 0 : index
    %118 = vector.load %arg6[%c0_54, %c3_55, %c0_56, %c0_57] : memref<2x23x8x128xf32, #tpu.memory_space<vmem>>, vector<2x1x8x128xf32>
    %119 = vector.shape_cast %118 : vector<2x1x8x128xf32> to vector<2x8x128xf32>
    %120 = vector.shape_cast %117 : vector<2x8x128xf32> to vector<2x1x8x128xf32>
    tpu.vector_store %arg6[%c0_54, %c3_55, %c0_56, %c0_57], %120 {strides = array<i32>} : memref<2x23x8x128xf32, #tpu.memory_space<vmem>>, vector<2x1x8x128xf32>,
    %c4_i32 = arith.constant 4 : i32
    %121 = arith.addi %0, %c4_i32 : i32
    %c22_i32_58 = arith.constant 22 : i32
    %122 = arith.minsi %121, %c22_i32_58 : i32
    %c4 = arith.constant 4 : index
    %c0_59 = arith.constant 0 : index
    %c0_60 = arith.constant 0 : index
    %c0_61 = arith.constant 0 : index
    %123 = vector.load %arg2[%c4, %c0_59, %c0_60, %c0_61] : memref<23x2x8x1xf32, #tpu.memory_space<vmem>>, vector<1x2x8x1xf32>
    %124 = vector.shape_cast %123 : vector<1x2x8x1xf32> to vector<2x8x1xf32>
    %125 = vector.shape_cast %124 : vector<2x8x1xf32> to vector<16x1xf32>
    %126 = arith.index_cast %122 : i32 to index
    %c0_62 = arith.constant 0 : index
    %127 = vector.load %arg3[%126, %c0_62] : memref<23x128xf32, #tpu.memory_space<vmem>>, vector<1x128xf32>
    %128 = arith.index_cast %122 : i32 to index
    %c0_63 = arith.constant 0 : index
    %129 = vector.load %arg4[%128, %c0_63] : memref<23x128xf32, #tpu.memory_space<vmem>>, vector<1x128xf32>
    %130 = vector.broadcast %125 : vector<16x1xf32> to vector<16x128xf32>
    %131 = vector.broadcast %127 : vector<1x128xf32> to vector<16x128xf32>
    %132 = arith.subf %130, %131 : vector<16x128xf32>
    %133 = arith.mulf %132, %132 : vector<16x128xf32>
    %134 = vector.broadcast %129 : vector<1x128xf32> to vector<16x128xf32>
    %135 = arith.mulf %133, %134 : vector<16x128xf32>
    %136 = math.exp %135 : vector<16x128xf32>
    %137 = math.exp %136 : vector<16x128xf32>
    %cst_64 = arith.constant dense<0.000000e+00> : vector<16xf32>
    %138 = vector.multi_reduction <add>, %137, %cst_64 [1] : vector<16x128xf32> to vector<16xf32>
    %139 = vector.shape_cast %138 : vector<16xf32> to vector<16x1xf32>
    %140 = tpu.reciprocal %139 {approx = true} : vector<16x1xf32> -> vector<16x1xf32>
    %141 = arith.truncf %137 : vector<16x128xf32> to vector<16x128xbf16>
    %c4_65 = arith.constant 4 : index
    %c0_66 = arith.constant 0 : index
    %c0_67 = arith.constant 0 : index
    %142 = vector.load %arg5[%c4_65, %c0_66, %c0_67] : memref<23x128x128xbf16, #tpu.memory_space<vmem>>, vector<1x128x128xbf16>
    %143 = vector.shape_cast %142 : vector<1x128x128xbf16> to vector<128x128xbf16>
    %cst_68 = arith.constant dense<0.000000e+00> : vector<16x128xf32>
    %144 = tpu.matmul %141, %143, %cst_68 {dimension_numbers = #tpu.dot_dimension_numbers<[1], [0], [0], [1], [0, 0, 1, 1], [], []>} : vector<16x128xbf16>, vector<128x128xbf16>, vector<16x128xf32> -> vector<16x128xf32>
    %145 = vector.broadcast %140 : vector<16x1xf32> to vector<16x128xf32>
    %146 = arith.mulf %144, %145 : vector<16x128xf32>
    %147 = vector.shape_cast %146 : vector<16x128xf32> to vector<2x8x128xf32>
    %c0_69 = arith.constant 0 : index
    %c4_70 = arith.constant 4 : index
    %c0_71 = arith.constant 0 : index
    %c0_72 = arith.constant 0 : index
    %148 = vector.load %arg6[%c0_69, %c4_70, %c0_71, %c0_72] : memref<2x23x8x128xf32, #tpu.memory_space<vmem>>, vector<2x1x8x128xf32>
    %149 = vector.shape_cast %148 : vector<2x1x8x128xf32> to vector<2x8x128xf32>
    %150 = vector.shape_cast %147 : vector<2x8x128xf32> to vector<2x1x8x128xf32>
    tpu.vector_store %arg6[%c0_69, %c4_70, %c0_71, %c0_72], %150 {strides = array<i32>} : memref<2x23x8x128xf32, #tpu.memory_space<vmem>>, vector<2x1x8x128xf32>,
    %c5_i32 = arith.constant 5 : i32
    %151 = arith.addi %0, %c5_i32 : i32
    %c22_i32_73 = arith.constant 22 : i32
    %152 = arith.minsi %151, %c22_i32_73 : i32
    %c5 = arith.constant 5 : index
    %c0_74 = arith.constant 0 : index
    %c0_75 = arith.constant 0 : index
    %c0_76 = arith.constant 0 : index
    %153 = vector.load %arg2[%c5, %c0_74, %c0_75, %c0_76] : memref<23x2x8x1xf32, #tpu.memory_space<vmem>>, vector<1x2x8x1xf32>
    %154 = vector.shape_cast %153 : vector<1x2x8x1xf32> to vector<2x8x1xf32>
    %155 = vector.shape_cast %154 : vector<2x8x1xf32> to vector<16x1xf32>
    %156 = arith.index_cast %152 : i32 to index
    %c0_77 = arith.constant 0 : index
    %157 = vector.load %arg3[%156, %c0_77] : memref<23x128xf32, #tpu.memory_space<vmem>>, vector<1x128xf32>
    %158 = arith.index_cast %152 : i32 to index
    %c0_78 = arith.constant 0 : index
    %159 = vector.load %arg4[%158, %c0_78] : memref<23x128xf32, #tpu.memory_space<vmem>>, vector<1x128xf32>
    %160 = vector.broadcast %155 : vector<16x1xf32> to vector<16x128xf32>
    %161 = vector.broadcast %157 : vector<1x128xf32> to vector<16x128xf32>
    %162 = arith.subf %160, %161 : vector<16x128xf32>
    %163 = arith.mulf %162, %162 : vector<16x128xf32>
    %164 = vector.broadcast %159 : vector<1x128xf32> to vector<16x128xf32>
    %165 = arith.mulf %163, %164 : vector<16x128xf32>
    %166 = math.exp %165 : vector<16x128xf32>
    %167 = math.exp %166 : vector<16x128xf32>
    %cst_79 = arith.constant dense<0.000000e+00> : vector<16xf32>
    %168 = vector.multi_reduction <add>, %167, %cst_79 [1] : vector<16x128xf32> to vector<16xf32>
    %169 = vector.shape_cast %168 : vector<16xf32> to vector<16x1xf32>
    %170 = tpu.reciprocal %169 {approx = true} : vector<16x1xf32> -> vector<16x1xf32>
    %171 = arith.truncf %167 : vector<16x128xf32> to vector<16x128xbf16>
    %c5_80 = arith.constant 5 : index
    %c0_81 = arith.constant 0 : index
    %c0_82 = arith.constant 0 : index
    %172 = vector.load %arg5[%c5_80, %c0_81, %c0_82] : memref<23x128x128xbf16, #tpu.memory_space<vmem>>, vector<1x128x128xbf16>
    %173 = vector.shape_cast %172 : vector<1x128x128xbf16> to vector<128x128xbf16>
    %cst_83 = arith.constant dense<0.000000e+00> : vector<16x128xf32>
    %174 = tpu.matmul %171, %173, %cst_83 {dimension_numbers = #tpu.dot_dimension_numbers<[1], [0], [0], [1], [0, 0, 1, 1], [], []>} : vector<16x128xbf16>, vector<128x128xbf16>, vector<16x128xf32> -> vector<16x128xf32>
    %175 = vector.broadcast %170 : vector<16x1xf32> to vector<16x128xf32>
    %176 = arith.mulf %174, %175 : vector<16x128xf32>
    %177 = vector.shape_cast %176 : vector<16x128xf32> to vector<2x8x128xf32>
    %c0_84 = arith.constant 0 : index
    %c5_85 = arith.constant 5 : index
    %c0_86 = arith.constant 0 : index
    %c0_87 = arith.constant 0 : index
    %178 = vector.load %arg6[%c0_84, %c5_85, %c0_86, %c0_87] : memref<2x23x8x128xf32, #tpu.memory_space<vmem>>, vector<2x1x8x128xf32>
    %179 = vector.shape_cast %178 : vector<2x1x8x128xf32> to vector<2x8x128xf32>
    %180 = vector.shape_cast %177 : vector<2x8x128xf32> to vector<2x1x8x128xf32>
    tpu.vector_store %arg6[%c0_84, %c5_85, %c0_86, %c0_87], %180 {strides = array<i32>} : memref<2x23x8x128xf32, #tpu.memory_space<vmem>>, vector<2x1x8x128xf32>,
    %c6_i32 = arith.constant 6 : i32
    %181 = arith.addi %0, %c6_i32 : i32
    %c22_i32_88 = arith.constant 22 : i32
    %182 = arith.minsi %181, %c22_i32_88 : i32
    %c6 = arith.constant 6 : index
    %c0_89 = arith.constant 0 : index
    %c0_90 = arith.constant 0 : index
    %c0_91 = arith.constant 0 : index
    %183 = vector.load %arg2[%c6, %c0_89, %c0_90, %c0_91] : memref<23x2x8x1xf32, #tpu.memory_space<vmem>>, vector<1x2x8x1xf32>
    %184 = vector.shape_cast %183 : vector<1x2x8x1xf32> to vector<2x8x1xf32>
    %185 = vector.shape_cast %184 : vector<2x8x1xf32> to vector<16x1xf32>
    %186 = arith.index_cast %182 : i32 to index
    %c0_92 = arith.constant 0 : index
    %187 = vector.load %arg3[%186, %c0_92] : memref<23x128xf32, #tpu.memory_space<vmem>>, vector<1x128xf32>
    %188 = arith.index_cast %182 : i32 to index
    %c0_93 = arith.constant 0 : index
    %189 = vector.load %arg4[%188, %c0_93] : memref<23x128xf32, #tpu.memory_space<vmem>>, vector<1x128xf32>
    %190 = vector.broadcast %185 : vector<16x1xf32> to vector<16x128xf32>
    %191 = vector.broadcast %187 : vector<1x128xf32> to vector<16x128xf32>
    %192 = arith.subf %190, %191 : vector<16x128xf32>
    %193 = arith.mulf %192, %192 : vector<16x128xf32>
    %194 = vector.broadcast %189 : vector<1x128xf32> to vector<16x128xf32>
    %195 = arith.mulf %193, %194 : vector<16x128xf32>
    %196 = math.exp %195 : vector<16x128xf32>
    %197 = math.exp %196 : vector<16x128xf32>
    %cst_94 = arith.constant dense<0.000000e+00> : vector<16xf32>
    %198 = vector.multi_reduction <add>, %197, %cst_94 [1] : vector<16x128xf32> to vector<16xf32>
    %199 = vector.shape_cast %198 : vector<16xf32> to vector<16x1xf32>
    %200 = tpu.reciprocal %199 {approx = true} : vector<16x1xf32> -> vector<16x1xf32>
    %201 = arith.truncf %197 : vector<16x128xf32> to vector<16x128xbf16>
    %c6_95 = arith.constant 6 : index
    %c0_96 = arith.constant 0 : index
    %c0_97 = arith.constant 0 : index
    %202 = vector.load %arg5[%c6_95, %c0_96, %c0_97] : memref<23x128x128xbf16, #tpu.memory_space<vmem>>, vector<1x128x128xbf16>
    %203 = vector.shape_cast %202 : vector<1x128x128xbf16> to vector<128x128xbf16>
    %cst_98 = arith.constant dense<0.000000e+00> : vector<16x128xf32>
    %204 = tpu.matmul %201, %203, %cst_98 {dimension_numbers = #tpu.dot_dimension_numbers<[1], [0], [0], [1], [0, 0, 1, 1], [], []>} : vector<16x128xbf16>, vector<128x128xbf16>, vector<16x128xf32> -> vector<16x128xf32>
    %205 = vector.broadcast %200 : vector<16x1xf32> to vector<16x128xf32>
    %206 = arith.mulf %204, %205 : vector<16x128xf32>
    %207 = vector.shape_cast %206 : vector<16x128xf32> to vector<2x8x128xf32>
    %c0_99 = arith.constant 0 : index
    %c6_100 = arith.constant 6 : index
    %c0_101 = arith.constant 0 : index
    %c0_102 = arith.constant 0 : index
    %208 = vector.load %arg6[%c0_99, %c6_100, %c0_101, %c0_102] : memref<2x23x8x128xf32, #tpu.memory_space<vmem>>, vector<2x1x8x128xf32>
    %209 = vector.shape_cast %208 : vector<2x1x8x128xf32> to vector<2x8x128xf32>
    %210 = vector.shape_cast %207 : vector<2x8x128xf32> to vector<2x1x8x128xf32>
    tpu.vector_store %arg6[%c0_99, %c6_100, %c0_101, %c0_102], %210 {strides = array<i32>} : memref<2x23x8x128xf32, #tpu.memory_space<vmem>>, vector<2x1x8x128xf32>,
    %c7_i32 = arith.constant 7 : i32
    %211 = arith.addi %0, %c7_i32 : i32
    %c22_i32_103 = arith.constant 22 : i32
    %212 = arith.minsi %211, %c22_i32_103 : i32
    %c7 = arith.constant 7 : index
    %c0_104 = arith.constant 0 : index
    %c0_105 = arith.constant 0 : index
    %c0_106 = arith.constant 0 : index
    %213 = vector.load %arg2[%c7, %c0_104, %c0_105, %c0_106] : memref<23x2x8x1xf32, #tpu.memory_space<vmem>>, vector<1x2x8x1xf32>
    %214 = vector.shape_cast %213 : vector<1x2x8x1xf32> to vector<2x8x1xf32>
    %215 = vector.shape_cast %214 : vector<2x8x1xf32> to vector<16x1xf32>
    %216 = arith.index_cast %212 : i32 to index
    %c0_107 = arith.constant 0 : index
    %217 = vector.load %arg3[%216, %c0_107] : memref<23x128xf32, #tpu.memory_space<vmem>>, vector<1x128xf32>
    %218 = arith.index_cast %212 : i32 to index
    %c0_108 = arith.constant 0 : index
    %219 = vector.load %arg4[%218, %c0_108] : memref<23x128xf32, #tpu.memory_space<vmem>>, vector<1x128xf32>
    %220 = vector.broadcast %215 : vector<16x1xf32> to vector<16x128xf32>
    %221 = vector.broadcast %217 : vector<1x128xf32> to vector<16x128xf32>
    %222 = arith.subf %220, %221 : vector<16x128xf32>
    %223 = arith.mulf %222, %222 : vector<16x128xf32>
    %224 = vector.broadcast %219 : vector<1x128xf32> to vector<16x128xf32>
    %225 = arith.mulf %223, %224 : vector<16x128xf32>
    %226 = math.exp %225 : vector<16x128xf32>
    %227 = math.exp %226 : vector<16x128xf32>
    %cst_109 = arith.constant dense<0.000000e+00> : vector<16xf32>
    %228 = vector.multi_reduction <add>, %227, %cst_109 [1] : vector<16x128xf32> to vector<16xf32>
    %229 = vector.shape_cast %228 : vector<16xf32> to vector<16x1xf32>
    %230 = tpu.reciprocal %229 {approx = true} : vector<16x1xf32> -> vector<16x1xf32>
    %231 = arith.truncf %227 : vector<16x128xf32> to vector<16x128xbf16>
    %c7_110 = arith.constant 7 : index
    %c0_111 = arith.constant 0 : index
    %c0_112 = arith.constant 0 : index
    %232 = vector.load %arg5[%c7_110, %c0_111, %c0_112] : memref<23x128x128xbf16, #tpu.memory_space<vmem>>, vector<1x128x128xbf16>
    %233 = vector.shape_cast %232 : vector<1x128x128xbf16> to vector<128x128xbf16>
    %cst_113 = arith.constant dense<0.000000e+00> : vector<16x128xf32>
    %234 = tpu.matmul %231, %233, %cst_113 {dimension_numbers = #tpu.dot_dimension_numbers<[1], [0], [0], [1], [0, 0, 1, 1], [], []>} : vector<16x128xbf16>, vector<128x128xbf16>, vector<16x128xf32> -> vector<16x128xf32>
    %235 = vector.broadcast %230 : vector<16x1xf32> to vector<16x128xf32>
    %236 = arith.mulf %234, %235 : vector<16x128xf32>
    %237 = vector.shape_cast %236 : vector<16x128xf32> to vector<2x8x128xf32>
    %c0_114 = arith.constant 0 : index
    %c7_115 = arith.constant 7 : index
    %c0_116 = arith.constant 0 : index
    %c0_117 = arith.constant 0 : index
    %238 = vector.load %arg6[%c0_114, %c7_115, %c0_116, %c0_117] : memref<2x23x8x128xf32, #tpu.memory_space<vmem>>, vector<2x1x8x128xf32>
    %239 = vector.shape_cast %238 : vector<2x1x8x128xf32> to vector<2x8x128xf32>
    %240 = vector.shape_cast %237 : vector<2x8x128xf32> to vector<2x1x8x128xf32>
    tpu.vector_store %arg6[%c0_114, %c7_115, %c0_116, %c0_117], %240 {strides = array<i32>} : memref<2x23x8x128xf32, #tpu.memory_space<vmem>>, vector<2x1x8x128xf32>,
    %c8_i32 = arith.constant 8 : i32
    %241 = arith.addi %0, %c8_i32 : i32
    %c22_i32_118 = arith.constant 22 : i32
    %242 = arith.minsi %241, %c22_i32_118 : i32
    %c8 = arith.constant 8 : index
    %c0_119 = arith.constant 0 : index
    %c0_120 = arith.constant 0 : index
    %c0_121 = arith.constant 0 : index
    %243 = vector.load %arg2[%c8, %c0_119, %c0_120, %c0_121] : memref<23x2x8x1xf32, #tpu.memory_space<vmem>>, vector<1x2x8x1xf32>
    %244 = vector.shape_cast %243 : vector<1x2x8x1xf32> to vector<2x8x1xf32>
    %245 = vector.shape_cast %244 : vector<2x8x1xf32> to vector<16x1xf32>
    %246 = arith.index_cast %242 : i32 to index
    %c0_122 = arith.constant 0 : index
    %247 = vector.load %arg3[%246, %c0_122] : memref<23x128xf32, #tpu.memory_space<vmem>>, vector<1x128xf32>
    %248 = arith.index_cast %242 : i32 to index
    %c0_123 = arith.constant 0 : index
    %249 = vector.load %arg4[%248, %c0_123] : memref<23x128xf32, #tpu.memory_space<vmem>>, vector<1x128xf32>
    %250 = vector.broadcast %245 : vector<16x1xf32> to vector<16x128xf32>
    %251 = vector.broadcast %247 : vector<1x128xf32> to vector<16x128xf32>
    %252 = arith.subf %250, %251 : vector<16x128xf32>
    %253 = arith.mulf %252, %252 : vector<16x128xf32>
    %254 = vector.broadcast %249 : vector<1x128xf32> to vector<16x128xf32>
    %255 = arith.mulf %253, %254 : vector<16x128xf32>
    %256 = math.exp %255 : vector<16x128xf32>
    %257 = math.exp %256 : vector<16x128xf32>
    %cst_124 = arith.constant dense<0.000000e+00> : vector<16xf32>
    %258 = vector.multi_reduction <add>, %257, %cst_124 [1] : vector<16x128xf32> to vector<16xf32>
    %259 = vector.shape_cast %258 : vector<16xf32> to vector<16x1xf32>
    %260 = tpu.reciprocal %259 {approx = true} : vector<16x1xf32> -> vector<16x1xf32>
    %261 = arith.truncf %257 : vector<16x128xf32> to vector<16x128xbf16>
    %c8_125 = arith.constant 8 : index
    %c0_126 = arith.constant 0 : index
    %c0_127 = arith.constant 0 : index
    %262 = vector.load %arg5[%c8_125, %c0_126, %c0_127] : memref<23x128x128xbf16, #tpu.memory_space<vmem>>, vector<1x128x128xbf16>
    %263 = vector.shape_cast %262 : vector<1x128x128xbf16> to vector<128x128xbf16>
    %cst_128 = arith.constant dense<0.000000e+00> : vector<16x128xf32>
    %264 = tpu.matmul %261, %263, %cst_128 {dimension_numbers = #tpu.dot_dimension_numbers<[1], [0], [0], [1], [0, 0, 1, 1], [], []>} : vector<16x128xbf16>, vector<128x128xbf16>, vector<16x128xf32> -> vector<16x128xf32>
    %265 = vector.broadcast %260 : vector<16x1xf32> to vector<16x128xf32>
    %266 = arith.mulf %264, %265 : vector<16x128xf32>
    %267 = vector.shape_cast %266 : vector<16x128xf32> to vector<2x8x128xf32>
    %c0_129 = arith.constant 0 : index
    %c8_130 = arith.constant 8 : index
    %c0_131 = arith.constant 0 : index
    %c0_132 = arith.constant 0 : index
    %268 = vector.load %arg6[%c0_129, %c8_130, %c0_131, %c0_132] : memref<2x23x8x128xf32, #tpu.memory_space<vmem>>, vector<2x1x8x128xf32>
    %269 = vector.shape_cast %268 : vector<2x1x8x128xf32> to vector<2x8x128xf32>
    %270 = vector.shape_cast %267 : vector<2x8x128xf32> to vector<2x1x8x128xf32>
    tpu.vector_store %arg6[%c0_129, %c8_130, %c0_131, %c0_132], %270 {strides = array<i32>} : memref<2x23x8x128xf32, #tpu.memory_space<vmem>>, vector<2x1x8x128xf32>,
    %c9_i32 = arith.constant 9 : i32
    %271 = arith.addi %0, %c9_i32 : i32
    %c22_i32_133 = arith.constant 22 : i32
    %272 = arith.minsi %271, %c22_i32_133 : i32
    %c9 = arith.constant 9 : index
    %c0_134 = arith.constant 0 : index
    %c0_135 = arith.constant 0 : index
    %c0_136 = arith.constant 0 : index
    %273 = vector.load %arg2[%c9, %c0_134, %c0_135, %c0_136] : memref<23x2x8x1xf32, #tpu.memory_space<vmem>>, vector<1x2x8x1xf32>
    %274 = vector.shape_cast %273 : vector<1x2x8x1xf32> to vector<2x8x1xf32>
    %275 = vector.shape_cast %274 : vector<2x8x1xf32> to vector<16x1xf32>
    %276 = arith.index_cast %272 : i32 to index
    %c0_137 = arith.constant 0 : index
    %277 = vector.load %arg3[%276, %c0_137] : memref<23x128xf32, #tpu.memory_space<vmem>>, vector<1x128xf32>
    %278 = arith.index_cast %272 : i32 to index
    %c0_138 = arith.constant 0 : index
    %279 = vector.load %arg4[%278, %c0_138] : memref<23x128xf32, #tpu.memory_space<vmem>>, vector<1x128xf32>
    %280 = vector.broadcast %275 : vector<16x1xf32> to vector<16x128xf32>
    %281 = vector.broadcast %277 : vector<1x128xf32> to vector<16x128xf32>
    %282 = arith.subf %280, %281 : vector<16x128xf32>
    %283 = arith.mulf %282, %282 : vector<16x128xf32>
    %284 = vector.broadcast %279 : vector<1x128xf32> to vector<16x128xf32>
    %285 = arith.mulf %283, %284 : vector<16x128xf32>
    %286 = math.exp %285 : vector<16x128xf32>
    %287 = math.exp %286 : vector<16x128xf32>
    %cst_139 = arith.constant dense<0.000000e+00> : vector<16xf32>
    %288 = vector.multi_reduction <add>, %287, %cst_139 [1] : vector<16x128xf32> to vector<16xf32>
    %289 = vector.shape_cast %288 : vector<16xf32> to vector<16x1xf32>
    %290 = tpu.reciprocal %289 {approx = true} : vector<16x1xf32> -> vector<16x1xf32>
    %291 = arith.truncf %287 : vector<16x128xf32> to vector<16x128xbf16>
    %c9_140 = arith.constant 9 : index
    %c0_141 = arith.constant 0 : index
    %c0_142 = arith.constant 0 : index
    %292 = vector.load %arg5[%c9_140, %c0_141, %c0_142] : memref<23x128x128xbf16, #tpu.memory_space<vmem>>, vector<1x128x128xbf16>
    %293 = vector.shape_cast %292 : vector<1x128x128xbf16> to vector<128x128xbf16>
    %cst_143 = arith.constant dense<0.000000e+00> : vector<16x128xf32>
    %294 = tpu.matmul %291, %293, %cst_143 {dimension_numbers = #tpu.dot_dimension_numbers<[1], [0], [0], [1], [0, 0, 1, 1], [], []>} : vector<16x128xbf16>, vector<128x128xbf16>, vector<16x128xf32> -> vector<16x128xf32>
    %295 = vector.broadcast %290 : vector<16x1xf32> to vector<16x128xf32>
    %296 = arith.mulf %294, %295 : vector<16x128xf32>
    %297 = vector.shape_cast %296 : vector<16x128xf32> to vector<2x8x128xf32>
    %c0_144 = arith.constant 0 : index
    %c9_145 = arith.constant 9 : index
    %c0_146 = arith.constant 0 : index
    %c0_147 = arith.constant 0 : index
    %298 = vector.load %arg6[%c0_144, %c9_145, %c0_146, %c0_147] : memref<2x23x8x128xf32, #tpu.memory_space<vmem>>, vector<2x1x8x128xf32>
    %299 = vector.shape_cast %298 : vector<2x1x8x128xf32> to vector<2x8x128xf32>
    %300 = vector.shape_cast %297 : vector<2x8x128xf32> to vector<2x1x8x128xf32>
    tpu.vector_store %arg6[%c0_144, %c9_145, %c0_146, %c0_147], %300 {strides = array<i32>} : memref<2x23x8x128xf32, #tpu.memory_space<vmem>>, vector<2x1x8x128xf32>,
    %c10_i32 = arith.constant 10 : i32
    %301 = arith.addi %0, %c10_i32 : i32
    %c22_i32_148 = arith.constant 22 : i32
    %302 = arith.minsi %301, %c22_i32_148 : i32
    %c10 = arith.constant 10 : index
    %c0_149 = arith.constant 0 : index
    %c0_150 = arith.constant 0 : index
    %c0_151 = arith.constant 0 : index
    %303 = vector.load %arg2[%c10, %c0_149, %c0_150, %c0_151] : memref<23x2x8x1xf32, #tpu.memory_space<vmem>>, vector<1x2x8x1xf32>
    %304 = vector.shape_cast %303 : vector<1x2x8x1xf32> to vector<2x8x1xf32>
    %305 = vector.shape_cast %304 : vector<2x8x1xf32> to vector<16x1xf32>
    %306 = arith.index_cast %302 : i32 to index
    %c0_152 = arith.constant 0 : index
    %307 = vector.load %arg3[%306, %c0_152] : memref<23x128xf32, #tpu.memory_space<vmem>>, vector<1x128xf32>
    %308 = arith.index_cast %302 : i32 to index
    %c0_153 = arith.constant 0 : index
    %309 = vector.load %arg4[%308, %c0_153] : memref<23x128xf32, #tpu.memory_space<vmem>>, vector<1x128xf32>
    %310 = vector.broadcast %305 : vector<16x1xf32> to vector<16x128xf32>
    %311 = vector.broadcast %307 : vector<1x128xf32> to vector<16x128xf32>
    %312 = arith.subf %310, %311 : vector<16x128xf32>
    %313 = arith.mulf %312, %312 : vector<16x128xf32>
    %314 = vector.broadcast %309 : vector<1x128xf32> to vector<16x128xf32>
    %315 = arith.mulf %313, %314 : vector<16x128xf32>
    %316 = math.exp %315 : vector<16x128xf32>
    %317 = math.exp %316 : vector<16x128xf32>
    %cst_154 = arith.constant dense<0.000000e+00> : vector<16xf32>
    %318 = vector.multi_reduction <add>, %317, %cst_154 [1] : vector<16x128xf32> to vector<16xf32>
    %319 = vector.shape_cast %318 : vector<16xf32> to vector<16x1xf32>
    %320 = tpu.reciprocal %319 {approx = true} : vector<16x1xf32> -> vector<16x1xf32>
    %321 = arith.truncf %317 : vector<16x128xf32> to vector<16x128xbf16>
    %c10_155 = arith.constant 10 : index
    %c0_156 = arith.constant 0 : index
    %c0_157 = arith.constant 0 : index
    %322 = vector.load %arg5[%c10_155, %c0_156, %c0_157] : memref<23x128x128xbf16, #tpu.memory_space<vmem>>, vector<1x128x128xbf16>
    %323 = vector.shape_cast %322 : vector<1x128x128xbf16> to vector<128x128xbf16>
    %cst_158 = arith.constant dense<0.000000e+00> : vector<16x128xf32>
    %324 = tpu.matmul %321, %323, %cst_158 {dimension_numbers = #tpu.dot_dimension_numbers<[1], [0], [0], [1], [0, 0, 1, 1], [], []>} : vector<16x128xbf16>, vector<128x128xbf16>, vector<16x128xf32> -> vector<16x128xf32>
    %325 = vector.broadcast %320 : vector<16x1xf32> to vector<16x128xf32>
    %326 = arith.mulf %324, %325 : vector<16x128xf32>
    %327 = vector.shape_cast %326 : vector<16x128xf32> to vector<2x8x128xf32>
    %c0_159 = arith.constant 0 : index
    %c10_160 = arith.constant 10 : index
    %c0_161 = arith.constant 0 : index
    %c0_162 = arith.constant 0 : index
    %328 = vector.load %arg6[%c0_159, %c10_160, %c0_161, %c0_162] : memref<2x23x8x128xf32, #tpu.memory_space<vmem>>, vector<2x1x8x128xf32>
    %329 = vector.shape_cast %328 : vector<2x1x8x128xf32> to vector<2x8x128xf32>
    %330 = vector.shape_cast %327 : vector<2x8x128xf32> to vector<2x1x8x128xf32>
    tpu.vector_store %arg6[%c0_159, %c10_160, %c0_161, %c0_162], %330 {strides = array<i32>} : memref<2x23x8x128xf32, #tpu.memory_space<vmem>>, vector<2x1x8x128xf32>,
    %c11_i32 = arith.constant 11 : i32
    %331 = arith.addi %0, %c11_i32 : i32
    %c22_i32_163 = arith.constant 22 : i32
    %332 = arith.minsi %331, %c22_i32_163 : i32
    %c11 = arith.constant 11 : index
    %c0_164 = arith.constant 0 : index
    %c0_165 = arith.constant 0 : index
    %c0_166 = arith.constant 0 : index
    %333 = vector.load %arg2[%c11, %c0_164, %c0_165, %c0_166] : memref<23x2x8x1xf32, #tpu.memory_space<vmem>>, vector<1x2x8x1xf32>
    %334 = vector.shape_cast %333 : vector<1x2x8x1xf32> to vector<2x8x1xf32>
    %335 = vector.shape_cast %334 : vector<2x8x1xf32> to vector<16x1xf32>
    %336 = arith.index_cast %332 : i32 to index
    %c0_167 = arith.constant 0 : index
    %337 = vector.load %arg3[%336, %c0_167] : memref<23x128xf32, #tpu.memory_space<vmem>>, vector<1x128xf32>
    %338 = arith.index_cast %332 : i32 to index
    %c0_168 = arith.constant 0 : index
    %339 = vector.load %arg4[%338, %c0_168] : memref<23x128xf32, #tpu.memory_space<vmem>>, vector<1x128xf32>
    %340 = vector.broadcast %335 : vector<16x1xf32> to vector<16x128xf32>
    %341 = vector.broadcast %337 : vector<1x128xf32> to vector<16x128xf32>
    %342 = arith.subf %340, %341 : vector<16x128xf32>
    %343 = arith.mulf %342, %342 : vector<16x128xf32>
    %344 = vector.broadcast %339 : vector<1x128xf32> to vector<16x128xf32>
    %345 = arith.mulf %343, %344 : vector<16x128xf32>
    %346 = math.exp %345 : vector<16x128xf32>
    %347 = math.exp %346 : vector<16x128xf32>
    %cst_169 = arith.constant dense<0.000000e+00> : vector<16xf32>
    %348 = vector.multi_reduction <add>, %347, %cst_169 [1] : vector<16x128xf32> to vector<16xf32>
    %349 = vector.shape_cast %348 : vector<16xf32> to vector<16x1xf32>
    %350 = tpu.reciprocal %349 {approx = true} : vector<16x1xf32> -> vector<16x1xf32>
    %351 = arith.truncf %347 : vector<16x128xf32> to vector<16x128xbf16>
    %c11_170 = arith.constant 11 : index
    %c0_171 = arith.constant 0 : index
    %c0_172 = arith.constant 0 : index
    %352 = vector.load %arg5[%c11_170, %c0_171, %c0_172] : memref<23x128x128xbf16, #tpu.memory_space<vmem>>, vector<1x128x128xbf16>
    %353 = vector.shape_cast %352 : vector<1x128x128xbf16> to vector<128x128xbf16>
    %cst_173 = arith.constant dense<0.000000e+00> : vector<16x128xf32>
    %354 = tpu.matmul %351, %353, %cst_173 {dimension_numbers = #tpu.dot_dimension_numbers<[1], [0], [0], [1], [0, 0, 1, 1], [], []>} : vector<16x128xbf16>, vector<128x128xbf16>, vector<16x128xf32> -> vector<16x128xf32>
    %355 = vector.broadcast %350 : vector<16x1xf32> to vector<16x128xf32>
    %356 = arith.mulf %354, %355 : vector<16x128xf32>
    %357 = vector.shape_cast %356 : vector<16x128xf32> to vector<2x8x128xf32>
    %c0_174 = arith.constant 0 : index
    %c11_175 = arith.constant 11 : index
    %c0_176 = arith.constant 0 : index
    %c0_177 = arith.constant 0 : index
    %358 = vector.load %arg6[%c0_174, %c11_175, %c0_176, %c0_177] : memref<2x23x8x128xf32, #tpu.memory_space<vmem>>, vector<2x1x8x128xf32>
    %359 = vector.shape_cast %358 : vector<2x1x8x128xf32> to vector<2x8x128xf32>
    %360 = vector.shape_cast %357 : vector<2x8x128xf32> to vector<2x1x8x128xf32>
    tpu.vector_store %arg6[%c0_174, %c11_175, %c0_176, %c0_177], %360 {strides = array<i32>} : memref<2x23x8x128xf32, #tpu.memory_space<vmem>>, vector<2x1x8x128xf32>,
    %c12_i32 = arith.constant 12 : i32
    %361 = arith.addi %0, %c12_i32 : i32
    %c22_i32_178 = arith.constant 22 : i32
    %362 = arith.minsi %361, %c22_i32_178 : i32
    %c12 = arith.constant 12 : index
    %c0_179 = arith.constant 0 : index
    %c0_180 = arith.constant 0 : index
    %c0_181 = arith.constant 0 : index
    %363 = vector.load %arg2[%c12, %c0_179, %c0_180, %c0_181] : memref<23x2x8x1xf32, #tpu.memory_space<vmem>>, vector<1x2x8x1xf32>
    %364 = vector.shape_cast %363 : vector<1x2x8x1xf32> to vector<2x8x1xf32>
    %365 = vector.shape_cast %364 : vector<2x8x1xf32> to vector<16x1xf32>
    %366 = arith.index_cast %362 : i32 to index
    %c0_182 = arith.constant 0 : index
    %367 = vector.load %arg3[%366, %c0_182] : memref<23x128xf32, #tpu.memory_space<vmem>>, vector<1x128xf32>
    %368 = arith.index_cast %362 : i32 to index
    %c0_183 = arith.constant 0 : index
    %369 = vector.load %arg4[%368, %c0_183] : memref<23x128xf32, #tpu.memory_space<vmem>>, vector<1x128xf32>
    %370 = vector.broadcast %365 : vector<16x1xf32> to vector<16x128xf32>
    %371 = vector.broadcast %367 : vector<1x128xf32> to vector<16x128xf32>
    %372 = arith.subf %370, %371 : vector<16x128xf32>
    %373 = arith.mulf %372, %372 : vector<16x128xf32>
    %374 = vector.broadcast %369 : vector<1x128xf32> to vector<16x128xf32>
    %375 = arith.mulf %373, %374 : vector<16x128xf32>
    %376 = math.exp %375 : vector<16x128xf32>
    %377 = math.exp %376 : vector<16x128xf32>
    %cst_184 = arith.constant dense<0.000000e+00> : vector<16xf32>
    %378 = vector.multi_reduction <add>, %377, %cst_184 [1] : vector<16x128xf32> to vector<16xf32>
    %379 = vector.shape_cast %378 : vector<16xf32> to vector<16x1xf32>
    %380 = tpu.reciprocal %379 {approx = true} : vector<16x1xf32> -> vector<16x1xf32>
    %381 = arith.truncf %377 : vector<16x128xf32> to vector<16x128xbf16>
    %c12_185 = arith.constant 12 : index
    %c0_186 = arith.constant 0 : index
    %c0_187 = arith.constant 0 : index
    %382 = vector.load %arg5[%c12_185, %c0_186, %c0_187] : memref<23x128x128xbf16, #tpu.memory_space<vmem>>, vector<1x128x128xbf16>
    %383 = vector.shape_cast %382 : vector<1x128x128xbf16> to vector<128x128xbf16>
    %cst_188 = arith.constant dense<0.000000e+00> : vector<16x128xf32>
    %384 = tpu.matmul %381, %383, %cst_188 {dimension_numbers = #tpu.dot_dimension_numbers<[1], [0], [0], [1], [0, 0, 1, 1], [], []>} : vector<16x128xbf16>, vector<128x128xbf16>, vector<16x128xf32> -> vector<16x128xf32>
    %385 = vector.broadcast %380 : vector<16x1xf32> to vector<16x128xf32>
    %386 = arith.mulf %384, %385 : vector<16x128xf32>
    %387 = vector.shape_cast %386 : vector<16x128xf32> to vector<2x8x128xf32>
    %c0_189 = arith.constant 0 : index
    %c12_190 = arith.constant 12 : index
    %c0_191 = arith.constant 0 : index
    %c0_192 = arith.constant 0 : index
    %388 = vector.load %arg6[%c0_189, %c12_190, %c0_191, %c0_192] : memref<2x23x8x128xf32, #tpu.memory_space<vmem>>, vector<2x1x8x128xf32>
    %389 = vector.shape_cast %388 : vector<2x1x8x128xf32> to vector<2x8x128xf32>
    %390 = vector.shape_cast %387 : vector<2x8x128xf32> to vector<2x1x8x128xf32>
    tpu.vector_store %arg6[%c0_189, %c12_190, %c0_191, %c0_192], %390 {strides = array<i32>} : memref<2x23x8x128xf32, #tpu.memory_space<vmem>>, vector<2x1x8x128xf32>,
    %c13_i32 = arith.constant 13 : i32
    %391 = arith.addi %0, %c13_i32 : i32
    %c22_i32_193 = arith.constant 22 : i32
    %392 = arith.minsi %391, %c22_i32_193 : i32
    %c13 = arith.constant 13 : index
    %c0_194 = arith.constant 0 : index
    %c0_195 = arith.constant 0 : index
    %c0_196 = arith.constant 0 : index
    %393 = vector.load %arg2[%c13, %c0_194, %c0_195, %c0_196] : memref<23x2x8x1xf32, #tpu.memory_space<vmem>>, vector<1x2x8x1xf32>
    %394 = vector.shape_cast %393 : vector<1x2x8x1xf32> to vector<2x8x1xf32>
    %395 = vector.shape_cast %394 : vector<2x8x1xf32> to vector<16x1xf32>
    %396 = arith.index_cast %392 : i32 to index
    %c0_197 = arith.constant 0 : index
    %397 = vector.load %arg3[%396, %c0_197] : memref<23x128xf32, #tpu.memory_space<vmem>>, vector<1x128xf32>
    %398 = arith.index_cast %392 : i32 to index
    %c0_198 = arith.constant 0 : index
    %399 = vector.load %arg4[%398, %c0_198] : memref<23x128xf32, #tpu.memory_space<vmem>>, vector<1x128xf32>
    %400 = vector.broadcast %395 : vector<16x1xf32> to vector<16x128xf32>
    %401 = vector.broadcast %397 : vector<1x128xf32> to vector<16x128xf32>
    %402 = arith.subf %400, %401 : vector<16x128xf32>
    %403 = arith.mulf %402, %402 : vector<16x128xf32>
    %404 = vector.broadcast %399 : vector<1x128xf32> to vector<16x128xf32>
    %405 = arith.mulf %403, %404 : vector<16x128xf32>
    %406 = math.exp %405 : vector<16x128xf32>
    %407 = math.exp %406 : vector<16x128xf32>
    %cst_199 = arith.constant dense<0.000000e+00> : vector<16xf32>
    %408 = vector.multi_reduction <add>, %407, %cst_199 [1] : vector<16x128xf32> to vector<16xf32>
    %409 = vector.shape_cast %408 : vector<16xf32> to vector<16x1xf32>
    %410 = tpu.reciprocal %409 {approx = true} : vector<16x1xf32> -> vector<16x1xf32>
    %411 = arith.truncf %407 : vector<16x128xf32> to vector<16x128xbf16>
    %c13_200 = arith.constant 13 : index
    %c0_201 = arith.constant 0 : index
    %c0_202 = arith.constant 0 : index
    %412 = vector.load %arg5[%c13_200, %c0_201, %c0_202] : memref<23x128x128xbf16, #tpu.memory_space<vmem>>, vector<1x128x128xbf16>
    %413 = vector.shape_cast %412 : vector<1x128x128xbf16> to vector<128x128xbf16>
    %cst_203 = arith.constant dense<0.000000e+00> : vector<16x128xf32>
    %414 = tpu.matmul %411, %413, %cst_203 {dimension_numbers = #tpu.dot_dimension_numbers<[1], [0], [0], [1], [0, 0, 1, 1], [], []>} : vector<16x128xbf16>, vector<128x128xbf16>, vector<16x128xf32> -> vector<16x128xf32>
    %415 = vector.broadcast %410 : vector<16x1xf32> to vector<16x128xf32>
    %416 = arith.mulf %414, %415 : vector<16x128xf32>
    %417 = vector.shape_cast %416 : vector<16x128xf32> to vector<2x8x128xf32>
    %c0_204 = arith.constant 0 : index
    %c13_205 = arith.constant 13 : index
    %c0_206 = arith.constant 0 : index
    %c0_207 = arith.constant 0 : index
    %418 = vector.load %arg6[%c0_204, %c13_205, %c0_206, %c0_207] : memref<2x23x8x128xf32, #tpu.memory_space<vmem>>, vector<2x1x8x128xf32>
    %419 = vector.shape_cast %418 : vector<2x1x8x128xf32> to vector<2x8x128xf32>
    %420 = vector.shape_cast %417 : vector<2x8x128xf32> to vector<2x1x8x128xf32>
    tpu.vector_store %arg6[%c0_204, %c13_205, %c0_206, %c0_207], %420 {strides = array<i32>} : memref<2x23x8x128xf32, #tpu.memory_space<vmem>>, vector<2x1x8x128xf32>,
    %c14_i32 = arith.constant 14 : i32
    %421 = arith.addi %0, %c14_i32 : i32
    %c22_i32_208 = arith.constant 22 : i32
    %422 = arith.minsi %421, %c22_i32_208 : i32
    %c14 = arith.constant 14 : index
    %c0_209 = arith.constant 0 : index
    %c0_210 = arith.constant 0 : index
    %c0_211 = arith.constant 0 : index
    %423 = vector.load %arg2[%c14, %c0_209, %c0_210, %c0_211] : memref<23x2x8x1xf32, #tpu.memory_space<vmem>>, vector<1x2x8x1xf32>
    %424 = vector.shape_cast %423 : vector<1x2x8x1xf32> to vector<2x8x1xf32>
    %425 = vector.shape_cast %424 : vector<2x8x1xf32> to vector<16x1xf32>
    %426 = arith.index_cast %422 : i32 to index
    %c0_212 = arith.constant 0 : index
    %427 = vector.load %arg3[%426, %c0_212] : memref<23x128xf32, #tpu.memory_space<vmem>>, vector<1x128xf32>
    %428 = arith.index_cast %422 : i32 to index
    %c0_213 = arith.constant 0 : index
    %429 = vector.load %arg4[%428, %c0_213] : memref<23x128xf32, #tpu.memory_space<vmem>>, vector<1x128xf32>
    %430 = vector.broadcast %425 : vector<16x1xf32> to vector<16x128xf32>
    %431 = vector.broadcast %427 : vector<1x128xf32> to vector<16x128xf32>
    %432 = arith.subf %430, %431 : vector<16x128xf32>
    %433 = arith.mulf %432, %432 : vector<16x128xf32>
    %434 = vector.broadcast %429 : vector<1x128xf32> to vector<16x128xf32>
    %435 = arith.mulf %433, %434 : vector<16x128xf32>
    %436 = math.exp %435 : vector<16x128xf32>
    %437 = math.exp %436 : vector<16x128xf32>
    %cst_214 = arith.constant dense<0.000000e+00> : vector<16xf32>
    %438 = vector.multi_reduction <add>, %437, %cst_214 [1] : vector<16x128xf32> to vector<16xf32>
    %439 = vector.shape_cast %438 : vector<16xf32> to vector<16x1xf32>
    %440 = tpu.reciprocal %439 {approx = true} : vector<16x1xf32> -> vector<16x1xf32>
    %441 = arith.truncf %437 : vector<16x128xf32> to vector<16x128xbf16>
    %c14_215 = arith.constant 14 : index
    %c0_216 = arith.constant 0 : index
    %c0_217 = arith.constant 0 : index
    %442 = vector.load %arg5[%c14_215, %c0_216, %c0_217] : memref<23x128x128xbf16, #tpu.memory_space<vmem>>, vector<1x128x128xbf16>
    %443 = vector.shape_cast %442 : vector<1x128x128xbf16> to vector<128x128xbf16>
    %cst_218 = arith.constant dense<0.000000e+00> : vector<16x128xf32>
    %444 = tpu.matmul %441, %443, %cst_218 {dimension_numbers = #tpu.dot_dimension_numbers<[1], [0], [0], [1], [0, 0, 1, 1], [], []>} : vector<16x128xbf16>, vector<128x128xbf16>, vector<16x128xf32> -> vector<16x128xf32>
    %445 = vector.broadcast %440 : vector<16x1xf32> to vector<16x128xf32>
    %446 = arith.mulf %444, %445 : vector<16x128xf32>
    %447 = vector.shape_cast %446 : vector<16x128xf32> to vector<2x8x128xf32>
    %c0_219 = arith.constant 0 : index
    %c14_220 = arith.constant 14 : index
    %c0_221 = arith.constant 0 : index
    %c0_222 = arith.constant 0 : index
    %448 = vector.load %arg6[%c0_219, %c14_220, %c0_221, %c0_222] : memref<2x23x8x128xf32, #tpu.memory_space<vmem>>, vector<2x1x8x128xf32>
    %449 = vector.shape_cast %448 : vector<2x1x8x128xf32> to vector<2x8x128xf32>
    %450 = vector.shape_cast %447 : vector<2x8x128xf32> to vector<2x1x8x128xf32>
    tpu.vector_store %arg6[%c0_219, %c14_220, %c0_221, %c0_222], %450 {strides = array<i32>} : memref<2x23x8x128xf32, #tpu.memory_space<vmem>>, vector<2x1x8x128xf32>,
    %c15_i32 = arith.constant 15 : i32
    %451 = arith.addi %0, %c15_i32 : i32
    %c22_i32_223 = arith.constant 22 : i32
    %452 = arith.minsi %451, %c22_i32_223 : i32
    %c15 = arith.constant 15 : index
    %c0_224 = arith.constant 0 : index
    %c0_225 = arith.constant 0 : index
    %c0_226 = arith.constant 0 : index
    %453 = vector.load %arg2[%c15, %c0_224, %c0_225, %c0_226] : memref<23x2x8x1xf32, #tpu.memory_space<vmem>>, vector<1x2x8x1xf32>
    %454 = vector.shape_cast %453 : vector<1x2x8x1xf32> to vector<2x8x1xf32>
    %455 = vector.shape_cast %454 : vector<2x8x1xf32> to vector<16x1xf32>
    %456 = arith.index_cast %452 : i32 to index
    %c0_227 = arith.constant 0 : index
    %457 = vector.load %arg3[%456, %c0_227] : memref<23x128xf32, #tpu.memory_space<vmem>>, vector<1x128xf32>
    %458 = arith.index_cast %452 : i32 to index
    %c0_228 = arith.constant 0 : index
    %459 = vector.load %arg4[%458, %c0_228] : memref<23x128xf32, #tpu.memory_space<vmem>>, vector<1x128xf32>
    %460 = vector.broadcast %455 : vector<16x1xf32> to vector<16x128xf32>
    %461 = vector.broadcast %457 : vector<1x128xf32> to vector<16x128xf32>
    %462 = arith.subf %460, %461 : vector<16x128xf32>
    %463 = arith.mulf %462, %462 : vector<16x128xf32>
    %464 = vector.broadcast %459 : vector<1x128xf32> to vector<16x128xf32>
    %465 = arith.mulf %463, %464 : vector<16x128xf32>
    %466 = math.exp %465 : vector<16x128xf32>
    %467 = math.exp %466 : vector<16x128xf32>
    %cst_229 = arith.constant dense<0.000000e+00> : vector<16xf32>
    %468 = vector.multi_reduction <add>, %467, %cst_229 [1] : vector<16x128xf32> to vector<16xf32>
    %469 = vector.shape_cast %468 : vector<16xf32> to vector<16x1xf32>
    %470 = tpu.reciprocal %469 {approx = true} : vector<16x1xf32> -> vector<16x1xf32>
    %471 = arith.truncf %467 : vector<16x128xf32> to vector<16x128xbf16>
    %c15_230 = arith.constant 15 : index
    %c0_231 = arith.constant 0 : index
    %c0_232 = arith.constant 0 : index
    %472 = vector.load %arg5[%c15_230, %c0_231, %c0_232] : memref<23x128x128xbf16, #tpu.memory_space<vmem>>, vector<1x128x128xbf16>
    %473 = vector.shape_cast %472 : vector<1x128x128xbf16> to vector<128x128xbf16>
    %cst_233 = arith.constant dense<0.000000e+00> : vector<16x128xf32>
    %474 = tpu.matmul %471, %473, %cst_233 {dimension_numbers = #tpu.dot_dimension_numbers<[1], [0], [0], [1], [0, 0, 1, 1], [], []>} : vector<16x128xbf16>, vector<128x128xbf16>, vector<16x128xf32> -> vector<16x128xf32>
    %475 = vector.broadcast %470 : vector<16x1xf32> to vector<16x128xf32>
    %476 = arith.mulf %474, %475 : vector<16x128xf32>
    %477 = vector.shape_cast %476 : vector<16x128xf32> to vector<2x8x128xf32>
    %c0_234 = arith.constant 0 : index
    %c15_235 = arith.constant 15 : index
    %c0_236 = arith.constant 0 : index
    %c0_237 = arith.constant 0 : index
    %478 = vector.load %arg6[%c0_234, %c15_235, %c0_236, %c0_237] : memref<2x23x8x128xf32, #tpu.memory_space<vmem>>, vector<2x1x8x128xf32>
    %479 = vector.shape_cast %478 : vector<2x1x8x128xf32> to vector<2x8x128xf32>
    %480 = vector.shape_cast %477 : vector<2x8x128xf32> to vector<2x1x8x128xf32>
    tpu.vector_store %arg6[%c0_234, %c15_235, %c0_236, %c0_237], %480 {strides = array<i32>} : memref<2x23x8x128xf32, #tpu.memory_space<vmem>>, vector<2x1x8x128xf32>,
    %c16_i32 = arith.constant 16 : i32
    %481 = arith.addi %0, %c16_i32 : i32
    %c22_i32_238 = arith.constant 22 : i32
    %482 = arith.minsi %481, %c22_i32_238 : i32
    %c16 = arith.constant 16 : index
    %c0_239 = arith.constant 0 : index
    %c0_240 = arith.constant 0 : index
    %c0_241 = arith.constant 0 : index
    %483 = vector.load %arg2[%c16, %c0_239, %c0_240, %c0_241] : memref<23x2x8x1xf32, #tpu.memory_space<vmem>>, vector<1x2x8x1xf32>
    %484 = vector.shape_cast %483 : vector<1x2x8x1xf32> to vector<2x8x1xf32>
    %485 = vector.shape_cast %484 : vector<2x8x1xf32> to vector<16x1xf32>
    %486 = arith.index_cast %482 : i32 to index
    %c0_242 = arith.constant 0 : index
    %487 = vector.load %arg3[%486, %c0_242] : memref<23x128xf32, #tpu.memory_space<vmem>>, vector<1x128xf32>
    %488 = arith.index_cast %482 : i32 to index
    %c0_243 = arith.constant 0 : index
    %489 = vector.load %arg4[%488, %c0_243] : memref<23x128xf32, #tpu.memory_space<vmem>>, vector<1x128xf32>
    %490 = vector.broadcast %485 : vector<16x1xf32> to vector<16x128xf32>
    %491 = vector.broadcast %487 : vector<1x128xf32> to vector<16x128xf32>
    %492 = arith.subf %490, %491 : vector<16x128xf32>
    %493 = arith.mulf %492, %492 : vector<16x128xf32>
    %494 = vector.broadcast %489 : vector<1x128xf32> to vector<16x128xf32>
    %495 = arith.mulf %493, %494 : vector<16x128xf32>
    %496 = math.exp %495 : vector<16x128xf32>
    %497 = math.exp %496 : vector<16x128xf32>
    %cst_244 = arith.constant dense<0.000000e+00> : vector<16xf32>
    %498 = vector.multi_reduction <add>, %497, %cst_244 [1] : vector<16x128xf32> to vector<16xf32>
    %499 = vector.shape_cast %498 : vector<16xf32> to vector<16x1xf32>
    %500 = tpu.reciprocal %499 {approx = true} : vector<16x1xf32> -> vector<16x1xf32>
    %501 = arith.truncf %497 : vector<16x128xf32> to vector<16x128xbf16>
    %c16_245 = arith.constant 16 : index
    %c0_246 = arith.constant 0 : index
    %c0_247 = arith.constant 0 : index
    %502 = vector.load %arg5[%c16_245, %c0_246, %c0_247] : memref<23x128x128xbf16, #tpu.memory_space<vmem>>, vector<1x128x128xbf16>
    %503 = vector.shape_cast %502 : vector<1x128x128xbf16> to vector<128x128xbf16>
    %cst_248 = arith.constant dense<0.000000e+00> : vector<16x128xf32>
    %504 = tpu.matmul %501, %503, %cst_248 {dimension_numbers = #tpu.dot_dimension_numbers<[1], [0], [0], [1], [0, 0, 1, 1], [], []>} : vector<16x128xbf16>, vector<128x128xbf16>, vector<16x128xf32> -> vector<16x128xf32>
    %505 = vector.broadcast %500 : vector<16x1xf32> to vector<16x128xf32>
    %506 = arith.mulf %504, %505 : vector<16x128xf32>
    %507 = vector.shape_cast %506 : vector<16x128xf32> to vector<2x8x128xf32>
    %c0_249 = arith.constant 0 : index
    %c16_250 = arith.constant 16 : index
    %c0_251 = arith.constant 0 : index
    %c0_252 = arith.constant 0 : index
    %508 = vector.load %arg6[%c0_249, %c16_250, %c0_251, %c0_252] : memref<2x23x8x128xf32, #tpu.memory_space<vmem>>, vector<2x1x8x128xf32>
    %509 = vector.shape_cast %508 : vector<2x1x8x128xf32> to vector<2x8x128xf32>
    %510 = vector.shape_cast %507 : vector<2x8x128xf32> to vector<2x1x8x128xf32>
    tpu.vector_store %arg6[%c0_249, %c16_250, %c0_251, %c0_252], %510 {strides = array<i32>} : memref<2x23x8x128xf32, #tpu.memory_space<vmem>>, vector<2x1x8x128xf32>,
    %c17_i32 = arith.constant 17 : i32
    %511 = arith.addi %0, %c17_i32 : i32
    %c22_i32_253 = arith.constant 22 : i32
    %512 = arith.minsi %511, %c22_i32_253 : i32
    %c17 = arith.constant 17 : index
    %c0_254 = arith.constant 0 : index
    %c0_255 = arith.constant 0 : index
    %c0_256 = arith.constant 0 : index
    %513 = vector.load %arg2[%c17, %c0_254, %c0_255, %c0_256] : memref<23x2x8x1xf32, #tpu.memory_space<vmem>>, vector<1x2x8x1xf32>
    %514 = vector.shape_cast %513 : vector<1x2x8x1xf32> to vector<2x8x1xf32>
    %515 = vector.shape_cast %514 : vector<2x8x1xf32> to vector<16x1xf32>
    %516 = arith.index_cast %512 : i32 to index
    %c0_257 = arith.constant 0 : index
    %517 = vector.load %arg3[%516, %c0_257] : memref<23x128xf32, #tpu.memory_space<vmem>>, vector<1x128xf32>
    %518 = arith.index_cast %512 : i32 to index
    %c0_258 = arith.constant 0 : index
    %519 = vector.load %arg4[%518, %c0_258] : memref<23x128xf32, #tpu.memory_space<vmem>>, vector<1x128xf32>
    %520 = vector.broadcast %515 : vector<16x1xf32> to vector<16x128xf32>
    %521 = vector.broadcast %517 : vector<1x128xf32> to vector<16x128xf32>
    %522 = arith.subf %520, %521 : vector<16x128xf32>
    %523 = arith.mulf %522, %522 : vector<16x128xf32>
    %524 = vector.broadcast %519 : vector<1x128xf32> to vector<16x128xf32>
    %525 = arith.mulf %523, %524 : vector<16x128xf32>
    %526 = math.exp %525 : vector<16x128xf32>
    %527 = math.exp %526 : vector<16x128xf32>
    %cst_259 = arith.constant dense<0.000000e+00> : vector<16xf32>
    %528 = vector.multi_reduction <add>, %527, %cst_259 [1] : vector<16x128xf32> to vector<16xf32>
    %529 = vector.shape_cast %528 : vector<16xf32> to vector<16x1xf32>
    %530 = tpu.reciprocal %529 {approx = true} : vector<16x1xf32> -> vector<16x1xf32>
    %531 = arith.truncf %527 : vector<16x128xf32> to vector<16x128xbf16>
    %c17_260 = arith.constant 17 : index
    %c0_261 = arith.constant 0 : index
    %c0_262 = arith.constant 0 : index
    %532 = vector.load %arg5[%c17_260, %c0_261, %c0_262] : memref<23x128x128xbf16, #tpu.memory_space<vmem>>, vector<1x128x128xbf16>
    %533 = vector.shape_cast %532 : vector<1x128x128xbf16> to vector<128x128xbf16>
    %cst_263 = arith.constant dense<0.000000e+00> : vector<16x128xf32>
    %534 = tpu.matmul %531, %533, %cst_263 {dimension_numbers = #tpu.dot_dimension_numbers<[1], [0], [0], [1], [0, 0, 1, 1], [], []>} : vector<16x128xbf16>, vector<128x128xbf16>, vector<16x128xf32> -> vector<16x128xf32>
    %535 = vector.broadcast %530 : vector<16x1xf32> to vector<16x128xf32>
    %536 = arith.mulf %534, %535 : vector<16x128xf32>
    %537 = vector.shape_cast %536 : vector<16x128xf32> to vector<2x8x128xf32>
    %c0_264 = arith.constant 0 : index
    %c17_265 = arith.constant 17 : index
    %c0_266 = arith.constant 0 : index
    %c0_267 = arith.constant 0 : index
    %538 = vector.load %arg6[%c0_264, %c17_265, %c0_266, %c0_267] : memref<2x23x8x128xf32, #tpu.memory_space<vmem>>, vector<2x1x8x128xf32>
    %539 = vector.shape_cast %538 : vector<2x1x8x128xf32> to vector<2x8x128xf32>
    %540 = vector.shape_cast %537 : vector<2x8x128xf32> to vector<2x1x8x128xf32>
    tpu.vector_store %arg6[%c0_264, %c17_265, %c0_266, %c0_267], %540 {strides = array<i32>} : memref<2x23x8x128xf32, #tpu.memory_space<vmem>>, vector<2x1x8x128xf32>,
    %c18_i32 = arith.constant 18 : i32
    %541 = arith.addi %0, %c18_i32 : i32
    %c22_i32_268 = arith.constant 22 : i32
    %542 = arith.minsi %541, %c22_i32_268 : i32
    %c18 = arith.constant 18 : index
    %c0_269 = arith.constant 0 : index
    %c0_270 = arith.constant 0 : index
    %c0_271 = arith.constant 0 : index
    %543 = vector.load %arg2[%c18, %c0_269, %c0_270, %c0_271] : memref<23x2x8x1xf32, #tpu.memory_space<vmem>>, vector<1x2x8x1xf32>
    %544 = vector.shape_cast %543 : vector<1x2x8x1xf32> to vector<2x8x1xf32>
    %545 = vector.shape_cast %544 : vector<2x8x1xf32> to vector<16x1xf32>
    %546 = arith.index_cast %542 : i32 to index
    %c0_272 = arith.constant 0 : index
    %547 = vector.load %arg3[%546, %c0_272] : memref<23x128xf32, #tpu.memory_space<vmem>>, vector<1x128xf32>
    %548 = arith.index_cast %542 : i32 to index
    %c0_273 = arith.constant 0 : index
    %549 = vector.load %arg4[%548, %c0_273] : memref<23x128xf32, #tpu.memory_space<vmem>>, vector<1x128xf32>
    %550 = vector.broadcast %545 : vector<16x1xf32> to vector<16x128xf32>
    %551 = vector.broadcast %547 : vector<1x128xf32> to vector<16x128xf32>
    %552 = arith.subf %550, %551 : vector<16x128xf32>
    %553 = arith.mulf %552, %552 : vector<16x128xf32>
    %554 = vector.broadcast %549 : vector<1x128xf32> to vector<16x128xf32>
    %555 = arith.mulf %553, %554 : vector<16x128xf32>
    %556 = math.exp %555 : vector<16x128xf32>
    %557 = math.exp %556 : vector<16x128xf32>
    %cst_274 = arith.constant dense<0.000000e+00> : vector<16xf32>
    %558 = vector.multi_reduction <add>, %557, %cst_274 [1] : vector<16x128xf32> to vector<16xf32>
    %559 = vector.shape_cast %558 : vector<16xf32> to vector<16x1xf32>
    %560 = tpu.reciprocal %559 {approx = true} : vector<16x1xf32> -> vector<16x1xf32>
    %561 = arith.truncf %557 : vector<16x128xf32> to vector<16x128xbf16>
    %c18_275 = arith.constant 18 : index
    %c0_276 = arith.constant 0 : index
    %c0_277 = arith.constant 0 : index
    %562 = vector.load %arg5[%c18_275, %c0_276, %c0_277] : memref<23x128x128xbf16, #tpu.memory_space<vmem>>, vector<1x128x128xbf16>
    %563 = vector.shape_cast %562 : vector<1x128x128xbf16> to vector<128x128xbf16>
    %cst_278 = arith.constant dense<0.000000e+00> : vector<16x128xf32>
    %564 = tpu.matmul %561, %563, %cst_278 {dimension_numbers = #tpu.dot_dimension_numbers<[1], [0], [0], [1], [0, 0, 1, 1], [], []>} : vector<16x128xbf16>, vector<128x128xbf16>, vector<16x128xf32> -> vector<16x128xf32>
    %565 = vector.broadcast %560 : vector<16x1xf32> to vector<16x128xf32>
    %566 = arith.mulf %564, %565 : vector<16x128xf32>
    %567 = vector.shape_cast %566 : vector<16x128xf32> to vector<2x8x128xf32>
    %c0_279 = arith.constant 0 : index
    %c18_280 = arith.constant 18 : index
    %c0_281 = arith.constant 0 : index
    %c0_282 = arith.constant 0 : index
    %568 = vector.load %arg6[%c0_279, %c18_280, %c0_281, %c0_282] : memref<2x23x8x128xf32, #tpu.memory_space<vmem>>, vector<2x1x8x128xf32>
    %569 = vector.shape_cast %568 : vector<2x1x8x128xf32> to vector<2x8x128xf32>
    %570 = vector.shape_cast %567 : vector<2x8x128xf32> to vector<2x1x8x128xf32>
    tpu.vector_store %arg6[%c0_279, %c18_280, %c0_281, %c0_282], %570 {strides = array<i32>} : memref<2x23x8x128xf32, #tpu.memory_space<vmem>>, vector<2x1x8x128xf32>,
    %c19_i32 = arith.constant 19 : i32
    %571 = arith.addi %0, %c19_i32 : i32
    %c22_i32_283 = arith.constant 22 : i32
    %572 = arith.minsi %571, %c22_i32_283 : i32
    %c19 = arith.constant 19 : index
    %c0_284 = arith.constant 0 : index
    %c0_285 = arith.constant 0 : index
    %c0_286 = arith.constant 0 : index
    %573 = vector.load %arg2[%c19, %c0_284, %c0_285, %c0_286] : memref<23x2x8x1xf32, #tpu.memory_space<vmem>>, vector<1x2x8x1xf32>
    %574 = vector.shape_cast %573 : vector<1x2x8x1xf32> to vector<2x8x1xf32>
    %575 = vector.shape_cast %574 : vector<2x8x1xf32> to vector<16x1xf32>
    %576 = arith.index_cast %572 : i32 to index
    %c0_287 = arith.constant 0 : index
    %577 = vector.load %arg3[%576, %c0_287] : memref<23x128xf32, #tpu.memory_space<vmem>>, vector<1x128xf32>
    %578 = arith.index_cast %572 : i32 to index
    %c0_288 = arith.constant 0 : index
    %579 = vector.load %arg4[%578, %c0_288] : memref<23x128xf32, #tpu.memory_space<vmem>>, vector<1x128xf32>
    %580 = vector.broadcast %575 : vector<16x1xf32> to vector<16x128xf32>
    %581 = vector.broadcast %577 : vector<1x128xf32> to vector<16x128xf32>
    %582 = arith.subf %580, %581 : vector<16x128xf32>
    %583 = arith.mulf %582, %582 : vector<16x128xf32>
    %584 = vector.broadcast %579 : vector<1x128xf32> to vector<16x128xf32>
    %585 = arith.mulf %583, %584 : vector<16x128xf32>
    %586 = math.exp %585 : vector<16x128xf32>
    %587 = math.exp %586 : vector<16x128xf32>
    %cst_289 = arith.constant dense<0.000000e+00> : vector<16xf32>
    %588 = vector.multi_reduction <add>, %587, %cst_289 [1] : vector<16x128xf32> to vector<16xf32>
    %589 = vector.shape_cast %588 : vector<16xf32> to vector<16x1xf32>
    %590 = tpu.reciprocal %589 {approx = true} : vector<16x1xf32> -> vector<16x1xf32>
    %591 = arith.truncf %587 : vector<16x128xf32> to vector<16x128xbf16>
    %c19_290 = arith.constant 19 : index
    %c0_291 = arith.constant 0 : index
    %c0_292 = arith.constant 0 : index
    %592 = vector.load %arg5[%c19_290, %c0_291, %c0_292] : memref<23x128x128xbf16, #tpu.memory_space<vmem>>, vector<1x128x128xbf16>
    %593 = vector.shape_cast %592 : vector<1x128x128xbf16> to vector<128x128xbf16>
    %cst_293 = arith.constant dense<0.000000e+00> : vector<16x128xf32>
    %594 = tpu.matmul %591, %593, %cst_293 {dimension_numbers = #tpu.dot_dimension_numbers<[1], [0], [0], [1], [0, 0, 1, 1], [], []>} : vector<16x128xbf16>, vector<128x128xbf16>, vector<16x128xf32> -> vector<16x128xf32>
    %595 = vector.broadcast %590 : vector<16x1xf32> to vector<16x128xf32>
    %596 = arith.mulf %594, %595 : vector<16x128xf32>
    %597 = vector.shape_cast %596 : vector<16x128xf32> to vector<2x8x128xf32>
    %c0_294 = arith.constant 0 : index
    %c19_295 = arith.constant 19 : index
    %c0_296 = arith.constant 0 : index
    %c0_297 = arith.constant 0 : index
    %598 = vector.load %arg6[%c0_294, %c19_295, %c0_296, %c0_297] : memref<2x23x8x128xf32, #tpu.memory_space<vmem>>, vector<2x1x8x128xf32>
    %599 = vector.shape_cast %598 : vector<2x1x8x128xf32> to vector<2x8x128xf32>
    %600 = vector.shape_cast %597 : vector<2x8x128xf32> to vector<2x1x8x128xf32>
    tpu.vector_store %arg6[%c0_294, %c19_295, %c0_296, %c0_297], %600 {strides = array<i32>} : memref<2x23x8x128xf32, #tpu.memory_space<vmem>>, vector<2x1x8x128xf32>,
    %c20_i32 = arith.constant 20 : i32
    %601 = arith.addi %0, %c20_i32 : i32
    %c22_i32_298 = arith.constant 22 : i32
    %602 = arith.minsi %601, %c22_i32_298 : i32
    %c20 = arith.constant 20 : index
    %c0_299 = arith.constant 0 : index
    %c0_300 = arith.constant 0 : index
    %c0_301 = arith.constant 0 : index
    %603 = vector.load %arg2[%c20, %c0_299, %c0_300, %c0_301] : memref<23x2x8x1xf32, #tpu.memory_space<vmem>>, vector<1x2x8x1xf32>
    %604 = vector.shape_cast %603 : vector<1x2x8x1xf32> to vector<2x8x1xf32>
    %605 = vector.shape_cast %604 : vector<2x8x1xf32> to vector<16x1xf32>
    %606 = arith.index_cast %602 : i32 to index
    %c0_302 = arith.constant 0 : index
    %607 = vector.load %arg3[%606, %c0_302] : memref<23x128xf32, #tpu.memory_space<vmem>>, vector<1x128xf32>
    %608 = arith.index_cast %602 : i32 to index
    %c0_303 = arith.constant 0 : index
    %609 = vector.load %arg4[%608, %c0_303] : memref<23x128xf32, #tpu.memory_space<vmem>>, vector<1x128xf32>
    %610 = vector.broadcast %605 : vector<16x1xf32> to vector<16x128xf32>
    %611 = vector.broadcast %607 : vector<1x128xf32> to vector<16x128xf32>
    %612 = arith.subf %610, %611 : vector<16x128xf32>
    %613 = arith.mulf %612, %612 : vector<16x128xf32>
    %614 = vector.broadcast %609 : vector<1x128xf32> to vector<16x128xf32>
    %615 = arith.mulf %613, %614 : vector<16x128xf32>
    %616 = math.exp %615 : vector<16x128xf32>
    %617 = math.exp %616 : vector<16x128xf32>
    %cst_304 = arith.constant dense<0.000000e+00> : vector<16xf32>
    %618 = vector.multi_reduction <add>, %617, %cst_304 [1] : vector<16x128xf32> to vector<16xf32>
    %619 = vector.shape_cast %618 : vector<16xf32> to vector<16x1xf32>
    %620 = tpu.reciprocal %619 {approx = true} : vector<16x1xf32> -> vector<16x1xf32>
    %621 = arith.truncf %617 : vector<16x128xf32> to vector<16x128xbf16>
    %c20_305 = arith.constant 20 : index
    %c0_306 = arith.constant 0 : index
    %c0_307 = arith.constant 0 : index
    %622 = vector.load %arg5[%c20_305, %c0_306, %c0_307] : memref<23x128x128xbf16, #tpu.memory_space<vmem>>, vector<1x128x128xbf16>
    %623 = vector.shape_cast %622 : vector<1x128x128xbf16> to vector<128x128xbf16>
    %cst_308 = arith.constant dense<0.000000e+00> : vector<16x128xf32>
    %624 = tpu.matmul %621, %623, %cst_308 {dimension_numbers = #tpu.dot_dimension_numbers<[1], [0], [0], [1], [0, 0, 1, 1], [], []>} : vector<16x128xbf16>, vector<128x128xbf16>, vector<16x128xf32> -> vector<16x128xf32>
    %625 = vector.broadcast %620 : vector<16x1xf32> to vector<16x128xf32>
    %626 = arith.mulf %624, %625 : vector<16x128xf32>
    %627 = vector.shape_cast %626 : vector<16x128xf32> to vector<2x8x128xf32>
    %c0_309 = arith.constant 0 : index
    %c20_310 = arith.constant 20 : index
    %c0_311 = arith.constant 0 : index
    %c0_312 = arith.constant 0 : index
    %628 = vector.load %arg6[%c0_309, %c20_310, %c0_311, %c0_312] : memref<2x23x8x128xf32, #tpu.memory_space<vmem>>, vector<2x1x8x128xf32>
    %629 = vector.shape_cast %628 : vector<2x1x8x128xf32> to vector<2x8x128xf32>
    %630 = vector.shape_cast %627 : vector<2x8x128xf32> to vector<2x1x8x128xf32>
    tpu.vector_store %arg6[%c0_309, %c20_310, %c0_311, %c0_312], %630 {strides = array<i32>} : memref<2x23x8x128xf32, #tpu.memory_space<vmem>>, vector<2x1x8x128xf32>,
    %c21_i32 = arith.constant 21 : i32
    %631 = arith.addi %0, %c21_i32 : i32
    %c22_i32_313 = arith.constant 22 : i32
    %632 = arith.minsi %631, %c22_i32_313 : i32
    %c21 = arith.constant 21 : index
    %c0_314 = arith.constant 0 : index
    %c0_315 = arith.constant 0 : index
    %c0_316 = arith.constant 0 : index
    %633 = vector.load %arg2[%c21, %c0_314, %c0_315, %c0_316] : memref<23x2x8x1xf32, #tpu.memory_space<vmem>>, vector<1x2x8x1xf32>
    %634 = vector.shape_cast %633 : vector<1x2x8x1xf32> to vector<2x8x1xf32>
    %635 = vector.shape_cast %634 : vector<2x8x1xf32> to vector<16x1xf32>
    %636 = arith.index_cast %632 : i32 to index
    %c0_317 = arith.constant 0 : index
    %637 = vector.load %arg3[%636, %c0_317] : memref<23x128xf32, #tpu.memory_space<vmem>>, vector<1x128xf32>
    %638 = arith.index_cast %632 : i32 to index
    %c0_318 = arith.constant 0 : index
    %639 = vector.load %arg4[%638, %c0_318] : memref<23x128xf32, #tpu.memory_space<vmem>>, vector<1x128xf32>
    %640 = vector.broadcast %635 : vector<16x1xf32> to vector<16x128xf32>
    %641 = vector.broadcast %637 : vector<1x128xf32> to vector<16x128xf32>
    %642 = arith.subf %640, %641 : vector<16x128xf32>
    %643 = arith.mulf %642, %642 : vector<16x128xf32>
    %644 = vector.broadcast %639 : vector<1x128xf32> to vector<16x128xf32>
    %645 = arith.mulf %643, %644 : vector<16x128xf32>
    %646 = math.exp %645 : vector<16x128xf32>
    %647 = math.exp %646 : vector<16x128xf32>
    %cst_319 = arith.constant dense<0.000000e+00> : vector<16xf32>
    %648 = vector.multi_reduction <add>, %647, %cst_319 [1] : vector<16x128xf32> to vector<16xf32>
    %649 = vector.shape_cast %648 : vector<16xf32> to vector<16x1xf32>
    %650 = tpu.reciprocal %649 {approx = true} : vector<16x1xf32> -> vector<16x1xf32>
    %651 = arith.truncf %647 : vector<16x128xf32> to vector<16x128xbf16>
    %c21_320 = arith.constant 21 : index
    %c0_321 = arith.constant 0 : index
    %c0_322 = arith.constant 0 : index
    %652 = vector.load %arg5[%c21_320, %c0_321, %c0_322] : memref<23x128x128xbf16, #tpu.memory_space<vmem>>, vector<1x128x128xbf16>
    %653 = vector.shape_cast %652 : vector<1x128x128xbf16> to vector<128x128xbf16>
    %cst_323 = arith.constant dense<0.000000e+00> : vector<16x128xf32>
    %654 = tpu.matmul %651, %653, %cst_323 {dimension_numbers = #tpu.dot_dimension_numbers<[1], [0], [0], [1], [0, 0, 1, 1], [], []>} : vector<16x128xbf16>, vector<128x128xbf16>, vector<16x128xf32> -> vector<16x128xf32>
    %655 = vector.broadcast %650 : vector<16x1xf32> to vector<16x128xf32>
    %656 = arith.mulf %654, %655 : vector<16x128xf32>
    %657 = vector.shape_cast %656 : vector<16x128xf32> to vector<2x8x128xf32>
    %c0_324 = arith.constant 0 : index
    %c21_325 = arith.constant 21 : index
    %c0_326 = arith.constant 0 : index
    %c0_327 = arith.constant 0 : index
    %658 = vector.load %arg6[%c0_324, %c21_325, %c0_326, %c0_327] : memref<2x23x8x128xf32, #tpu.memory_space<vmem>>, vector<2x1x8x128xf32>
    %659 = vector.shape_cast %658 : vector<2x1x8x128xf32> to vector<2x8x128xf32>
    %660 = vector.shape_cast %657 : vector<2x8x128xf32> to vector<2x1x8x128xf32>
    tpu.vector_store %arg6[%c0_324, %c21_325, %c0_326, %c0_327], %660 {strides = array<i32>} : memref<2x23x8x128xf32, #tpu.memory_space<vmem>>, vector<2x1x8x128xf32>,
    %c22_i32_328 = arith.constant 22 : i32
    %661 = arith.addi %0, %c22_i32_328 : i32
    %c22_i32_329 = arith.constant 22 : i32
    %662 = arith.minsi %661, %c22_i32_329 : i32
    %c22 = arith.constant 22 : index
    %c0_330 = arith.constant 0 : index
    %c0_331 = arith.constant 0 : index
    %c0_332 = arith.constant 0 : index
    %663 = vector.load %arg2[%c22, %c0_330, %c0_331, %c0_332] : memref<23x2x8x1xf32, #tpu.memory_space<vmem>>, vector<1x2x8x1xf32>
    %664 = vector.shape_cast %663 : vector<1x2x8x1xf32> to vector<2x8x1xf32>
    %665 = vector.shape_cast %664 : vector<2x8x1xf32> to vector<16x1xf32>
    %666 = arith.index_cast %662 : i32 to index
    %c0_333 = arith.constant 0 : index
    %667 = vector.load %arg3[%666, %c0_333] : memref<23x128xf32, #tpu.memory_space<vmem>>, vector<1x128xf32>
    %668 = arith.index_cast %662 : i32 to index
    %c0_334 = arith.constant 0 : index
    %669 = vector.load %arg4[%668, %c0_334] : memref<23x128xf32, #tpu.memory_space<vmem>>, vector<1x128xf32>
    %670 = vector.broadcast %665 : vector<16x1xf32> to vector<16x128xf32>
    %671 = vector.broadcast %667 : vector<1x128xf32> to vector<16x128xf32>
    %672 = arith.subf %670, %671 : vector<16x128xf32>
    %673 = arith.mulf %672, %672 : vector<16x128xf32>
    %674 = vector.broadcast %669 : vector<1x128xf32> to vector<16x128xf32>
    %675 = arith.mulf %673, %674 : vector<16x128xf32>
    %676 = math.exp %675 : vector<16x128xf32>
    %677 = math.exp %676 : vector<16x128xf32>
    %cst_335 = arith.constant dense<0.000000e+00> : vector<16xf32>
    %678 = vector.multi_reduction <add>, %677, %cst_335 [1] : vector<16x128xf32> to vector<16xf32>
    %679 = vector.shape_cast %678 : vector<16xf32> to vector<16x1xf32>
    %680 = tpu.reciprocal %679 {approx = true} : vector<16x1xf32> -> vector<16x1xf32>
    %681 = arith.truncf %677 : vector<16x128xf32> to vector<16x128xbf16>
    %c22_336 = arith.constant 22 : index
    %c0_337 = arith.constant 0 : index
    %c0_338 = arith.constant 0 : index
    %682 = vector.load %arg5[%c22_336, %c0_337, %c0_338] : memref<23x128x128xbf16, #tpu.memory_space<vmem>>, vector<1x128x128xbf16>
    %683 = vector.shape_cast %682 : vector<1x128x128xbf16> to vector<128x128xbf16>
    %cst_339 = arith.constant dense<0.000000e+00> : vector<16x128xf32>
    %684 = tpu.matmul %681, %683, %cst_339 {dimension_numbers = #tpu.dot_dimension_numbers<[1], [0], [0], [1], [0, 0, 1, 1], [], []>} : vector<16x128xbf16>, vector<128x128xbf16>, vector<16x128xf32> -> vector<16x128xf32>
    %685 = vector.broadcast %680 : vector<16x1xf32> to vector<16x128xf32>
    %686 = arith.mulf %684, %685 : vector<16x128xf32>
    %687 = vector.shape_cast %686 : vector<16x128xf32> to vector<2x8x128xf32>
    %c0_340 = arith.constant 0 : index
    %c22_341 = arith.constant 22 : index
    %c0_342 = arith.constant 0 : index
    %c0_343 = arith.constant 0 : index
    %688 = vector.load %arg6[%c0_340, %c22_341, %c0_342, %c0_343] : memref<2x23x8x128xf32, #tpu.memory_space<vmem>>, vector<2x1x8x128xf32>
    %689 = vector.shape_cast %688 : vector<2x1x8x128xf32> to vector<2x8x128xf32>
    %690 = vector.shape_cast %687 : vector<2x8x128xf32> to vector<2x1x8x128xf32>
    tpu.vector_store %arg6[%c0_340, %c22_341, %c0_342, %c0_343], %690 {strides = array<i32>} : memref<2x23x8x128xf32, #tpu.memory_space<vmem>>, vector<2x1x8x128xf32>,
    return
  }
  func.func @transform_0(%arg0: i32, %arg1: i32) -> (i32, i32, i32, i32) {
    %c0_i32 = arith.constant 0 : i32
    %c0_i32_0 = arith.constant 0 : i32
    %c0_i32_1 = arith.constant 0 : i32
    return %arg0, %arg1, %c0_i32, %c0_i32_0 : i32, i32, i32, i32
  }
  func.func @transform_1(%arg0: i32, %arg1: i32) -> (i32, i32) {
    %c0_i32 = arith.constant 0 : i32
    %c0_i32_0 = arith.constant 0 : i32
    %c0_i32_1 = arith.constant 0 : i32
    return %c0_i32, %c0_i32_0 : i32, i32
  }
  func.func @transform_2(%arg0: i32, %arg1: i32) -> (i32, i32) {
    %c0_i32 = arith.constant 0 : i32
    %c0_i32_0 = arith.constant 0 : i32
    %c0_i32_1 = arith.constant 0 : i32
    return %c0_i32, %c0_i32_0 : i32, i32
  }
  func.func @transform_3(%arg0: i32, %arg1: i32) -> (i32, i32, i32) {
    %c0_i32 = arith.constant 0 : i32
    %c0_i32_0 = arith.constant 0 : i32
    %c0_i32_1 = arith.constant 0 : i32
    return %arg0, %c0_i32, %c0_i32_0 : i32, i32, i32
  }
  func.func @transform_4(%arg0: i32, %arg1: i32) -> (i32, i32, i32, i32) {
    %c0_i32 = arith.constant 0 : i32
    %c0_i32_0 = arith.constant 0 : i32
    %c0_i32_1 = arith.constant 0 : i32
    return %arg1, %arg0, %c0_i32, %c0_i32_0 : i32, i32, i32, i32
  }
}

</mosaic_0001>

<llo_original>
// kernel: tpu_custom_call.1
$region0: #{tpu_custom_call.1}
  #allocation0 [shape = 'u32[]', space=smem, size = 0x4, offset = 0x4, fixed_abs, tag = 'smem constant byte address 0x4 - core index']
  #allocation1 [shape = 'u32[72,128]{1,0:T(1,128)}', space=vmem, size = 0x9000, scoped, tag = 'internal scratch']
  %s0 = inlined_call_operand.vmem [shape: f32[23,2,8,1], index: 0, kind: input, shape index: {}]
  %s1 = inlined_call_operand.vmem [shape: f32[23,128], index: 1, kind: input, shape index: {}]
  %s2 = inlined_call_operand.vmem [shape: f32[23,128], index: 2, kind: input, shape index: {}]
  %s3 = inlined_call_operand.hbm [shape: bf16[23,128,128], index: 3, kind: input, shape index: {}]
  %s4 = inlined_call_operand.hbm [shape: f32[2,23,8,128], index: 4, kind: output, shape index: {}]
  %s5 = sld [smem:[#allocation0]]
  $region30: #{tpu_custom_call.1} parent=0
    _
  %s7 = ssub.s32 1, %s5
  %s8 = scalar_select 0, %s7, %s5
  $region1: #{tpu_custom_call.1} parent=0
    #allocation2 [shape = 'u8[753664]{0}', space=vmem, size = 0xb8000, scoped, tag = 'input window, operand 3, single buffered']
    #allocation3 [shape = 's32[1]{0}', space=sflag, size = 0x4, scoped, tag = 'scoped memory for tpu_custom_call.1']
    #allocation4 [shape = 's32[1]{0}', space=sflag, size = 0x4, scoped, tag = 'scoped memory for tpu_custom_call.1']
    #allocation5 [shape = 'u8[188416]{0}', space=vmem, size = 0x2e000, scoped, tag = 'output window, operand 0, single buffered']
    %9 = vsyncpa [#allocation3], 0
    %10 = vsyncpa [#allocation4], 0
    // Predicated region
    $region2: #{tpu_custom_call.1} parent=1 // pred_check
      _
    $region3: #{tpu_custom_call.1} parent=1 // pred_check_branch
      %12 = sbr.rel (0) target = $region5
    $region4: #{tpu_custom_call.1} parent=1 // pred_region
      _
    $region5: #{tpu_custom_call.1} parent=1 // pred_fallthru
      _
    // Predicated region
    $region6: #{tpu_custom_call.1} parent=1 // pred_check
      _
    $region7: #{tpu_custom_call.1} parent=1 // pred_check_branch
      %14 = sbr.rel (0) target = $region9
    $region8: #{tpu_custom_call.1} parent=1 // pred_region
      _
    $region9: #{tpu_custom_call.1} parent=1 // pred_fallthru
      _
    // Predicated region
    $region10: #{tpu_custom_call.1} parent=1 // pred_check
      _
    $region11: #{tpu_custom_call.1} parent=1 // pred_check_branch
      %16 = sbr.rel (0) target = $region13
    $region12: #{tpu_custom_call.1} parent=1 // pred_region
      _
    $region13: #{tpu_custom_call.1} parent=1 // pred_fallthru
      _
    // Predicated region
    $region14: #{tpu_custom_call.1} parent=1 // pred_check
      _
    $region15: #{tpu_custom_call.1} parent=1 // pred_check_branch
      %18 = sbr.rel (0) target = $region17
    $region16: #{tpu_custom_call.1} parent=1 // pred_region
      %20 = vsyncadd [#allocation3], 0
      %s21 = sshll.u32 %s3, 4
      %s22 = int_to_ptr.hbm [resolvable:$true] %s21
      %s23 = sshll.u32 [#allocation2], 4
      %s24 = int_to_ptr.vmem [resolvable:$true] %s23
      %29 = dma.hbm_to_vmem [thread:$0]  %s22, 23552, %s24, [#allocation3], 64, 64, 4
    $region17: #{tpu_custom_call.1} parent=1 // pred_fallthru
      _
    // Predicated region
    $region18: #{tpu_custom_call.1} parent=1 // pred_check
      _
    $region19: #{tpu_custom_call.1} parent=1 // pred_check_branch
      %31 = sbr.rel (0) target = $region21
    $region20: #{tpu_custom_call.1} parent=1 // pred_region
      %33 = dma.done [#allocation3], 23552
    $region21: #{tpu_custom_call.1} parent=1 // pred_fallthru
      _
    %s34 = smul.u32 0, 23
    %p35 = scmp.lt.s32.totalorder %s34, 22
    %s36 = scalar_select %p35, %s34, 22
    %v37 = vld [vmem:[%s0] sm:$0xff]
    %v38 = vld [vmem:[%s0 + $0x8] sm:$0xff]
    %s39 = scalar_lea.vmem %s1, %s36
    %v40 = vld [vmem:[%s39] sm:$0x1]
    %s41 = scalar_lea.vmem %s2, %s36
    %v42 = vld [vmem:[%s41] sm:$0x1]
    %44 = vset.pattern.permute.xlu0 0
    %45 = vperm.xlu0 %44, %v37
    %v46 = vpop.permute.xlu0 %45
    %49 = vset.pattern.permute.xlu0 0
    %50 = vperm.xlu0 %49, %v38
    %v51 = vpop.permute.xlu0 %50
    %v53 = vperm.slane %v40, 0
    %v54 = vsub.f32 %v46, %v53
    %v55 = vsub.f32 %v51, %v53
    %v56 = vmul.f32 %v54, %v54
    %v57 = vmul.f32 %v55, %v55
    %v58 = vperm.slane %v42, 0
    %v59 = vmul.f32 %v56, %v58
    %v60 = vmul.f32 %v57, %v58
    %v61 = vmul.f32 %v59, 1.442695
    %v62 = vpow.pop %v61
    %v63 = vmul.f32 %v60, 1.442695
    %v64 = vpow.pop %v63
    %v65 = vmul.f32 %v62, 1.442695
    %v66 = vpow.pop %v65
    %v67 = vmul.f32 %v64, 1.442695
    %v68 = vpow.pop %v67
    %69 = vadd.xlane.f32.xlu0 %v66
    %v70 = vpop.xlane.xlu0 %69
    %71 = vadd.xlane.f32.xlu0 %v68
    %v72 = vpop.xlane.xlu0 %71
    %v73 = vrcp.pop %v70
    %v74 = vrcp.pop %v72
    %v75 = vpack.c.bf16 %v68, %v66
    %v76 = vld [vmem:[#allocation2] sm:$0xf]
    %v77 = vld [vmem:[#allocation2 + $0x4] sm:$0xf]
    %v78 = vld [vmem:[#allocation2 + $0x8] sm:$0xf]
    %v79 = vld [vmem:[#allocation2 + $0xc] sm:$0xf]
    %v80 = vld [vmem:[#allocation2 + $0x10] sm:$0xf]
    %v81 = vld [vmem:[#allocation2 + $0x14] sm:$0xf]
    %v82 = vld [vmem:[#allocation2 + $0x18] sm:$0xf]
    %v83 = vld [vmem:[#allocation2 + $0x1c] sm:$0xf]
    %v84 = vld [vmem:[#allocation2 + $0x20] sm:$0xf]
    %v85 = vld [vmem:[#allocation2 + $0x24] sm:$0xf]
    %v86 = vld [vmem:[#allocation2 + $0x28] sm:$0xf]
    %v87 = vld [vmem:[#allocation2 + $0x2c] sm:$0xf]
    %v88 = vld [vmem:[#allocation2 + $0x30] sm:$0xf]
    %v89 = vld [vmem:[#allocation2 + $0x34] sm:$0xf]
    %v90 = vld [vmem:[#allocation2 + $0x38] sm:$0xf]
    %v91 = vld [vmem:[#allocation2 + $0x3c] sm:$0xf]
    %v108 = vunpack.c.l.b16 %v76
    %v109 = vunpack.c.l.b16 %v77
    %v110 = vunpack.c.l.b16 %v78
    %v111 = vunpack.c.l.b16 %v79
    %v112 = vunpack.c.l.b16 %v80
    %v113 = vunpack.c.l.b16 %v81
    %v114 = vunpack.c.l.b16 %v82
    %v115 = vunpack.c.l.b16 %v83
    %v116 = vunpack.c.l.b16 %v84
    %v117 = vunpack.c.l.b16 %v85
    %v118 = vunpack.c.l.b16 %v86
    %v119 = vunpack.c.l.b16 %v87
    %v120 = vunpack.c.l.b16 %v88
    %v121 = vunpack.c.l.b16 %v89
    %v122 = vunpack.c.l.b16 %v90
    %v123 = vunpack.c.l.b16 %v91
    %v124 = vpack.c.b16 %v109, %v108
    %v125 = vpack.c.b16 %v111, %v110
    %v126 = vpack.c.b16 %v113, %v112
    %v127 = vpack.c.b16 %v115, %v114
    %v128 = vpack.c.b16 %v117, %v116
    %v129 = vpack.c.b16 %v119, %v118
    %v130 = vpack.c.b16 %v121, %v120
    %v131 = vpack.c.b16 %v123, %v122
    %140 = vmatpush.bf16.msra.mxu0 %v131
    %141 = vmatpush.bf16.msra.mxu0 %v130
    %142 = vmatpush.bf16.msra.mxu0 %v129
    %143 = vmatpush.bf16.msra.mxu0 %v128
    %144 = vmatpush.bf16.msra.mxu0 %v127
    %145 = vmatpush.bf16.msra.mxu0 %v126
    %146 = vmatpush.bf16.msra.mxu0 %v125
    %147 = vmatpush.bf16.msra.mxu0 %v124
    %148 = vmatmul.bf16.gmra.mxu0 %v75
    %v149 = vpop.f32.mrf.mxu0
    %v150 = vadd.f32 0.0, %v149
    %v151 = vpop.f32.mrf.mxu0
    %v152 = vadd.f32 0.0, %v151
    %153 = vdwg.mxu0
    %v154 = vmul.f32 %v150, %v73
    %v155 = vmul.f32 %v152, %v74
    %156 = vst [vmem:[#allocation5] sm:$0xff] %v154
    %157 = vst [vmem:[#allocation5 + $0xb8] sm:$0xff] %v155
    %s158 = sadd.s32 %s34, 1
    %p159 = scmp.lt.s32.totalorder %s158, 22
    %s160 = scalar_select %p159, %s158, 22
    %s161 = scalar_lea.vmem %s0, 16
    %v162 = vld [vmem:[%s161] sm:$0xff]
    %v163 = vld [vmem:[%s161 + $0x8] sm:$0xff]
    %s164 = scalar_lea.vmem %s1, %s160
    %v165 = vld [vmem:[%s164] sm:$0x1]
    %s166 = scalar_lea.vmem %s2, %s160
    %v167 = vld [vmem:[%s166] sm:$0x1]
    %169 = vset.pattern.permute.xlu0 0
    %170 = vperm.xlu0 %169, %v162
    %v171 = vpop.permute.xlu0 %170
    %174 = vset.pattern.permute.xlu0 0
    %175 = vperm.xlu0 %174, %v163
    %v176 = vpop.permute.xlu0 %175
    %v178 = vperm.slane %v165, 0
    %v179 = vsub.f32 %v171, %v178
    %v180 = vsub.f32 %v176, %v178
    %v181 = vmul.f32 %v179, %v179
    %v182 = vmul.f32 %v180, %v180
    %v183 = vperm.slane %v167, 0
    %v184 = vmul.f32 %v181, %v183
    %v185 = vmul.f32 %v182, %v183
    %v186 = vmul.f32 %v184, 1.442695
    %v187 = vpow.pop %v186
    %v188 = vmul.f32 %v185, 1.442695
    %v189 = vpow.pop %v188
    %v190 = vmul.f32 %v187, 1.442695
    %v191 = vpow.pop %v190
    %v192 = vmul.f32 %v189, 1.442695
    %v193 = vpow.pop %v192
    %194 = vadd.xlane.f32.xlu0 %v191
    %v195 = vpop.xlane.xlu0 %194
    %196 = vadd.xlane.f32.xlu0 %v193
    %v197 = vpop.xlane.xlu0 %196
    %v198 = vrcp.pop %v195
    %v199 = vrcp.pop %v197
    %v200 = vpack.c.bf16 %v193, %v191
    %s201 = scalar_lea.vmem [#allocation2], 64
    %v202 = vld [vmem:[%s201] sm:$0xf]
    %v203 = vld [vmem:[%s201 + $0x4] sm:$0xf]
    %v204 = vld [vmem:[%s201 + $0x8] sm:$0xf]
    %v205 = vld [vmem:[%s201 + $0xc] sm:$0xf]
    %v206 = vld [vmem:[%s201 + $0x10] sm:$0xf]
    %v207 = vld [vmem:[%s201 + $0x14] sm:$0xf]
    %v208 = vld [vmem:[%s201 + $0x18] sm:$0xf]
    %v209 = vld [vmem:[%s201 + $0x1c] sm:$0xf]
    %v210 = vld [vmem:[%s201 + $0x20] sm:$0xf]
    %v211 = vld [vmem:[%s201 + $0x24] sm:$0xf]
    %v212 = vld [vmem:[%s201 + $0x28] sm:$0xf]
    %v213 = vld [vmem:[%s201 + $0x2c] sm:$0xf]
    %v214 = vld [vmem:[%s201 + $0x30] sm:$0xf]
    %v215 = vld [vmem:[%s201 + $0x34] sm:$0xf]
    %v216 = vld [vmem:[%s201 + $0x38] sm:$0xf]
    %v217 = vld [vmem:[%s201 + $0x3c] sm:$0xf]
    %v234 = vunpack.c.l.b16 %v202
    %v235 = vunpack.c.l.b16 %v203
    %v236 = vunpack.c.l.b16 %v204
    %v237 = vunpack.c.l.b16 %v205
    %v238 = vunpack.c.l.b16 %v206
    %v239 = vunpack.c.l.b16 %v207
    %v240 = vunpack.c.l.b16 %v208
    %v241 = vunpack.c.l.b16 %v209
    %v242 = vunpack.c.l.b16 %v210
    %v243 = vunpack.c.l.b16 %v211
    %v244 = vunpack.c.l.b16 %v212
    %v245 = vunpack.c.l.b16 %v213
    %v246 = vunpack.c.l.b16 %v214
    %v247 = vunpack.c.l.b16 %v215
    %v248 = vunpack.c.l.b16 %v216
    %v249 = vunpack.c.l.b16 %v217
    %v250 = vpack.c.b16 %v235, %v234
    %v251 = vpack.c.b16 %v237, %v236
    %v252 = vpack.c.b16 %v239, %v238
    %v253 = vpack.c.b16 %v241, %v240
    %v254 = vpack.c.b16 %v243, %v242
    %v255 = vpack.c.b16 %v245, %v244
    %v256 = vpack.c.b16 %v247, %v246
    %v257 = vpack.c.b16 %v249, %v248
    %266 = vmatpush.bf16.msra.mxu0 %v257
    %267 = vmatpush.bf16.msra.mxu0 %v256
    %268 = vmatpush.bf16.msra.mxu0 %v255
    %269 = vmatpush.bf16.msra.mxu0 %v254
    %270 = vmatpush.bf16.msra.mxu0 %v253
    %271 = vmatpush.bf16.msra.mxu0 %v252
    %272 = vmatpush.bf16.msra.mxu0 %v251
    %273 = vmatpush.bf16.msra.mxu0 %v250
    %274 = vmatmul.bf16.gmra.mxu0 %v200
    %v275 = vpop.f32.mrf.mxu0
    %v276 = vadd.f32 0.0, %v275
    %v277 = vpop.f32.mrf.mxu0
    %v278 = vadd.f32 0.0, %v277
    %279 = vdwg.mxu0
    %v280 = vmul.f32 %v276, %v198
    %v281 = vmul.f32 %v278, %v199
    %s282 = scalar_lea.vmem [#allocation5], 8
    %283 = vst [vmem:[%s282] sm:$0xff] %v280
    %284 = vst [vmem:[%s282 + $0xb8] sm:$0xff] %v281
    %s285 = sadd.s32 %s34, 2
    %p286 = scmp.lt.s32.totalorder %s285, 22
    %s287 = scalar_select %p286, %s285, 22
    %s288 = scalar_lea.vmem %s0, 32
    %v289 = vld [vmem:[%s288] sm:$0xff]
    %v290 = vld [vmem:[%s288 + $0x8] sm:$0xff]
    %s291 = scalar_lea.vmem %s1, %s287
    %v292 = vld [vmem:[%s291] sm:$0x1]
    %s293 = scalar_lea.vmem %s2, %s287
    %v294 = vld [vmem:[%s293] sm:$0x1]
    %296 = vset.pattern.permute.xlu0 0
    %297 = vperm.xlu0 %296, %v289
    %v298 = vpop.permute.xlu0 %297
    %301 = vset.pattern.permute.xlu0 0
    %302 = vperm.xlu0 %301, %v290
    %v303 = vpop.permute.xlu0 %302
    %v305 = vperm.slane %v292, 0
    %v306 = vsub.f32 %v298, %v305
    %v307 = vsub.f32 %v303, %v305
    %v308 = vmul.f32 %v306, %v306
    %v309 = vmul.f32 %v307, %v307
    %v310 = vperm.slane %v294, 0
    %v311 = vmul.f32 %v308, %v310
    %v312 = vmul.f32 %v309, %v310
    %v313 = vmul.f32 %v311, 1.442695
    %v314 = vpow.pop %v313
    %v315 = vmul.f32 %v312, 1.442695
    %v316 = vpow.pop %v315
    %v317 = vmul.f32 %v314, 1.442695
    %v318 = vpow.pop %v317
    %v319 = vmul.f32 %v316, 1.442695
    %v320 = vpow.pop %v319
    %321 = vadd.xlane.f32.xlu0 %v318
    %v322 = vpop.xlane.xlu0 %321
    %323 = vadd.xlane.f32.xlu0 %v320
    %v324 = vpop.xlane.xlu0 %323
    %v325 = vrcp.pop %v322
    %v326 = vrcp.pop %v324
    %v327 = vpack.c.bf16 %v320, %v318
    %s328 = scalar_lea.vmem [#allocation2], 128
    %v329 = vld [vmem:[%s328] sm:$0xf]
    %v330 = vld [vmem:[%s328 + $0x4] sm:$0xf]
    %v331 = vld [vmem:[%s328 + $0x8] sm:$0xf]
    %v332 = vld [vmem:[%s328 + $0xc] sm:$0xf]
    %v333 = vld [vmem:[%s328 + $0x10] sm:$0xf]
    %v334 = vld [vmem:[%s328 + $0x14] sm:$0xf]
    %v335 = vld [vmem:[%s328 + $0x18] sm:$0xf]
    %v336 = vld [vmem:[%s328 + $0x1c] sm:$0xf]
    %v337 = vld [vmem:[%s328 + $0x20] sm:$0xf]
    %v338 = vld [vmem:[%s328 + $0x24] sm:$0xf]
    %v339 = vld [vmem:[%s328 + $0x28] sm:$0xf]
    %v340 = vld [vmem:[%s328 + $0x2c] sm:$0xf]
    %v341 = vld [vmem:[%s328 + $0x30] sm:$0xf]
    %v342 = vld [vmem:[%s328 + $0x34] sm:$0xf]
    %v343 = vld [vmem:[%s328 + $0x38] sm:$0xf]
    %v344 = vld [vmem:[%s328 + $0x3c] sm:$0xf]
    %v361 = vunpack.c.l.b16 %v329
    %v362 = vunpack.c.l.b16 %v330
    %v363 = vunpack.c.l.b16 %v331
    %v364 = vunpack.c.l.b16 %v332
    %v365 = vunpack.c.l.b16 %v333
    %v366 = vunpack.c.l.b16 %v334
    %v367 = vunpack.c.l.b16 %v335
    %v368 = vunpack.c.l.b16 %v336
    %v369 = vunpack.c.l.b16 %v337
    %v370 = vunpack.c.l.b16 %v338
    %v371 = vunpack.c.l.b16 %v339
    %v372 = vunpack.c.l.b16 %v340
    %v373 = vunpack.c.l.b16 %v341
    %v374 = vunpack.c.l.b16 %v342
    %v375 = vunpack.c.l.b16 %v343
    %v376 = vunpack.c.l.b16 %v344
    %v377 = vpack.c.b16 %v362, %v361
    %v378 = vpack.c.b16 %v364, %v363
    %v379 = vpack.c.b16 %v366, %v365
    %v380 = vpack.c.b16 %v368, %v367
    %v381 = vpack.c.b16 %v370, %v369
    %v382 = vpack.c.b16 %v372, %v371
    %v383 = vpack.c.b16 %v374, %v373
    %v384 = vpack.c.b16 %v376, %v375
    %393 = vmatpush.bf16.msra.mxu0 %v384
    %394 = vmatpush.bf16.msra.mxu0 %v383
    %395 = vmatpush.bf16.msra.mxu0 %v382
    %396 = vmatpush.bf16.msra.mxu0 %v381
    %397 = vmatpush.bf16.msra.mxu0 %v380
    %398 = vmatpush.bf16.msra.mxu0 %v379
    %399 = vmatpush.bf16.msra.mxu0 %v378
    %400 = vmatpush.bf16.msra.mxu0 %v377
    %401 = vmatmul.bf16.gmra.mxu0 %v327
    %v402 = vpop.f32.mrf.mxu0
    %v403 = vadd.f32 0.0, %v402
    %v404 = vpop.f32.mrf.mxu0
    %v405 = vadd.f32 0.0, %v404
    %406 = vdwg.mxu0
    %v407 = vmul.f32 %v403, %v325
    %v408 = vmul.f32 %v405, %v326
    %s409 = scalar_lea.vmem [#allocation5], 16
    %410 = vst [vmem:[%s409] sm:$0xff] %v407
    %411 = vst [vmem:[%s409 + $0xb8] sm:$0xff] %v408
    %s412 = sadd.s32 %s34, 3
    %p413 = scmp.lt.s32.totalorder %s412, 22
    %s414 = scalar_select %p413, %s412, 22
    %s415 = scalar_lea.vmem %s0, 48
    %v416 = vld [vmem:[%s415] sm:$0xff]
    %v417 = vld [vmem:[%s415 + $0x8] sm:$0xff]
    %s418 = scalar_lea.vmem %s1, %s414
    %v419 = vld [vmem:[%s418] sm:$0x1]
    %s420 = scalar_lea.vmem %s2, %s414
    %v421 = vld [vmem:[%s420] sm:$0x1]
    %423 = vset.pattern.permute.xlu0 0
    %424 = vperm.xlu0 %423, %v416
    %v425 = vpop.permute.xlu0 %424
    %428 = vset.pattern.permute.xlu0 0
    %429 = vperm.xlu0 %428, %v417
    %v430 = vpop.permute.xlu0 %429
    %v432 = vperm.slane %v419, 0
    %v433 = vsub.f32 %v425, %v432
    %v434 = vsub.f32 %v430, %v432
    %v435 = vmul.f32 %v433, %v433
    %v436 = vmul.f32 %v434, %v434
    %v437 = vperm.slane %v421, 0
    %v438 = vmul.f32 %v435, %v437
    %v439 = vmul.f32 %v436, %v437
    %v440 = vmul.f32 %v438, 1.442695
    %v441 = vpow.pop %v440
    %v442 = vmul.f32 %v439, 1.442695
    %v443 = vpow.pop %v442
    %v444 = vmul.f32 %v441, 1.442695
    %v445 = vpow.pop %v444
    %v446 = vmul.f32 %v443, 1.442695
    %v447 = vpow.pop %v446
    %448 = vadd.xlane.f32.xlu0 %v445
    %v449 = vpop.xlane.xlu0 %448
    %450 = vadd.xlane.f32.xlu0 %v447
    %v451 = vpop.xlane.xlu0 %450
    %v452 = vrcp.pop %v449
    %v453 = vrcp.pop %v451
    %v454 = vpack.c.bf16 %v447, %v445
    %s455 = scalar_lea.vmem [#allocation2], 192
    %v456 = vld [vmem:[%s455] sm:$0xf]
    %v457 = vld [vmem:[%s455 + $0x4] sm:$0xf]
    %v458 = vld [vmem:[%s455 + $0x8] sm:$0xf]
    %v459 = vld [vmem:[%s455 + $0xc] sm:$0xf]
    %v460 = vld [vmem:[%s455 + $0x10] sm:$0xf]
    %v461 = vld [vmem:[%s455 + $0x14] sm:$0xf]
    %v462 = vld [vmem:[%s455 + $0x18] sm:$0xf]
    %v463 = vld [vmem:[%s455 + $0x1c] sm:$0xf]
    %v464 = vld [vmem:[%s455 + $0x20] sm:$0xf]
    %v465 = vld [vmem:[%s455 + $0x24] sm:$0xf]
    %v466 = vld [vmem:[%s455 + $0x28] sm:$0xf]
    %v467 = vld [vmem:[%s455 + $0x2c] sm:$0xf]
    %v468 = vld [vmem:[%s455 + $0x30] sm:$0xf]
    %v469 = vld [vmem:[%s455 + $0x34] sm:$0xf]
    %v470 = vld [vmem:[%s455 + $0x38] sm:$0xf]
    %v471 = vld [vmem:[%s455 + $0x3c] sm:$0xf]
    %v488 = vunpack.c.l.b16 %v456
    %v489 = vunpack.c.l.b16 %v457
    %v490 = vunpack.c.l.b16 %v458
    %v491 = vunpack.c.l.b16 %v459
    %v492 = vunpack.c.l.b16 %v460
    %v493 = vunpack.c.l.b16 %v461
    %v494 = vunpack.c.l.b16 %v462
    %v495 = vunpack.c.l.b16 %v463
    %v496 = vunpack.c.l.b16 %v464
    %v497 = vunpack.c.l.b16 %v465
    %v498 = vunpack.c.l.b16 %v466
    %v499 = vunpack.c.l.b16 %v467
    %v500 = vunpack.c.l.b16 %v468
    %v501 = vunpack.c.l.b16 %v469
    %v502 = vunpack.c.l.b16 %v470
    %v503 = vunpack.c.l.b16 %v471
    %v504 = vpack.c.b16 %v489, %v488
    %v505 = vpack.c.b16 %v491, %v490
    %v506 = vpack.c.b16 %v493, %v492
    %v507 = vpack.c.b16 %v495, %v494
    %v508 = vpack.c.b16 %v497, %v496
    %v509 = vpack.c.b16 %v499, %v498
    %v510 = vpack.c.b16 %v501, %v500
    %v511 = vpack.c.b16 %v503, %v502
    %520 = vmatpush.bf16.msra.mxu0 %v511
    %521 = vmatpush.bf16.msra.mxu0 %v510
    %522 = vmatpush.bf16.msra.mxu0 %v509
    %523 = vmatpush.bf16.msra.mxu0 %v508
    %524 = vmatpush.bf16.msra.mxu0 %v507
    %525 = vmatpush.bf16.msra.mxu0 %v506
    %526 = vmatpush.bf16.msra.mxu0 %v505
    %527 = vmatpush.bf16.msra.mxu0 %v504
    %528 = vmatmul.bf16.gmra.mxu0 %v454
    %v529 = vpop.f32.mrf.mxu0
    %v530 = vadd.f32 0.0, %v529
    %v531 = vpop.f32.mrf.mxu0
    %v532 = vadd.f32 0.0, %v531
    %533 = vdwg.mxu0
    %v534 = vmul.f32 %v530, %v452
    %v535 = vmul.f32 %v532, %v453
    %s536 = scalar_lea.vmem [#allocation5], 24
    %537 = vst [vmem:[%s536] sm:$0xff] %v534
    %538 = vst [vmem:[%s536 + $0xb8] sm:$0xff] %v535
    %s539 = sadd.s32 %s34, 4
    %p540 = scmp.lt.s32.totalorder %s539, 22
    %s541 = scalar_select %p540, %s539, 22
    %s542 = scalar_lea.vmem %s0, 64
    %v543 = vld [vmem:[%s542] sm:$0xff]
    %v544 = vld [vmem:[%s542 + $0x8] sm:$0xff]
    %s545 = scalar_lea.vmem %s1, %s541
    %v546 = vld [vmem:[%s545] sm:$0x1]
    %s547 = scalar_lea.vmem %s2, %s541
    %v548 = vld [vmem:[%s547] sm:$0x1]
    %550 = vset.pattern.permute.xlu0 0
    %551 = vperm.xlu0 %550, %v543
    %v552 = vpop.permute.xlu0 %551
    %555 = vset.pattern.permute.xlu0 0
    %556 = vperm.xlu0 %555, %v544
    %v557 = vpop.permute.xlu0 %556
    %v559 = vperm.slane %v546, 0
    %v560 = vsub.f32 %v552, %v559
    %v561 = vsub.f32 %v557, %v559
    %v562 = vmul.f32 %v560, %v560
    %v563 = vmul.f32 %v561, %v561
    %v564 = vperm.slane %v548, 0
    %v565 = vmul.f32 %v562, %v564
    %v566 = vmul.f32 %v563, %v564
    %v567 = vmul.f32 %v565, 1.442695
    %v568 = vpow.pop %v567
    %v569 = vmul.f32 %v566, 1.442695
    %v570 = vpow.pop %v569
    %v571 = vmul.f32 %v568, 1.442695
    %v572 = vpow.pop %v571
    %v573 = vmul.f32 %v570, 1.442695
    %v574 = vpow.pop %v573
    %575 = vadd.xlane.f32.xlu0 %v572
    %v576 = vpop.xlane.xlu0 %575
    %577 = vadd.xlane.f32.xlu0 %v574
    %v578 = vpop.xlane.xlu0 %577
    %v579 = vrcp.pop %v576
    %v580 = vrcp.pop %v578
    %v581 = vpack.c.bf16 %v574, %v572
    %s582 = scalar_lea.vmem [#allocation2], 256
    %v583 = vld [vmem:[%s582] sm:$0xf]
    %v584 = vld [vmem:[%s582 + $0x4] sm:$0xf]
    %v585 = vld [vmem:[%s582 + $0x8] sm:$0xf]
    %v586 = vld [vmem:[%s582 + $0xc] sm:$0xf]
    %v587 = vld [vmem:[%s582 + $0x10] sm:$0xf]
    %v588 = vld [vmem:[%s582 + $0x14] sm:$0xf]
    %v589 = vld [vmem:[%s582 + $0x18] sm:$0xf]
    %v590 = vld [vmem:[%s582 + $0x1c] sm:$0xf]
    %v591 = vld [vmem:[%s582 + $0x20] sm:$0xf]
    %v592 = vld [vmem:[%s582 + $0x24] sm:$0xf]
    %v593 = vld [vmem:[%s582 + $0x28] sm:$0xf]
    %v594 = vld [vmem:[%s582 + $0x2c] sm:$0xf]
    %v595 = vld [vmem:[%s582 + $0x30] sm:$0xf]
    %v596 = vld [vmem:[%s582 + $0x34] sm:$0xf]
    %v597 = vld [vmem:[%s582 + $0x38] sm:$0xf]
    %v598 = vld [vmem:[%s582 + $0x3c] sm:$0xf]
    %v615 = vunpack.c.l.b16 %v583
    %v616 = vunpack.c.l.b16 %v584
    %v617 = vunpack.c.l.b16 %v585
    %v618 = vunpack.c.l.b16 %v586
    %v619 = vunpack.c.l.b16 %v587
    %v620 = vunpack.c.l.b16 %v588
    %v621 = vunpack.c.l.b16 %v589
    %v622 = vunpack.c.l.b16 %v590
    %v623 = vunpack.c.l.b16 %v591
    %v624 = vunpack.c.l.b16 %v592
    %v625 = vunpack.c.l.b16 %v593
    %v626 = vunpack.c.l.b16 %v594
    %v627 = vunpack.c.l.b16 %v595
    %v628 = vunpack.c.l.b16 %v596
    %v629 = vunpack.c.l.b16 %v597
    %v630 = vunpack.c.l.b16 %v598
    %v631 = vpack.c.b16 %v616, %v615
    %v632 = vpack.c.b16 %v618, %v617
    %v633 = vpack.c.b16 %v620, %v619
    %v634 = vpack.c.b16 %v622, %v621
    %v635 = vpack.c.b16 %v624, %v623
    %v636 = vpack.c.b16 %v626, %v625
    %v637 = vpack.c.b16 %v628, %v627
    %v638 = vpack.c.b16 %v630, %v629
    %647 = vmatpush.bf16.msra.mxu0 %v638
    %648 = vmatpush.bf16.msra.mxu0 %v637
    %649 = vmatpush.bf16.msra.mxu0 %v636
    %650 = vmatpush.bf16.msra.mxu0 %v635
    %651 = vmatpush.bf16.msra.mxu0 %v634
    %652 = vmatpush.bf16.msra.mxu0 %v633
    %653 = vmatpush.bf16.msra.mxu0 %v632
    %654 = vmatpush.bf16.msra.mxu0 %v631
    %655 = vmatmul.bf16.gmra.mxu0 %v581
    %v656 = vpop.f32.mrf.mxu0
    %v657 = vadd.f32 0.0, %v656
    %v658 = vpop.f32.mrf.mxu0
    %v659 = vadd.f32 0.0, %v658
    %660 = vdwg.mxu0
    %v661 = vmul.f32 %v657, %v579
    %v662 = vmul.f32 %v659, %v580
    %s663 = scalar_lea.vmem [#allocation5], 32
    %664 = vst [vmem:[%s663] sm:$0xff] %v661
    %665 = vst [vmem:[%s663 + $0xb8] sm:$0xff] %v662
    %s666 = sadd.s32 %s34, 5
    %p667 = scmp.lt.s32.totalorder %s666, 22
    %s668 = scalar_select %p667, %s666, 22
    %s669 = scalar_lea.vmem %s0, 80
    %v670 = vld [vmem:[%s669] sm:$0xff]
    %v671 = vld [vmem:[%s669 + $0x8] sm:$0xff]
    %s672 = scalar_lea.vmem %s1, %s668
    %v673 = vld [vmem:[%s672] sm:$0x1]
    %s674 = scalar_lea.vmem %s2, %s668
    %v675 = vld [vmem:[%s674] sm:$0x1]
    %677 = vset.pattern.permute.xlu0 0
    %678 = vperm.xlu0 %677, %v670
    %v679 = vpop.permute.xlu0 %678
    %682 = vset.pattern.permute.xlu0 0
    %683 = vperm.xlu0 %682, %v671
    %v684 = vpop.permute.xlu0 %683
    %v686 = vperm.slane %v673, 0
    %v687 = vsub.f32 %v679, %v686
    %v688 = vsub.f32 %v684, %v686
    %v689 = vmul.f32 %v687, %v687
    %v690 = vmul.f32 %v688, %v688
    %v691 = vperm.slane %v675, 0
    %v692 = vmul.f32 %v689, %v691
    %v693 = vmul.f32 %v690, %v691
    %v694 = vmul.f32 %v692, 1.442695
    %v695 = vpow.pop %v694
    %v696 = vmul.f32 %v693, 1.442695
    %v697 = vpow.pop %v696
    %v698 = vmul.f32 %v695, 1.442695
    %v699 = vpow.pop %v698
    %v700 = vmul.f32 %v697, 1.442695
    %v701 = vpow.pop %v700
    %702 = vadd.xlane.f32.xlu0 %v699
    %v703 = vpop.xlane.xlu0 %702
    %704 = vadd.xlane.f32.xlu0 %v701
    %v705 = vpop.xlane.xlu0 %704
    %v706 = vrcp.pop %v703
    %v707 = vrcp.pop %v705
    %v708 = vpack.c.bf16 %v701, %v699
    %s709 = scalar_lea.vmem [#allocation2], 320
    %v710 = vld [vmem:[%s709] sm:$0xf]
    %v711 = vld [vmem:[%s709 + $0x4] sm:$0xf]
    %v712 = vld [vmem:[%s709 + $0x8] sm:$0xf]
    %v713 = vld [vmem:[%s709 + $0xc] sm:$0xf]
    %v714 = vld [vmem:[%s709 + $0x10] sm:$0xf]
    %v715 = vld [vmem:[%s709 + $0x14] sm:$0xf]
    %v716 = vld [vmem:[%s709 + $0x18] sm:$0xf]
    %v717 = vld [vmem:[%s709 + $0x1c] sm:$0xf]
    %v718 = vld [vmem:[%s709 + $0x20] sm:$0xf]
    %v719 = vld [vmem:[%s709 + $0x24] sm:$0xf]
    %v720 = vld [vmem:[%s709 + $0x28] sm:$0xf]
    %v721 = vld [vmem:[%s709 + $0x2c] sm:$0xf]
    %v722 = vld [vmem:[%s709 + $0x30] sm:$0xf]
    %v723 = vld [vmem:[%s709 + $0x34] sm:$0xf]
    %v724 = vld [vmem:[%s709 + $0x38] sm:$0xf]
    %v725 = vld [vmem:[%s709 + $0x3c] sm:$0xf]
    %v742 = vunpack.c.l.b16 %v710
    %v743 = vunpack.c.l.b16 %v711
    %v744 = vunpack.c.l.b16 %v712
    %v745 = vunpack.c.l.b16 %v713
    %v746 = vunpack.c.l.b16 %v714
    %v747 = vunpack.c.l.b16 %v715
    %v748 = vunpack.c.l.b16 %v716
    %v749 = vunpack.c.l.b16 %v717
    %v750 = vunpack.c.l.b16 %v718
    %v751 = vunpack.c.l.b16 %v719
    %v752 = vunpack.c.l.b16 %v720
    %v753 = vunpack.c.l.b16 %v721
    %v754 = vunpack.c.l.b16 %v722
    %v755 = vunpack.c.l.b16 %v723
    %v756 = vunpack.c.l.b16 %v724
    %v757 = vunpack.c.l.b16 %v725
    %v758 = vpack.c.b16 %v743, %v742
    %v759 = vpack.c.b16 %v745, %v744
    %v760 = vpack.c.b16 %v747, %v746
    %v761 = vpack.c.b16 %v749, %v748
    %v762 = vpack.c.b16 %v751, %v750
    %v763 = vpack.c.b16 %v753, %v752
    %v764 = vpack.c.b16 %v755, %v754
    %v765 = vpack.c.b16 %v757, %v756
    %774 = vmatpush.bf16.msra.mxu0 %v765
    %775 = vmatpush.bf16.msra.mxu0 %v764
    %776 = vmatpush.bf16.msra.mxu0 %v763
    %777 = vmatpush.bf16.msra.mxu0 %v762
    %778 = vmatpush.bf16.msra.mxu0 %v761
    %779 = vmatpush.bf16.msra.mxu0 %v760
    %780 = vmatpush.bf16.msra.mxu0 %v759
    %781 = vmatpush.bf16.msra.mxu0 %v758
    %782 = vmatmul.bf16.gmra.mxu0 %v708
    %v783 = vpop.f32.mrf.mxu0
    %v784 = vadd.f32 0.0, %v783
    %v785 = vpop.f32.mrf.mxu0
    %v786 = vadd.f32 0.0, %v785
    %787 = vdwg.mxu0
    %v788 = vmul.f32 %v784, %v706
    %v789 = vmul.f32 %v786, %v707
    %s790 = scalar_lea.vmem [#allocation5], 40
    %791 = vst [vmem:[%s790] sm:$0xff] %v788
    %792 = vst [vmem:[%s790 + $0xb8] sm:$0xff] %v789
    %s793 = sadd.s32 %s34, 6
    %p794 = scmp.lt.s32.totalorder %s793, 22
    %s795 = scalar_select %p794, %s793, 22
    %s796 = scalar_lea.vmem %s0, 96
    %v797 = vld [vmem:[%s796] sm:$0xff]
    %v798 = vld [vmem:[%s796 + $0x8] sm:$0xff]
    %s799 = scalar_lea.vmem %s1, %s795
    %v800 = vld [vmem:[%s799] sm:$0x1]
    %s801 = scalar_lea.vmem %s2, %s795
    %v802 = vld [vmem:[%s801] sm:$0x1]
    %804 = vset.pattern.permute.xlu0 0
    %805 = vperm.xlu0 %804, %v797
    %v806 = vpop.permute.xlu0 %805
    %809 = vset.pattern.permute.xlu0 0
    %810 = vperm.xlu0 %809, %v798
    %v811 = vpop.permute.xlu0 %810
    %v813 = vperm.slane %v800, 0
    %v814 = vsub.f32 %v806, %v813
    %v815 = vsub.f32 %v811, %v813
    %v816 = vmul.f32 %v814, %v814
    %v817 = vmul.f32 %v815, %v815
    %v818 = vperm.slane %v802, 0
    %v819 = vmul.f32 %v816, %v818
    %v820 = vmul.f32 %v817, %v818
    %v821 = vmul.f32 %v819, 1.442695
    %v822 = vpow.pop %v821
    %v823 = vmul.f32 %v820, 1.442695
    %v824 = vpow.pop %v823
    %v825 = vmul.f32 %v822, 1.442695
    %v826 = vpow.pop %v825
    %v827 = vmul.f32 %v824, 1.442695
    %v828 = vpow.pop %v827
    %829 = vadd.xlane.f32.xlu0 %v826
    %v830 = vpop.xlane.xlu0 %829
    %831 = vadd.xlane.f32.xlu0 %v828
    %v832 = vpop.xlane.xlu0 %831
    %v833 = vrcp.pop %v830
    %v834 = vrcp.pop %v832
    %v835 = vpack.c.bf16 %v828, %v826
    %s836 = scalar_lea.vmem [#allocation2], 384
    %v837 = vld [vmem:[%s836] sm:$0xf]
    %v838 = vld [vmem:[%s836 + $0x4] sm:$0xf]
    %v839 = vld [vmem:[%s836 + $0x8] sm:$0xf]
    %v840 = vld [vmem:[%s836 + $0xc] sm:$0xf]
    %v841 = vld [vmem:[%s836 + $0x10] sm:$0xf]
    %v842 = vld [vmem:[%s836 + $0x14] sm:$0xf]
    %v843 = vld [vmem:[%s836 + $0x18] sm:$0xf]
    %v844 = vld [vmem:[%s836 + $0x1c] sm:$0xf]
    %v845 = vld [vmem:[%s836 + $0x20] sm:$0xf]
    %v846 = vld [vmem:[%s836 + $0x24] sm:$0xf]
    %v847 = vld [vmem:[%s836 + $0x28] sm:$0xf]
    %v848 = vld [vmem:[%s836 + $0x2c] sm:$0xf]
    %v849 = vld [vmem:[%s836 + $0x30] sm:$0xf]
    %v850 = vld [vmem:[%s836 + $0x34] sm:$0xf]
    %v851 = vld [vmem:[%s836 + $0x38] sm:$0xf]
    %v852 = vld [vmem:[%s836 + $0x3c] sm:$0xf]
    %v869 = vunpack.c.l.b16 %v837
    %v870 = vunpack.c.l.b16 %v838
    %v871 = vunpack.c.l.b16 %v839
    %v872 = vunpack.c.l.b16 %v840
    %v873 = vunpack.c.l.b16 %v841
    %v874 = vunpack.c.l.b16 %v842
    %v875 = vunpack.c.l.b16 %v843
    %v876 = vunpack.c.l.b16 %v844
    %v877 = vunpack.c.l.b16 %v845
    %v878 = vunpack.c.l.b16 %v846
    %v879 = vunpack.c.l.b16 %v847
    %v880 = vunpack.c.l.b16 %v848
    %v881 = vunpack.c.l.b16 %v849
    %v882 = vunpack.c.l.b16 %v850
    %v883 = vunpack.c.l.b16 %v851
    %v884 = vunpack.c.l.b16 %v852
    %v885 = vpack.c.b16 %v870, %v869
    %v886 = vpack.c.b16 %v872, %v871
    %v887 = vpack.c.b16 %v874, %v873
    %v888 = vpack.c.b16 %v876, %v875
    %v889 = vpack.c.b16 %v878, %v877
    %v890 = vpack.c.b16 %v880, %v879
    %v891 = vpack.c.b16 %v882, %v881
    %v892 = vpack.c.b16 %v884, %v883
    %901 = vmatpush.bf16.msra.mxu0 %v892
    %902 = vmatpush.bf16.msra.mxu0 %v891
    %903 = vmatpush.bf16.msra.mxu0 %v890
    %904 = vmatpush.bf16.msra.mxu0 %v889
    %905 = vmatpush.bf16.msra.mxu0 %v888
    %906 = vmatpush.bf16.msra.mxu0 %v887
    %907 = vmatpush.bf16.msra.mxu0 %v886
    %908 = vmatpush.bf16.msra.mxu0 %v885
    %909 = vmatmul.bf16.gmra.mxu0 %v835
    %v910 = vpop.f32.mrf.mxu0
    %v911 = vadd.f32 0.0, %v910
    %v912 = vpop.f32.mrf.mxu0
    %v913 = vadd.f32 0.0, %v912
    %914 = vdwg.mxu0
    %v915 = vmul.f32 %v911, %v833
    %v916 = vmul.f32 %v913, %v834
    %s917 = scalar_lea.vmem [#allocation5], 48
    %918 = vst [vmem:[%s917] sm:$0xff] %v915
    %919 = vst [vmem:[%s917 + $0xb8] sm:$0xff] %v916
    %s920 = sadd.s32 %s34, 7
    %p921 = scmp.lt.s32.totalorder %s920, 22
    %s922 = scalar_select %p921, %s920, 22
    %s923 = scalar_lea.vmem %s0, 112
    %v924 = vld [vmem:[%s923] sm:$0xff]
    %v925 = vld [vmem:[%s923 + $0x8] sm:$0xff]
    %s926 = scalar_lea.vmem %s1, %s922
    %v927 = vld [vmem:[%s926] sm:$0x1]
    %s928 = scalar_lea.vmem %s2, %s922
    %v929 = vld [vmem:[%s928] sm:$0x1]
    %931 = vset.pattern.permute.xlu0 0
    %932 = vperm.xlu0 %931, %v924
    %v933 = vpop.permute.xlu0 %932
    %936 = vset.pattern.permute.xlu0 0
    %937 = vperm.xlu0 %936, %v925
    %v938 = vpop.permute.xlu0 %937
    %v940 = vperm.slane %v927, 0
    %v941 = vsub.f32 %v933, %v940
    %v942 = vsub.f32 %v938, %v940
    %v943 = vmul.f32 %v941, %v941
    %v944 = vmul.f32 %v942, %v942
    %v945 = vperm.slane %v929, 0
    %v946 = vmul.f32 %v943, %v945
    %v947 = vmul.f32 %v944, %v945
    %v948 = vmul.f32 %v946, 1.442695
    %v949 = vpow.pop %v948
    %v950 = vmul.f32 %v947, 1.442695
    %v951 = vpow.pop %v950
    %v952 = vmul.f32 %v949, 1.442695
    %v953 = vpow.pop %v952
    %v954 = vmul.f32 %v951, 1.442695
    %v955 = vpow.pop %v954
    %956 = vadd.xlane.f32.xlu0 %v953
    %v957 = vpop.xlane.xlu0 %956
    %958 = vadd.xlane.f32.xlu0 %v955
    %v959 = vpop.xlane.xlu0 %958
    %v960 = vrcp.pop %v957
    %v961 = vrcp.pop %v959
    %v962 = vpack.c.bf16 %v955, %v953
    %s963 = scalar_lea.vmem [#allocation2], 448
    %v964 = vld [vmem:[%s963] sm:$0xf]
    %v965 = vld [vmem:[%s963 + $0x4] sm:$0xf]
    %v966 = vld [vmem:[%s963 + $0x8] sm:$0xf]
    %v967 = vld [vmem:[%s963 + $0xc] sm:$0xf]
    %v968 = vld [vmem:[%s963 + $0x10] sm:$0xf]
    %v969 = vld [vmem:[%s963 + $0x14] sm:$0xf]
    %v970 = vld [vmem:[%s963 + $0x18] sm:$0xf]
    %v971 = vld [vmem:[%s963 + $0x1c] sm:$0xf]
    %v972 = vld [vmem:[%s963 + $0x20] sm:$0xf]
    %v973 = vld [vmem:[%s963 + $0x24] sm:$0xf]
    %v974 = vld [vmem:[%s963 + $0x28] sm:$0xf]
    %v975 = vld [vmem:[%s963 + $0x2c] sm:$0xf]
    %v976 = vld [vmem:[%s963 + $0x30] sm:$0xf]
    %v977 = vld [vmem:[%s963 + $0x34] sm:$0xf]
    %v978 = vld [vmem:[%s963 + $0x38] sm:$0xf]
    %v979 = vld [vmem:[%s963 + $0x3c] sm:$0xf]
    %v996 = vunpack.c.l.b16 %v964
    %v997 = vunpack.c.l.b16 %v965
    %v998 = vunpack.c.l.b16 %v966
    %v999 = vunpack.c.l.b16 %v967
    %v1000 = vunpack.c.l.b16 %v968
    %v1001 = vunpack.c.l.b16 %v969
    %v1002 = vunpack.c.l.b16 %v970
    %v1003 = vunpack.c.l.b16 %v971
    %v1004 = vunpack.c.l.b16 %v972
    %v1005 = vunpack.c.l.b16 %v973
    %v1006 = vunpack.c.l.b16 %v974
    %v1007 = vunpack.c.l.b16 %v975
    %v1008 = vunpack.c.l.b16 %v976
    %v1009 = vunpack.c.l.b16 %v977
    %v1010 = vunpack.c.l.b16 %v978
    %v1011 = vunpack.c.l.b16 %v979
    %v1012 = vpack.c.b16 %v997, %v996
    %v1013 = vpack.c.b16 %v999, %v998
    %v1014 = vpack.c.b16 %v1001, %v1000
    %v1015 = vpack.c.b16 %v1003, %v1002
    %v1016 = vpack.c.b16 %v1005, %v1004
    %v1017 = vpack.c.b16 %v1007, %v1006
    %v1018 = vpack.c.b16 %v1009, %v1008
    %v1019 = vpack.c.b16 %v1011, %v1010
    %1028 = vmatpush.bf16.msra.mxu0 %v1019
    %1029 = vmatpush.bf16.msra.mxu0 %v1018
    %1030 = vmatpush.bf16.msra.mxu0 %v1017
    %1031 = vmatpush.bf16.msra.mxu0 %v1016
    %1032 = vmatpush.bf16.msra.mxu0 %v1015
    %1033 = vmatpush.bf16.msra.mxu0 %v1014
    %1034 = vmatpush.bf16.msra.mxu0 %v1013
    %1035 = vmatpush.bf16.msra.mxu0 %v1012
    %1036 = vmatmul.bf16.gmra.mxu0 %v962
    %v1037 = vpop.f32.mrf.mxu0
    %v1038 = vadd.f32 0.0, %v1037
    %v1039 = vpop.f32.mrf.mxu0
    %v1040 = vadd.f32 0.0, %v1039
    %1041 = vdwg.mxu0
    %v1042 = vmul.f32 %v1038, %v960
    %v1043 = vmul.f32 %v1040, %v961
    %s1044 = scalar_lea.vmem [#allocation5], 56
    %1045 = vst [vmem:[%s1044] sm:$0xff] %v1042
    %1046 = vst [vmem:[%s1044 + $0xb8] sm:$0xff] %v1043
    %s1047 = sadd.s32 %s34, 8
    %p1048 = scmp.lt.s32.totalorder %s1047, 22
    %s1049 = scalar_select %p1048, %s1047, 22
    %s1050 = scalar_lea.vmem %s0, 128
    %v1051 = vld [vmem:[%s1050] sm:$0xff]
    %v1052 = vld [vmem:[%s1050 + $0x8] sm:$0xff]
    %s1053 = scalar_lea.vmem %s1, %s1049
    %v1054 = vld [vmem:[%s1053] sm:$0x1]
    %s1055 = scalar_lea.vmem %s2, %s1049
    %v1056 = vld [vmem:[%s1055] sm:$0x1]
    %1058 = vset.pattern.permute.xlu0 0
    %1059 = vperm.xlu0 %1058, %v1051
    %v1060 = vpop.permute.xlu0 %1059
    %1063 = vset.pattern.permute.xlu0 0
    %1064 = vperm.xlu0 %1063, %v1052
    %v1065 = vpop.permute.xlu0 %1064
    %v1067 = vperm.slane %v1054, 0
    %v1068 = vsub.f32 %v1060, %v1067
    %v1069 = vsub.f32 %v1065, %v1067
    %v1070 = vmul.f32 %v1068, %v1068
    %v1071 = vmul.f32 %v1069, %v1069
    %v1072 = vperm.slane %v1056, 0
    %v1073 = vmul.f32 %v1070, %v1072
    %v1074 = vmul.f32 %v1071, %v1072
    %v1075 = vmul.f32 %v1073, 1.442695
    %v1076 = vpow.pop %v1075
    %v1077 = vmul.f32 %v1074, 1.442695
    %v1078 = vpow.pop %v1077
    %v1079 = vmul.f32 %v1076, 1.442695
    %v1080 = vpow.pop %v1079
    %v1081 = vmul.f32 %v1078, 1.442695
    %v1082 = vpow.pop %v1081
    %1083 = vadd.xlane.f32.xlu0 %v1080
    %v1084 = vpop.xlane.xlu0 %1083
    %1085 = vadd.xlane.f32.xlu0 %v1082
    %v1086 = vpop.xlane.xlu0 %1085
    %v1087 = vrcp.pop %v1084
    %v1088 = vrcp.pop %v1086
    %v1089 = vpack.c.bf16 %v1082, %v1080
    %s1090 = scalar_lea.vmem [#allocation2], 512
    %v1091 = vld [vmem:[%s1090] sm:$0xf]
    %v1092 = vld [vmem:[%s1090 + $0x4] sm:$0xf]
    %v1093 = vld [vmem:[%s1090 + $0x8] sm:$0xf]
    %v1094 = vld [vmem:[%s1090 + $0xc] sm:$0xf]
    %v1095 = vld [vmem:[%s1090 + $0x10] sm:$0xf]
    %v1096 = vld [vmem:[%s1090 + $0x14] sm:$0xf]
    %v1097 = vld [vmem:[%s1090 + $0x18] sm:$0xf]
    %v1098 = vld [vmem:[%s1090 + $0x1c] sm:$0xf]
    %v1099 = vld [vmem:[%s1090 + $0x20] sm:$0xf]
    %v1100 = vld [vmem:[%s1090 + $0x24] sm:$0xf]
    %v1101 = vld [vmem:[%s1090 + $0x28] sm:$0xf]
    %v1102 = vld [vmem:[%s1090 + $0x2c] sm:$0xf]
    %v1103 = vld [vmem:[%s1090 + $0x30] sm:$0xf]
    %v1104 = vld [vmem:[%s1090 + $0x34] sm:$0xf]
    %v1105 = vld [vmem:[%s1090 + $0x38] sm:$0xf]
    %v1106 = vld [vmem:[%s1090 + $0x3c] sm:$0xf]
    %v1123 = vunpack.c.l.b16 %v1091
    %v1124 = vunpack.c.l.b16 %v1092
    %v1125 = vunpack.c.l.b16 %v1093
    %v1126 = vunpack.c.l.b16 %v1094
    %v1127 = vunpack.c.l.b16 %v1095
    %v1128 = vunpack.c.l.b16 %v1096
    %v1129 = vunpack.c.l.b16 %v1097
    %v1130 = vunpack.c.l.b16 %v1098
    %v1131 = vunpack.c.l.b16 %v1099
    %v1132 = vunpack.c.l.b16 %v1100
    %v1133 = vunpack.c.l.b16 %v1101
    %v1134 = vunpack.c.l.b16 %v1102
    %v1135 = vunpack.c.l.b16 %v1103
    %v1136 = vunpack.c.l.b16 %v1104
    %v1137 = vunpack.c.l.b16 %v1105
    %v1138 = vunpack.c.l.b16 %v1106
    %v1139 = vpack.c.b16 %v1124, %v1123
    %v1140 = vpack.c.b16 %v1126, %v1125
    %v1141 = vpack.c.b16 %v1128, %v1127
    %v1142 = vpack.c.b16 %v1130, %v1129
    %v1143 = vpack.c.b16 %v1132, %v1131
    %v1144 = vpack.c.b16 %v1134, %v1133
    %v1145 = vpack.c.b16 %v1136, %v1135
    %v1146 = vpack.c.b16 %v1138, %v1137
    %1155 = vmatpush.bf16.msra.mxu0 %v1146
    %1156 = vmatpush.bf16.msra.mxu0 %v1145
    %1157 = vmatpush.bf16.msra.mxu0 %v1144
    %1158 = vmatpush.bf16.msra.mxu0 %v1143
    %1159 = vmatpush.bf16.msra.mxu0 %v1142
    %1160 = vmatpush.bf16.msra.mxu0 %v1141
    %1161 = vmatpush.bf16.msra.mxu0 %v1140
    %1162 = vmatpush.bf16.msra.mxu0 %v1139
    %1163 = vmatmul.bf16.gmra.mxu0 %v1089
    %v1164 = vpop.f32.mrf.mxu0
    %v1165 = vadd.f32 0.0, %v1164
    %v1166 = vpop.f32.mrf.mxu0
    %v1167 = vadd.f32 0.0, %v1166
    %1168 = vdwg.mxu0
    %v1169 = vmul.f32 %v1165, %v1087
    %v1170 = vmul.f32 %v1167, %v1088
    %s1171 = scalar_lea.vmem [#allocation5], 64
    %1172 = vst [vmem:[%s1171] sm:$0xff] %v1169
    %1173 = vst [vmem:[%s1171 + $0xb8] sm:$0xff] %v1170
    %s1174 = sadd.s32 %s34, 9
    %p1175 = scmp.lt.s32.totalorder %s1174, 22
    %s1176 = scalar_select %p1175, %s1174, 22
    %s1177 = scalar_lea.vmem %s0, 144
    %v1178 = vld [vmem:[%s1177] sm:$0xff]
    %v1179 = vld [vmem:[%s1177 + $0x8] sm:$0xff]
    %s1180 = scalar_lea.vmem %s1, %s1176
    %v1181 = vld [vmem:[%s1180] sm:$0x1]
    %s1182 = scalar_lea.vmem %s2, %s1176
    %v1183 = vld [vmem:[%s1182] sm:$0x1]
    %1185 = vset.pattern.permute.xlu0 0
    %1186 = vperm.xlu0 %1185, %v1178
    %v1187 = vpop.permute.xlu0 %1186
    %1190 = vset.pattern.permute.xlu0 0
    %1191 = vperm.xlu0 %1190, %v1179
    %v1192 = vpop.permute.xlu0 %1191
    %v1194 = vperm.slane %v1181, 0
    %v1195 = vsub.f32 %v1187, %v1194
    %v1196 = vsub.f32 %v1192, %v1194
    %v1197 = vmul.f32 %v1195, %v1195
    %v1198 = vmul.f32 %v1196, %v1196
    %v1199 = vperm.slane %v1183, 0
    %v1200 = vmul.f32 %v1197, %v1199
    %v1201 = vmul.f32 %v1198, %v1199
    %v1202 = vmul.f32 %v1200, 1.442695
    %v1203 = vpow.pop %v1202
    %v1204 = vmul.f32 %v1201, 1.442695
    %v1205 = vpow.pop %v1204
    %v1206 = vmul.f32 %v1203, 1.442695
    %v1207 = vpow.pop %v1206
    %v1208 = vmul.f32 %v1205, 1.442695
    %v1209 = vpow.pop %v1208
    %1210 = vadd.xlane.f32.xlu0 %v1207
    %v1211 = vpop.xlane.xlu0 %1210
    %1212 = vadd.xlane.f32.xlu0 %v1209
    %v1213 = vpop.xlane.xlu0 %1212
    %v1214 = vrcp.pop %v1211
    %v1215 = vrcp.pop %v1213
    %v1216 = vpack.c.bf16 %v1209, %v1207
    %s1217 = scalar_lea.vmem [#allocation2], 576
    %v1218 = vld [vmem:[%s1217] sm:$0xf]
    %v1219 = vld [vmem:[%s1217 + $0x4] sm:$0xf]
    %v1220 = vld [vmem:[%s1217 + $0x8] sm:$0xf]
    %v1221 = vld [vmem:[%s1217 + $0xc] sm:$0xf]
    %v1222 = vld [vmem:[%s1217 + $0x10] sm:$0xf]
    %v1223 = vld [vmem:[%s1217 + $0x14] sm:$0xf]
    %v1224 = vld [vmem:[%s1217 + $0x18] sm:$0xf]
    %v1225 = vld [vmem:[%s1217 + $0x1c] sm:$0xf]
    %v1226 = vld [vmem:[%s1217 + $0x20] sm:$0xf]
    %v1227 = vld [vmem:[%s1217 + $0x24] sm:$0xf]
    %v1228 = vld [vmem:[%s1217 + $0x28] sm:$0xf]
    %v1229 = vld [vmem:[%s1217 + $0x2c] sm:$0xf]
    %v1230 = vld [vmem:[%s1217 + $0x30] sm:$0xf]
    %v1231 = vld [vmem:[%s1217 + $0x34] sm:$0xf]
    %v1232 = vld [vmem:[%s1217 + $0x38] sm:$0xf]
    %v1233 = vld [vmem:[%s1217 + $0x3c] sm:$0xf]
    %v1250 = vunpack.c.l.b16 %v1218
    %v1251 = vunpack.c.l.b16 %v1219
    %v1252 = vunpack.c.l.b16 %v1220
    %v1253 = vunpack.c.l.b16 %v1221
    %v1254 = vunpack.c.l.b16 %v1222
    %v1255 = vunpack.c.l.b16 %v1223
    %v1256 = vunpack.c.l.b16 %v1224
    %v1257 = vunpack.c.l.b16 %v1225
    %v1258 = vunpack.c.l.b16 %v1226
    %v1259 = vunpack.c.l.b16 %v1227
    %v1260 = vunpack.c.l.b16 %v1228
    %v1261 = vunpack.c.l.b16 %v1229
    %v1262 = vunpack.c.l.b16 %v1230
    %v1263 = vunpack.c.l.b16 %v1231
    %v1264 = vunpack.c.l.b16 %v1232
    %v1265 = vunpack.c.l.b16 %v1233
    %v1266 = vpack.c.b16 %v1251, %v1250
    %v1267 = vpack.c.b16 %v1253, %v1252
    %v1268 = vpack.c.b16 %v1255, %v1254
    %v1269 = vpack.c.b16 %v1257, %v1256
    %v1270 = vpack.c.b16 %v1259, %v1258
    %v1271 = vpack.c.b16 %v1261, %v1260
    %v1272 = vpack.c.b16 %v1263, %v1262
    %v1273 = vpack.c.b16 %v1265, %v1264
    %1282 = vmatpush.bf16.msra.mxu0 %v1273
    %1283 = vmatpush.bf16.msra.mxu0 %v1272
    %1284 = vmatpush.bf16.msra.mxu0 %v1271
    %1285 = vmatpush.bf16.msra.mxu0 %v1270
    %1286 = vmatpush.bf16.msra.mxu0 %v1269
    %1287 = vmatpush.bf16.msra.mxu0 %v1268
    %1288 = vmatpush.bf16.msra.mxu0 %v1267
    %1289 = vmatpush.bf16.msra.mxu0 %v1266
    %1290 = vmatmul.bf16.gmra.mxu0 %v1216
    %v1291 = vpop.f32.mrf.mxu0
    %v1292 = vadd.f32 0.0, %v1291
    %v1293 = vpop.f32.mrf.mxu0
    %v1294 = vadd.f32 0.0, %v1293
    %1295 = vdwg.mxu0
    %v1296 = vmul.f32 %v1292, %v1214
    %v1297 = vmul.f32 %v1294, %v1215
    %s1298 = scalar_lea.vmem [#allocation5], 72
    %1299 = vst [vmem:[%s1298] sm:$0xff] %v1296
    %1300 = vst [vmem:[%s1298 + $0xb8] sm:$0xff] %v1297
    %s1301 = sadd.s32 %s34, 10
    %p1302 = scmp.lt.s32.totalorder %s1301, 22
    %s1303 = scalar_select %p1302, %s1301, 22
    %s1304 = scalar_lea.vmem %s0, 160
    %v1305 = vld [vmem:[%s1304] sm:$0xff]
    %v1306 = vld [vmem:[%s1304 + $0x8] sm:$0xff]
    %s1307 = scalar_lea.vmem %s1, %s1303
    %v1308 = vld [vmem:[%s1307] sm:$0x1]
    %s1309 = scalar_lea.vmem %s2, %s1303
    %v1310 = vld [vmem:[%s1309] sm:$0x1]
    %1312 = vset.pattern.permute.xlu0 0
    %1313 = vperm.xlu0 %1312, %v1305
    %v1314 = vpop.permute.xlu0 %1313
    %1317 = vset.pattern.permute.xlu0 0
    %1318 = vperm.xlu0 %1317, %v1306
    %v1319 = vpop.permute.xlu0 %1318
    %v1321 = vperm.slane %v1308, 0
    %v1322 = vsub.f32 %v1314, %v1321
    %v1323 = vsub.f32 %v1319, %v1321
    %v1324 = vmul.f32 %v1322, %v1322
    %v1325 = vmul.f32 %v1323, %v1323
    %v1326 = vperm.slane %v1310, 0
    %v1327 = vmul.f32 %v1324, %v1326
    %v1328 = vmul.f32 %v1325, %v1326
    %v1329 = vmul.f32 %v1327, 1.442695
    %v1330 = vpow.pop %v1329
    %v1331 = vmul.f32 %v1328, 1.442695
    %v1332 = vpow.pop %v1331
    %v1333 = vmul.f32 %v1330, 1.442695
    %v1334 = vpow.pop %v1333
    %v1335 = vmul.f32 %v1332, 1.442695
    %v1336 = vpow.pop %v1335
    %1337 = vadd.xlane.f32.xlu0 %v1334
    %v1338 = vpop.xlane.xlu0 %1337
    %1339 = vadd.xlane.f32.xlu0 %v1336
    %v1340 = vpop.xlane.xlu0 %1339
    %v1341 = vrcp.pop %v1338
    %v1342 = vrcp.pop %v1340
    %v1343 = vpack.c.bf16 %v1336, %v1334
    %s1344 = scalar_lea.vmem [#allocation2], 640
    %v1345 = vld [vmem:[%s1344] sm:$0xf]
    %v1346 = vld [vmem:[%s1344 + $0x4] sm:$0xf]
    %v1347 = vld [vmem:[%s1344 + $0x8] sm:$0xf]
    %v1348 = vld [vmem:[%s1344 + $0xc] sm:$0xf]
    %v1349 = vld [vmem:[%s1344 + $0x10] sm:$0xf]
    %v1350 = vld [vmem:[%s1344 + $0x14] sm:$0xf]
    %v1351 = vld [vmem:[%s1344 + $0x18] sm:$0xf]
    %v1352 = vld [vmem:[%s1344 + $0x1c] sm:$0xf]
    %v1353 = vld [vmem:[%s1344 + $0x20] sm:$0xf]
    %v1354 = vld [vmem:[%s1344 + $0x24] sm:$0xf]
    %v1355 = vld [vmem:[%s1344 + $0x28] sm:$0xf]
    %v1356 = vld [vmem:[%s1344 + $0x2c] sm:$0xf]
    %v1357 = vld [vmem:[%s1344 + $0x30] sm:$0xf]
    %v1358 = vld [vmem:[%s1344 + $0x34] sm:$0xf]
    %v1359 = vld [vmem:[%s1344 + $0x38] sm:$0xf]
    %v1360 = vld [vmem:[%s1344 + $0x3c] sm:$0xf]
    %v1377 = vunpack.c.l.b16 %v1345
    %v1378 = vunpack.c.l.b16 %v1346
    %v1379 = vunpack.c.l.b16 %v1347
    %v1380 = vunpack.c.l.b16 %v1348
    %v1381 = vunpack.c.l.b16 %v1349
    %v1382 = vunpack.c.l.b16 %v1350
    %v1383 = vunpack.c.l.b16 %v1351
    %v1384 = vunpack.c.l.b16 %v1352
    %v1385 = vunpack.c.l.b16 %v1353
    %v1386 = vunpack.c.l.b16 %v1354
    %v1387 = vunpack.c.l.b16 %v1355
    %v1388 = vunpack.c.l.b16 %v1356
    %v1389 = vunpack.c.l.b16 %v1357
    %v1390 = vunpack.c.l.b16 %v1358
    %v1391 = vunpack.c.l.b16 %v1359
    %v1392 = vunpack.c.l.b16 %v1360
    %v1393 = vpack.c.b16 %v1378, %v1377
    %v1394 = vpack.c.b16 %v1380, %v1379
    %v1395 = vpack.c.b16 %v1382, %v1381
    %v1396 = vpack.c.b16 %v1384, %v1383
    %v1397 = vpack.c.b16 %v1386, %v1385
    %v1398 = vpack.c.b16 %v1388, %v1387
    %v1399 = vpack.c.b16 %v1390, %v1389
    %v1400 = vpack.c.b16 %v1392, %v1391
    %1409 = vmatpush.bf16.msra.mxu0 %v1400
    %1410 = vmatpush.bf16.msra.mxu0 %v1399
    %1411 = vmatpush.bf16.msra.mxu0 %v1398
    %1412 = vmatpush.bf16.msra.mxu0 %v1397
    %1413 = vmatpush.bf16.msra.mxu0 %v1396
    %1414 = vmatpush.bf16.msra.mxu0 %v1395
    %1415 = vmatpush.bf16.msra.mxu0 %v1394
    %1416 = vmatpush.bf16.msra.mxu0 %v1393
    %1417 = vmatmul.bf16.gmra.mxu0 %v1343
    %v1418 = vpop.f32.mrf.mxu0
    %v1419 = vadd.f32 0.0, %v1418
    %v1420 = vpop.f32.mrf.mxu0
    %v1421 = vadd.f32 0.0, %v1420
    %1422 = vdwg.mxu0
    %v1423 = vmul.f32 %v1419, %v1341
    %v1424 = vmul.f32 %v1421, %v1342
    %s1425 = scalar_lea.vmem [#allocation5], 80
    %1426 = vst [vmem:[%s1425] sm:$0xff] %v1423
    %1427 = vst [vmem:[%s1425 + $0xb8] sm:$0xff] %v1424
    %s1428 = sadd.s32 %s34, 11
    %p1429 = scmp.lt.s32.totalorder %s1428, 22
    %s1430 = scalar_select %p1429, %s1428, 22
    %s1431 = scalar_lea.vmem %s0, 176
    %v1432 = vld [vmem:[%s1431] sm:$0xff]
    %v1433 = vld [vmem:[%s1431 + $0x8] sm:$0xff]
    %s1434 = scalar_lea.vmem %s1, %s1430
    %v1435 = vld [vmem:[%s1434] sm:$0x1]
    %s1436 = scalar_lea.vmem %s2, %s1430
    %v1437 = vld [vmem:[%s1436] sm:$0x1]
    %1439 = vset.pattern.permute.xlu0 0
    %1440 = vperm.xlu0 %1439, %v1432
    %v1441 = vpop.permute.xlu0 %1440
    %1444 = vset.pattern.permute.xlu0 0
    %1445 = vperm.xlu0 %1444, %v1433
    %v1446 = vpop.permute.xlu0 %1445
    %v1448 = vperm.slane %v1435, 0
    %v1449 = vsub.f32 %v1441, %v1448
    %v1450 = vsub.f32 %v1446, %v1448
    %v1451 = vmul.f32 %v1449, %v1449
    %v1452 = vmul.f32 %v1450, %v1450
    %v1453 = vperm.slane %v1437, 0
    %v1454 = vmul.f32 %v1451, %v1453
    %v1455 = vmul.f32 %v1452, %v1453
    %v1456 = vmul.f32 %v1454, 1.442695
    %v1457 = vpow.pop %v1456
    %v1458 = vmul.f32 %v1455, 1.442695
    %v1459 = vpow.pop %v1458
    %v1460 = vmul.f32 %v1457, 1.442695
    %v1461 = vpow.pop %v1460
    %v1462 = vmul.f32 %v1459, 1.442695
    %v1463 = vpow.pop %v1462
    %1464 = vadd.xlane.f32.xlu0 %v1461
    %v1465 = vpop.xlane.xlu0 %1464
    %1466 = vadd.xlane.f32.xlu0 %v1463
    %v1467 = vpop.xlane.xlu0 %1466
    %v1468 = vrcp.pop %v1465
    %v1469 = vrcp.pop %v1467
    %v1470 = vpack.c.bf16 %v1463, %v1461
    %s1471 = scalar_lea.vmem [#allocation2], 704
    %v1472 = vld [vmem:[%s1471] sm:$0xf]
    %v1473 = vld [vmem:[%s1471 + $0x4] sm:$0xf]
    %v1474 = vld [vmem:[%s1471 + $0x8] sm:$0xf]
    %v1475 = vld [vmem:[%s1471 + $0xc] sm:$0xf]
    %v1476 = vld [vmem:[%s1471 + $0x10] sm:$0xf]
    %v1477 = vld [vmem:[%s1471 + $0x14] sm:$0xf]
    %v1478 = vld [vmem:[%s1471 + $0x18] sm:$0xf]
    %v1479 = vld [vmem:[%s1471 + $0x1c] sm:$0xf]
    %v1480 = vld [vmem:[%s1471 + $0x20] sm:$0xf]
    %v1481 = vld [vmem:[%s1471 + $0x24] sm:$0xf]
    %v1482 = vld [vmem:[%s1471 + $0x28] sm:$0xf]
    %v1483 = vld [vmem:[%s1471 + $0x2c] sm:$0xf]
    %v1484 = vld [vmem:[%s1471 + $0x30] sm:$0xf]
    %v1485 = vld [vmem:[%s1471 + $0x34] sm:$0xf]
    %v1486 = vld [vmem:[%s1471 + $0x38] sm:$0xf]
    %v1487 = vld [vmem:[%s1471 + $0x3c] sm:$0xf]
    %v1504 = vunpack.c.l.b16 %v1472
    %v1505 = vunpack.c.l.b16 %v1473
    %v1506 = vunpack.c.l.b16 %v1474
    %v1507 = vunpack.c.l.b16 %v1475
    %v1508 = vunpack.c.l.b16 %v1476
    %v1509 = vunpack.c.l.b16 %v1477
    %v1510 = vunpack.c.l.b16 %v1478
    %v1511 = vunpack.c.l.b16 %v1479
    %v1512 = vunpack.c.l.b16 %v1480
    %v1513 = vunpack.c.l.b16 %v1481
    %v1514 = vunpack.c.l.b16 %v1482
    %v1515 = vunpack.c.l.b16 %v1483
    %v1516 = vunpack.c.l.b16 %v1484
    %v1517 = vunpack.c.l.b16 %v1485
    %v1518 = vunpack.c.l.b16 %v1486
    %v1519 = vunpack.c.l.b16 %v1487
    %v1520 = vpack.c.b16 %v1505, %v1504
    %v1521 = vpack.c.b16 %v1507, %v1506
    %v1522 = vpack.c.b16 %v1509, %v1508
    %v1523 = vpack.c.b16 %v1511, %v1510
    %v1524 = vpack.c.b16 %v1513, %v1512
    %v1525 = vpack.c.b16 %v1515, %v1514
    %v1526 = vpack.c.b16 %v1517, %v1516
    %v1527 = vpack.c.b16 %v1519, %v1518
    %1536 = vmatpush.bf16.msra.mxu0 %v1527
    %1537 = vmatpush.bf16.msra.mxu0 %v1526
    %1538 = vmatpush.bf16.msra.mxu0 %v1525
    %1539 = vmatpush.bf16.msra.mxu0 %v1524
    %1540 = vmatpush.bf16.msra.mxu0 %v1523
    %1541 = vmatpush.bf16.msra.mxu0 %v1522
    %1542 = vmatpush.bf16.msra.mxu0 %v1521
    %1543 = vmatpush.bf16.msra.mxu0 %v1520
    %1544 = vmatmul.bf16.gmra.mxu0 %v1470
    %v1545 = vpop.f32.mrf.mxu0
    %v1546 = vadd.f32 0.0, %v1545
    %v1547 = vpop.f32.mrf.mxu0
    %v1548 = vadd.f32 0.0, %v1547
    %1549 = vdwg.mxu0
    %v1550 = vmul.f32 %v1546, %v1468
    %v1551 = vmul.f32 %v1548, %v1469
    %s1552 = scalar_lea.vmem [#allocation5], 88
    %1553 = vst [vmem:[%s1552] sm:$0xff] %v1550
    %1554 = vst [vmem:[%s1552 + $0xb8] sm:$0xff] %v1551
    %s1555 = sadd.s32 %s34, 12
    %p1556 = scmp.lt.s32.totalorder %s1555, 22
    %s1557 = scalar_select %p1556, %s1555, 22
    %s1558 = scalar_lea.vmem %s0, 192
    %v1559 = vld [vmem:[%s1558] sm:$0xff]
    %v1560 = vld [vmem:[%s1558 + $0x8] sm:$0xff]
    %s1561 = scalar_lea.vmem %s1, %s1557
    %v1562 = vld [vmem:[%s1561] sm:$0x1]
    %s1563 = scalar_lea.vmem %s2, %s1557
    %v1564 = vld [vmem:[%s1563] sm:$0x1]
    %1566 = vset.pattern.permute.xlu0 0
    %1567 = vperm.xlu0 %1566, %v1559
    %v1568 = vpop.permute.xlu0 %1567
    %1571 = vset.pattern.permute.xlu0 0
    %1572 = vperm.xlu0 %1571, %v1560
    %v1573 = vpop.permute.xlu0 %1572
    %v1575 = vperm.slane %v1562, 0
    %v1576 = vsub.f32 %v1568, %v1575
    %v1577 = vsub.f32 %v1573, %v1575
    %v1578 = vmul.f32 %v1576, %v1576
    %v1579 = vmul.f32 %v1577, %v1577
    %v1580 = vperm.slane %v1564, 0
    %v1581 = vmul.f32 %v1578, %v1580
    %v1582 = vmul.f32 %v1579, %v1580
    %v1583 = vmul.f32 %v1581, 1.442695
    %v1584 = vpow.pop %v1583
    %v1585 = vmul.f32 %v1582, 1.442695
    %v1586 = vpow.pop %v1585
    %v1587 = vmul.f32 %v1584, 1.442695
    %v1588 = vpow.pop %v1587
    %v1589 = vmul.f32 %v1586, 1.442695
    %v1590 = vpow.pop %v1589
    %1591 = vadd.xlane.f32.xlu0 %v1588
    %v1592 = vpop.xlane.xlu0 %1591
    %1593 = vadd.xlane.f32.xlu0 %v1590
    %v1594 = vpop.xlane.xlu0 %1593
    %v1595 = vrcp.pop %v1592
    %v1596 = vrcp.pop %v1594
    %v1597 = vpack.c.bf16 %v1590, %v1588
    %s1598 = scalar_lea.vmem [#allocation2], 768
    %v1599 = vld [vmem:[%s1598] sm:$0xf]
    %v1600 = vld [vmem:[%s1598 + $0x4] sm:$0xf]
    %v1601 = vld [vmem:[%s1598 + $0x8] sm:$0xf]
    %v1602 = vld [vmem:[%s1598 + $0xc] sm:$0xf]
    %v1603 = vld [vmem:[%s1598 + $0x10] sm:$0xf]
    %v1604 = vld [vmem:[%s1598 + $0x14] sm:$0xf]
    %v1605 = vld [vmem:[%s1598 + $0x18] sm:$0xf]
    %v1606 = vld [vmem:[%s1598 + $0x1c] sm:$0xf]
    %v1607 = vld [vmem:[%s1598 + $0x20] sm:$0xf]
    %v1608 = vld [vmem:[%s1598 + $0x24] sm:$0xf]
    %v1609 = vld [vmem:[%s1598 + $0x28] sm:$0xf]
    %v1610 = vld [vmem:[%s1598 + $0x2c] sm:$0xf]
    %v1611 = vld [vmem:[%s1598 + $0x30] sm:$0xf]
    %v1612 = vld [vmem:[%s1598 + $0x34] sm:$0xf]
    %v1613 = vld [vmem:[%s1598 + $0x38] sm:$0xf]
    %v1614 = vld [vmem:[%s1598 + $0x3c] sm:$0xf]
    %v1631 = vunpack.c.l.b16 %v1599
    %v1632 = vunpack.c.l.b16 %v1600
    %v1633 = vunpack.c.l.b16 %v1601
    %v1634 = vunpack.c.l.b16 %v1602
    %v1635 = vunpack.c.l.b16 %v1603
    %v1636 = vunpack.c.l.b16 %v1604
    %v1637 = vunpack.c.l.b16 %v1605
    %v1638 = vunpack.c.l.b16 %v1606
    %v1639 = vunpack.c.l.b16 %v1607
    %v1640 = vunpack.c.l.b16 %v1608
    %v1641 = vunpack.c.l.b16 %v1609
    %v1642 = vunpack.c.l.b16 %v1610
    %v1643 = vunpack.c.l.b16 %v1611
    %v1644 = vunpack.c.l.b16 %v1612
    %v1645 = vunpack.c.l.b16 %v1613
    %v1646 = vunpack.c.l.b16 %v1614
    %v1647 = vpack.c.b16 %v1632, %v1631
    %v1648 = vpack.c.b16 %v1634, %v1633
    %v1649 = vpack.c.b16 %v1636, %v1635
    %v1650 = vpack.c.b16 %v1638, %v1637
    %v1651 = vpack.c.b16 %v1640, %v1639
    %v1652 = vpack.c.b16 %v1642, %v1641
    %v1653 = vpack.c.b16 %v1644, %v1643
    %v1654 = vpack.c.b16 %v1646, %v1645
    %1663 = vmatpush.bf16.msra.mxu0 %v1654
    %1664 = vmatpush.bf16.msra.mxu0 %v1653
    %1665 = vmatpush.bf16.msra.mxu0 %v1652
    %1666 = vmatpush.bf16.msra.mxu0 %v1651
    %1667 = vmatpush.bf16.msra.mxu0 %v1650
    %1668 = vmatpush.bf16.msra.mxu0 %v1649
    %1669 = vmatpush.bf16.msra.mxu0 %v1648
    %1670 = vmatpush.bf16.msra.mxu0 %v1647
    %1671 = vmatmul.bf16.gmra.mxu0 %v1597
    %v1672 = vpop.f32.mrf.mxu0
    %v1673 = vadd.f32 0.0, %v1672
    %v1674 = vpop.f32.mrf.mxu0
    %v1675 = vadd.f32 0.0, %v1674
    %1676 = vdwg.mxu0
    %v1677 = vmul.f32 %v1673, %v1595
    %v1678 = vmul.f32 %v1675, %v1596
    %s1679 = scalar_lea.vmem [#allocation5], 96
    %1680 = vst [vmem:[%s1679] sm:$0xff] %v1677
    %1681 = vst [vmem:[%s1679 + $0xb8] sm:$0xff] %v1678
    %s1682 = sadd.s32 %s34, 13
    %p1683 = scmp.lt.s32.totalorder %s1682, 22
    %s1684 = scalar_select %p1683, %s1682, 22
    %s1685 = scalar_lea.vmem %s0, 208
    %v1686 = vld [vmem:[%s1685] sm:$0xff]
    %v1687 = vld [vmem:[%s1685 + $0x8] sm:$0xff]
    %s1688 = scalar_lea.vmem %s1, %s1684
    %v1689 = vld [vmem:[%s1688] sm:$0x1]
    %s1690 = scalar_lea.vmem %s2, %s1684
    %v1691 = vld [vmem:[%s1690] sm:$0x1]
    %1693 = vset.pattern.permute.xlu0 0
    %1694 = vperm.xlu0 %1693, %v1686
    %v1695 = vpop.permute.xlu0 %1694
    %1698 = vset.pattern.permute.xlu0 0
    %1699 = vperm.xlu0 %1698, %v1687
    %v1700 = vpop.permute.xlu0 %1699
    %v1702 = vperm.slane %v1689, 0
    %v1703 = vsub.f32 %v1695, %v1702
    %v1704 = vsub.f32 %v1700, %v1702
    %v1705 = vmul.f32 %v1703, %v1703
    %v1706 = vmul.f32 %v1704, %v1704
    %v1707 = vperm.slane %v1691, 0
    %v1708 = vmul.f32 %v1705, %v1707
    %v1709 = vmul.f32 %v1706, %v1707
    %v1710 = vmul.f32 %v1708, 1.442695
    %v1711 = vpow.pop %v1710
    %v1712 = vmul.f32 %v1709, 1.442695
    %v1713 = vpow.pop %v1712
    %v1714 = vmul.f32 %v1711, 1.442695
    %v1715 = vpow.pop %v1714
    %v1716 = vmul.f32 %v1713, 1.442695
    %v1717 = vpow.pop %v1716
    %1718 = vadd.xlane.f32.xlu0 %v1715
    %v1719 = vpop.xlane.xlu0 %1718
    %1720 = vadd.xlane.f32.xlu0 %v1717
    %v1721 = vpop.xlane.xlu0 %1720
    %v1722 = vrcp.pop %v1719
    %v1723 = vrcp.pop %v1721
    %v1724 = vpack.c.bf16 %v1717, %v1715
    %s1725 = scalar_lea.vmem [#allocation2], 832
    %v1726 = vld [vmem:[%s1725] sm:$0xf]
    %v1727 = vld [vmem:[%s1725 + $0x4] sm:$0xf]
    %v1728 = vld [vmem:[%s1725 + $0x8] sm:$0xf]
    %v1729 = vld [vmem:[%s1725 + $0xc] sm:$0xf]
    %v1730 = vld [vmem:[%s1725 + $0x10] sm:$0xf]
    %v1731 = vld [vmem:[%s1725 + $0x14] sm:$0xf]
    %v1732 = vld [vmem:[%s1725 + $0x18] sm:$0xf]
    %v1733 = vld [vmem:[%s1725 + $0x1c] sm:$0xf]
    %v1734 = vld [vmem:[%s1725 + $0x20] sm:$0xf]
    %v1735 = vld [vmem:[%s1725 + $0x24] sm:$0xf]
    %v1736 = vld [vmem:[%s1725 + $0x28] sm:$0xf]
    %v1737 = vld [vmem:[%s1725 + $0x2c] sm:$0xf]
    %v1738 = vld [vmem:[%s1725 + $0x30] sm:$0xf]
    %v1739 = vld [vmem:[%s1725 + $0x34] sm:$0xf]
    %v1740 = vld [vmem:[%s1725 + $0x38] sm:$0xf]
    %v1741 = vld [vmem:[%s1725 + $0x3c] sm:$0xf]
    %v1758 = vunpack.c.l.b16 %v1726
    %v1759 = vunpack.c.l.b16 %v1727
    %v1760 = vunpack.c.l.b16 %v1728
    %v1761 = vunpack.c.l.b16 %v1729
    %v1762 = vunpack.c.l.b16 %v1730
    %v1763 = vunpack.c.l.b16 %v1731
    %v1764 = vunpack.c.l.b16 %v1732
    %v1765 = vunpack.c.l.b16 %v1733
    %v1766 = vunpack.c.l.b16 %v1734
    %v1767 = vunpack.c.l.b16 %v1735
    %v1768 = vunpack.c.l.b16 %v1736
    %v1769 = vunpack.c.l.b16 %v1737
    %v1770 = vunpack.c.l.b16 %v1738
    %v1771 = vunpack.c.l.b16 %v1739
    %v1772 = vunpack.c.l.b16 %v1740
    %v1773 = vunpack.c.l.b16 %v1741
    %v1774 = vpack.c.b16 %v1759, %v1758
    %v1775 = vpack.c.b16 %v1761, %v1760
    %v1776 = vpack.c.b16 %v1763, %v1762
    %v1777 = vpack.c.b16 %v1765, %v1764
    %v1778 = vpack.c.b16 %v1767, %v1766
    %v1779 = vpack.c.b16 %v1769, %v1768
    %v1780 = vpack.c.b16 %v1771, %v1770
    %v1781 = vpack.c.b16 %v1773, %v1772
    %1790 = vmatpush.bf16.msra.mxu0 %v1781
    %1791 = vmatpush.bf16.msra.mxu0 %v1780
    %1792 = vmatpush.bf16.msra.mxu0 %v1779
    %1793 = vmatpush.bf16.msra.mxu0 %v1778
    %1794 = vmatpush.bf16.msra.mxu0 %v1777
    %1795 = vmatpush.bf16.msra.mxu0 %v1776
    %1796 = vmatpush.bf16.msra.mxu0 %v1775
    %1797 = vmatpush.bf16.msra.mxu0 %v1774
    %1798 = vmatmul.bf16.gmra.mxu0 %v1724
    %v1799 = vpop.f32.mrf.mxu0
    %v1800 = vadd.f32 0.0, %v1799
    %v1801 = vpop.f32.mrf.mxu0
    %v1802 = vadd.f32 0.0, %v1801
    %1803 = vdwg.mxu0
    %v1804 = vmul.f32 %v1800, %v1722
    %v1805 = vmul.f32 %v1802, %v1723
    %s1806 = scalar_lea.vmem [#allocation5], 104
    %1807 = vst [vmem:[%s1806] sm:$0xff] %v1804
    %1808 = vst [vmem:[%s1806 + $0xb8] sm:$0xff] %v1805
    %s1809 = sadd.s32 %s34, 14
    %p1810 = scmp.lt.s32.totalorder %s1809, 22
    %s1811 = scalar_select %p1810, %s1809, 22
    %s1812 = scalar_lea.vmem %s0, 224
    %v1813 = vld [vmem:[%s1812] sm:$0xff]
    %v1814 = vld [vmem:[%s1812 + $0x8] sm:$0xff]
    %s1815 = scalar_lea.vmem %s1, %s1811
    %v1816 = vld [vmem:[%s1815] sm:$0x1]
    %s1817 = scalar_lea.vmem %s2, %s1811
    %v1818 = vld [vmem:[%s1817] sm:$0x1]
    %1820 = vset.pattern.permute.xlu0 0
    %1821 = vperm.xlu0 %1820, %v1813
    %v1822 = vpop.permute.xlu0 %1821
    %1825 = vset.pattern.permute.xlu0 0
    %1826 = vperm.xlu0 %1825, %v1814
    %v1827 = vpop.permute.xlu0 %1826
    %v1829 = vperm.slane %v1816, 0
    %v1830 = vsub.f32 %v1822, %v1829
    %v1831 = vsub.f32 %v1827, %v1829
    %v1832 = vmul.f32 %v1830, %v1830
    %v1833 = vmul.f32 %v1831, %v1831
    %v1834 = vperm.slane %v1818, 0
    %v1835 = vmul.f32 %v1832, %v1834
    %v1836 = vmul.f32 %v1833, %v1834
    %v1837 = vmul.f32 %v1835, 1.442695
    %v1838 = vpow.pop %v1837
    %v1839 = vmul.f32 %v1836, 1.442695
    %v1840 = vpow.pop %v1839
    %v1841 = vmul.f32 %v1838, 1.442695
    %v1842 = vpow.pop %v1841
    %v1843 = vmul.f32 %v1840, 1.442695
    %v1844 = vpow.pop %v1843
    %1845 = vadd.xlane.f32.xlu0 %v1842
    %v1846 = vpop.xlane.xlu0 %1845
    %1847 = vadd.xlane.f32.xlu0 %v1844
    %v1848 = vpop.xlane.xlu0 %1847
    %v1849 = vrcp.pop %v1846
    %v1850 = vrcp.pop %v1848
    %v1851 = vpack.c.bf16 %v1844, %v1842
    %s1852 = scalar_lea.vmem [#allocation2], 896
    %v1853 = vld [vmem:[%s1852] sm:$0xf]
    %v1854 = vld [vmem:[%s1852 + $0x4] sm:$0xf]
    %v1855 = vld [vmem:[%s1852 + $0x8] sm:$0xf]
    %v1856 = vld [vmem:[%s1852 + $0xc] sm:$0xf]
    %v1857 = vld [vmem:[%s1852 + $0x10] sm:$0xf]
    %v1858 = vld [vmem:[%s1852 + $0x14] sm:$0xf]
    %v1859 = vld [vmem:[%s1852 + $0x18] sm:$0xf]
    %v1860 = vld [vmem:[%s1852 + $0x1c] sm:$0xf]
    %v1861 = vld [vmem:[%s1852 + $0x20] sm:$0xf]
    %v1862 = vld [vmem:[%s1852 + $0x24] sm:$0xf]
    %v1863 = vld [vmem:[%s1852 + $0x28] sm:$0xf]
    %v1864 = vld [vmem:[%s1852 + $0x2c] sm:$0xf]
    %v1865 = vld [vmem:[%s1852 + $0x30] sm:$0xf]
    %v1866 = vld [vmem:[%s1852 + $0x34] sm:$0xf]
    %v1867 = vld [vmem:[%s1852 + $0x38] sm:$0xf]
    %v1868 = vld [vmem:[%s1852 + $0x3c] sm:$0xf]
    %v1885 = vunpack.c.l.b16 %v1853
    %v1886 = vunpack.c.l.b16 %v1854
    %v1887 = vunpack.c.l.b16 %v1855
    %v1888 = vunpack.c.l.b16 %v1856
    %v1889 = vunpack.c.l.b16 %v1857
    %v1890 = vunpack.c.l.b16 %v1858
    %v1891 = vunpack.c.l.b16 %v1859
    %v1892 = vunpack.c.l.b16 %v1860
    %v1893 = vunpack.c.l.b16 %v1861
    %v1894 = vunpack.c.l.b16 %v1862
    %v1895 = vunpack.c.l.b16 %v1863
    %v1896 = vunpack.c.l.b16 %v1864
    %v1897 = vunpack.c.l.b16 %v1865
    %v1898 = vunpack.c.l.b16 %v1866
    %v1899 = vunpack.c.l.b16 %v1867
    %v1900 = vunpack.c.l.b16 %v1868
    %v1901 = vpack.c.b16 %v1886, %v1885
    %v1902 = vpack.c.b16 %v1888, %v1887
    %v1903 = vpack.c.b16 %v1890, %v1889
    %v1904 = vpack.c.b16 %v1892, %v1891
    %v1905 = vpack.c.b16 %v1894, %v1893
    %v1906 = vpack.c.b16 %v1896, %v1895
    %v1907 = vpack.c.b16 %v1898, %v1897
    %v1908 = vpack.c.b16 %v1900, %v1899
    %1917 = vmatpush.bf16.msra.mxu0 %v1908
    %1918 = vmatpush.bf16.msra.mxu0 %v1907
    %1919 = vmatpush.bf16.msra.mxu0 %v1906
    %1920 = vmatpush.bf16.msra.mxu0 %v1905
    %1921 = vmatpush.bf16.msra.mxu0 %v1904
    %1922 = vmatpush.bf16.msra.mxu0 %v1903
    %1923 = vmatpush.bf16.msra.mxu0 %v1902
    %1924 = vmatpush.bf16.msra.mxu0 %v1901
    %1925 = vmatmul.bf16.gmra.mxu0 %v1851
    %v1926 = vpop.f32.mrf.mxu0
    %v1927 = vadd.f32 0.0, %v1926
    %v1928 = vpop.f32.mrf.mxu0
    %v1929 = vadd.f32 0.0, %v1928
    %1930 = vdwg.mxu0
    %v1931 = vmul.f32 %v1927, %v1849
    %v1932 = vmul.f32 %v1929, %v1850
    %s1933 = scalar_lea.vmem [#allocation5], 112
    %1934 = vst [vmem:[%s1933] sm:$0xff] %v1931
    %1935 = vst [vmem:[%s1933 + $0xb8] sm:$0xff] %v1932
    %s1936 = sadd.s32 %s34, 15
    %p1937 = scmp.lt.s32.totalorder %s1936, 22
    %s1938 = scalar_select %p1937, %s1936, 22
    %s1939 = scalar_lea.vmem %s0, 240
    %v1940 = vld [vmem:[%s1939] sm:$0xff]
    %v1941 = vld [vmem:[%s1939 + $0x8] sm:$0xff]
    %s1942 = scalar_lea.vmem %s1, %s1938
    %v1943 = vld [vmem:[%s1942] sm:$0x1]
    %s1944 = scalar_lea.vmem %s2, %s1938
    %v1945 = vld [vmem:[%s1944] sm:$0x1]
    %1947 = vset.pattern.permute.xlu0 0
    %1948 = vperm.xlu0 %1947, %v1940
    %v1949 = vpop.permute.xlu0 %1948
    %1952 = vset.pattern.permute.xlu0 0
    %1953 = vperm.xlu0 %1952, %v1941
    %v1954 = vpop.permute.xlu0 %1953
    %v1956 = vperm.slane %v1943, 0
    %v1957 = vsub.f32 %v1949, %v1956
    %v1958 = vsub.f32 %v1954, %v1956
    %v1959 = vmul.f32 %v1957, %v1957
    %v1960 = vmul.f32 %v1958, %v1958
    %v1961 = vperm.slane %v1945, 0
    %v1962 = vmul.f32 %v1959, %v1961
    %v1963 = vmul.f32 %v1960, %v1961
    %v1964 = vmul.f32 %v1962, 1.442695
    %v1965 = vpow.pop %v1964
    %v1966 = vmul.f32 %v1963, 1.442695
    %v1967 = vpow.pop %v1966
    %v1968 = vmul.f32 %v1965, 1.442695
    %v1969 = vpow.pop %v1968
    %v1970 = vmul.f32 %v1967, 1.442695
    %v1971 = vpow.pop %v1970
    %1972 = vadd.xlane.f32.xlu0 %v1969
    %v1973 = vpop.xlane.xlu0 %1972
    %1974 = vadd.xlane.f32.xlu0 %v1971
    %v1975 = vpop.xlane.xlu0 %1974
    %v1976 = vrcp.pop %v1973
    %v1977 = vrcp.pop %v1975
    %v1978 = vpack.c.bf16 %v1971, %v1969
    %s1979 = scalar_lea.vmem [#allocation2], 960
    %v1980 = vld [vmem:[%s1979] sm:$0xf]
    %v1981 = vld [vmem:[%s1979 + $0x4] sm:$0xf]
    %v1982 = vld [vmem:[%s1979 + $0x8] sm:$0xf]
    %v1983 = vld [vmem:[%s1979 + $0xc] sm:$0xf]
    %v1984 = vld [vmem:[%s1979 + $0x10] sm:$0xf]
    %v1985 = vld [vmem:[%s1979 + $0x14] sm:$0xf]
    %v1986 = vld [vmem:[%s1979 + $0x18] sm:$0xf]
    %v1987 = vld [vmem:[%s1979 + $0x1c] sm:$0xf]
    %v1988 = vld [vmem:[%s1979 + $0x20] sm:$0xf]
    %v1989 = vld [vmem:[%s1979 + $0x24] sm:$0xf]
    %v1990 = vld [vmem:[%s1979 + $0x28] sm:$0xf]
    %v1991 = vld [vmem:[%s1979 + $0x2c] sm:$0xf]
    %v1992 = vld [vmem:[%s1979 + $0x30] sm:$0xf]
    %v1993 = vld [vmem:[%s1979 + $0x34] sm:$0xf]
    %v1994 = vld [vmem:[%s1979 + $0x38] sm:$0xf]
    %v1995 = vld [vmem:[%s1979 + $0x3c] sm:$0xf]
    %v2012 = vunpack.c.l.b16 %v1980
    %v2013 = vunpack.c.l.b16 %v1981
    %v2014 = vunpack.c.l.b16 %v1982
    %v2015 = vunpack.c.l.b16 %v1983
    %v2016 = vunpack.c.l.b16 %v1984
    %v2017 = vunpack.c.l.b16 %v1985
    %v2018 = vunpack.c.l.b16 %v1986
    %v2019 = vunpack.c.l.b16 %v1987
    %v2020 = vunpack.c.l.b16 %v1988
    %v2021 = vunpack.c.l.b16 %v1989
    %v2022 = vunpack.c.l.b16 %v1990
    %v2023 = vunpack.c.l.b16 %v1991
    %v2024 = vunpack.c.l.b16 %v1992
    %v2025 = vunpack.c.l.b16 %v1993
    %v2026 = vunpack.c.l.b16 %v1994
    %v2027 = vunpack.c.l.b16 %v1995
    %v2028 = vpack.c.b16 %v2013, %v2012
    %v2029 = vpack.c.b16 %v2015, %v2014
    %v2030 = vpack.c.b16 %v2017, %v2016
    %v2031 = vpack.c.b16 %v2019, %v2018
    %v2032 = vpack.c.b16 %v2021, %v2020
    %v2033 = vpack.c.b16 %v2023, %v2022
    %v2034 = vpack.c.b16 %v2025, %v2024
    %v2035 = vpack.c.b16 %v2027, %v2026
    %2044 = vmatpush.bf16.msra.mxu0 %v2035
    %2045 = vmatpush.bf16.msra.mxu0 %v2034
    %2046 = vmatpush.bf16.msra.mxu0 %v2033
    %2047 = vmatpush.bf16.msra.mxu0 %v2032
    %2048 = vmatpush.bf16.msra.mxu0 %v2031
    %2049 = vmatpush.bf16.msra.mxu0 %v2030
    %2050 = vmatpush.bf16.msra.mxu0 %v2029
    %2051 = vmatpush.bf16.msra.mxu0 %v2028
    %2052 = vmatmul.bf16.gmra.mxu0 %v1978
    %v2053 = vpop.f32.mrf.mxu0
    %v2054 = vadd.f32 0.0, %v2053
    %v2055 = vpop.f32.mrf.mxu0
    %v2056 = vadd.f32 0.0, %v2055
    %2057 = vdwg.mxu0
    %v2058 = vmul.f32 %v2054, %v1976
    %v2059 = vmul.f32 %v2056, %v1977
    %s2060 = scalar_lea.vmem [#allocation5], 120
    %2061 = vst [vmem:[%s2060] sm:$0xff] %v2058
    %2062 = vst [vmem:[%s2060 + $0xb8] sm:$0xff] %v2059
    %s2063 = sadd.s32 %s34, 16
    %p2064 = scmp.lt.s32.totalorder %s2063, 22
    %s2065 = scalar_select %p2064, %s2063, 22
    %s2066 = scalar_lea.vmem %s0, 256
    %v2067 = vld [vmem:[%s2066] sm:$0xff]
    %v2068 = vld [vmem:[%s2066 + $0x8] sm:$0xff]
    %s2069 = scalar_lea.vmem %s1, %s2065
    %v2070 = vld [vmem:[%s2069] sm:$0x1]
    %s2071 = scalar_lea.vmem %s2, %s2065
    %v2072 = vld [vmem:[%s2071] sm:$0x1]
    %2074 = vset.pattern.permute.xlu0 0
    %2075 = vperm.xlu0 %2074, %v2067
    %v2076 = vpop.permute.xlu0 %2075
    %2079 = vset.pattern.permute.xlu0 0
    %2080 = vperm.xlu0 %2079, %v2068
    %v2081 = vpop.permute.xlu0 %2080
    %v2083 = vperm.slane %v2070, 0
    %v2084 = vsub.f32 %v2076, %v2083
    %v2085 = vsub.f32 %v2081, %v2083
    %v2086 = vmul.f32 %v2084, %v2084
    %v2087 = vmul.f32 %v2085, %v2085
    %v2088 = vperm.slane %v2072, 0
    %v2089 = vmul.f32 %v2086, %v2088
    %v2090 = vmul.f32 %v2087, %v2088
    %v2091 = vmul.f32 %v2089, 1.442695
    %v2092 = vpow.pop %v2091
    %v2093 = vmul.f32 %v2090, 1.442695
    %v2094 = vpow.pop %v2093
    %v2095 = vmul.f32 %v2092, 1.442695
    %v2096 = vpow.pop %v2095
    %v2097 = vmul.f32 %v2094, 1.442695
    %v2098 = vpow.pop %v2097
    %2099 = vadd.xlane.f32.xlu0 %v2096
    %v2100 = vpop.xlane.xlu0 %2099
    %2101 = vadd.xlane.f32.xlu0 %v2098
    %v2102 = vpop.xlane.xlu0 %2101
    %v2103 = vrcp.pop %v2100
    %v2104 = vrcp.pop %v2102
    %v2105 = vpack.c.bf16 %v2098, %v2096
    %s2106 = scalar_lea.vmem [#allocation2], 1024
    %v2107 = vld [vmem:[%s2106] sm:$0xf]
    %v2108 = vld [vmem:[%s2106 + $0x4] sm:$0xf]
    %v2109 = vld [vmem:[%s2106 + $0x8] sm:$0xf]
    %v2110 = vld [vmem:[%s2106 + $0xc] sm:$0xf]
    %v2111 = vld [vmem:[%s2106 + $0x10] sm:$0xf]
    %v2112 = vld [vmem:[%s2106 + $0x14] sm:$0xf]
    %v2113 = vld [vmem:[%s2106 + $0x18] sm:$0xf]
    %v2114 = vld [vmem:[%s2106 + $0x1c] sm:$0xf]
    %v2115 = vld [vmem:[%s2106 + $0x20] sm:$0xf]
    %v2116 = vld [vmem:[%s2106 + $0x24] sm:$0xf]
    %v2117 = vld [vmem:[%s2106 + $0x28] sm:$0xf]
    %v2118 = vld [vmem:[%s2106 + $0x2c] sm:$0xf]
    %v2119 = vld [vmem:[%s2106 + $0x30] sm:$0xf]
    %v2120 = vld [vmem:[%s2106 + $0x34] sm:$0xf]
    %v2121 = vld [vmem:[%s2106 + $0x38] sm:$0xf]
    %v2122 = vld [vmem:[%s2106 + $0x3c] sm:$0xf]
    %v2139 = vunpack.c.l.b16 %v2107
    %v2140 = vunpack.c.l.b16 %v2108
    %v2141 = vunpack.c.l.b16 %v2109
    %v2142 = vunpack.c.l.b16 %v2110
    %v2143 = vunpack.c.l.b16 %v2111
    %v2144 = vunpack.c.l.b16 %v2112
    %v2145 = vunpack.c.l.b16 %v2113
    %v2146 = vunpack.c.l.b16 %v2114
    %v2147 = vunpack.c.l.b16 %v2115
    %v2148 = vunpack.c.l.b16 %v2116
    %v2149 = vunpack.c.l.b16 %v2117
    %v2150 = vunpack.c.l.b16 %v2118
    %v2151 = vunpack.c.l.b16 %v2119
    %v2152 = vunpack.c.l.b16 %v2120
    %v2153 = vunpack.c.l.b16 %v2121
    %v2154 = vunpack.c.l.b16 %v2122
    %v2155 = vpack.c.b16 %v2140, %v2139
    %v2156 = vpack.c.b16 %v2142, %v2141
    %v2157 = vpack.c.b16 %v2144, %v2143
    %v2158 = vpack.c.b16 %v2146, %v2145
    %v2159 = vpack.c.b16 %v2148, %v2147
    %v2160 = vpack.c.b16 %v2150, %v2149
    %v2161 = vpack.c.b16 %v2152, %v2151
    %v2162 = vpack.c.b16 %v2154, %v2153
    %2171 = vmatpush.bf16.msra.mxu0 %v2162
    %2172 = vmatpush.bf16.msra.mxu0 %v2161
    %2173 = vmatpush.bf16.msra.mxu0 %v2160
    %2174 = vmatpush.bf16.msra.mxu0 %v2159
    %2175 = vmatpush.bf16.msra.mxu0 %v2158
    %2176 = vmatpush.bf16.msra.mxu0 %v2157
    %2177 = vmatpush.bf16.msra.mxu0 %v2156
    %2178 = vmatpush.bf16.msra.mxu0 %v2155
    %2179 = vmatmul.bf16.gmra.mxu0 %v2105
    %v2180 = vpop.f32.mrf.mxu0
    %v2181 = vadd.f32 0.0, %v2180
    %v2182 = vpop.f32.mrf.mxu0
    %v2183 = vadd.f32 0.0, %v2182
    %2184 = vdwg.mxu0
    %v2185 = vmul.f32 %v2181, %v2103
    %v2186 = vmul.f32 %v2183, %v2104
    %s2187 = scalar_lea.vmem [#allocation5], 128
    %2188 = vst [vmem:[%s2187] sm:$0xff] %v2185
    %2189 = vst [vmem:[%s2187 + $0xb8] sm:$0xff] %v2186
    %s2190 = sadd.s32 %s34, 17
    %p2191 = scmp.lt.s32.totalorder %s2190, 22
    %s2192 = scalar_select %p2191, %s2190, 22
    %s2193 = scalar_lea.vmem %s0, 272
    %v2194 = vld [vmem:[%s2193] sm:$0xff]
    %v2195 = vld [vmem:[%s2193 + $0x8] sm:$0xff]
    %s2196 = scalar_lea.vmem %s1, %s2192
    %v2197 = vld [vmem:[%s2196] sm:$0x1]
    %s2198 = scalar_lea.vmem %s2, %s2192
    %v2199 = vld [vmem:[%s2198] sm:$0x1]
    %2201 = vset.pattern.permute.xlu0 0
    %2202 = vperm.xlu0 %2201, %v2194
    %v2203 = vpop.permute.xlu0 %2202
    %2206 = vset.pattern.permute.xlu0 0
    %2207 = vperm.xlu0 %2206, %v2195
    %v2208 = vpop.permute.xlu0 %2207
    %v2210 = vperm.slane %v2197, 0
    %v2211 = vsub.f32 %v2203, %v2210
    %v2212 = vsub.f32 %v2208, %v2210
    %v2213 = vmul.f32 %v2211, %v2211
    %v2214 = vmul.f32 %v2212, %v2212
    %v2215 = vperm.slane %v2199, 0
    %v2216 = vmul.f32 %v2213, %v2215
    %v2217 = vmul.f32 %v2214, %v2215
    %v2218 = vmul.f32 %v2216, 1.442695
    %v2219 = vpow.pop %v2218
    %v2220 = vmul.f32 %v2217, 1.442695
    %v2221 = vpow.pop %v2220
    %v2222 = vmul.f32 %v2219, 1.442695
    %v2223 = vpow.pop %v2222
    %v2224 = vmul.f32 %v2221, 1.442695
    %v2225 = vpow.pop %v2224
    %2226 = vadd.xlane.f32.xlu0 %v2223
    %v2227 = vpop.xlane.xlu0 %2226
    %2228 = vadd.xlane.f32.xlu0 %v2225
    %v2229 = vpop.xlane.xlu0 %2228
    %v2230 = vrcp.pop %v2227
    %v2231 = vrcp.pop %v2229
    %v2232 = vpack.c.bf16 %v2225, %v2223
    %s2233 = scalar_lea.vmem [#allocation2], 1088
    %v2234 = vld [vmem:[%s2233] sm:$0xf]
    %v2235 = vld [vmem:[%s2233 + $0x4] sm:$0xf]
    %v2236 = vld [vmem:[%s2233 + $0x8] sm:$0xf]
    %v2237 = vld [vmem:[%s2233 + $0xc] sm:$0xf]
    %v2238 = vld [vmem:[%s2233 + $0x10] sm:$0xf]
    %v2239 = vld [vmem:[%s2233 + $0x14] sm:$0xf]
    %v2240 = vld [vmem:[%s2233 + $0x18] sm:$0xf]
    %v2241 = vld [vmem:[%s2233 + $0x1c] sm:$0xf]
    %v2242 = vld [vmem:[%s2233 + $0x20] sm:$0xf]
    %v2243 = vld [vmem:[%s2233 + $0x24] sm:$0xf]
    %v2244 = vld [vmem:[%s2233 + $0x28] sm:$0xf]
    %v2245 = vld [vmem:[%s2233 + $0x2c] sm:$0xf]
    %v2246 = vld [vmem:[%s2233 + $0x30] sm:$0xf]
    %v2247 = vld [vmem:[%s2233 + $0x34] sm:$0xf]
    %v2248 = vld [vmem:[%s2233 + $0x38] sm:$0xf]
    %v2249 = vld [vmem:[%s2233 + $0x3c] sm:$0xf]
    %v2266 = vunpack.c.l.b16 %v2234
    %v2267 = vunpack.c.l.b16 %v2235
    %v2268 = vunpack.c.l.b16 %v2236
    %v2269 = vunpack.c.l.b16 %v2237
    %v2270 = vunpack.c.l.b16 %v2238
    %v2271 = vunpack.c.l.b16 %v2239
    %v2272 = vunpack.c.l.b16 %v2240
    %v2273 = vunpack.c.l.b16 %v2241
    %v2274 = vunpack.c.l.b16 %v2242
    %v2275 = vunpack.c.l.b16 %v2243
    %v2276 = vunpack.c.l.b16 %v2244
    %v2277 = vunpack.c.l.b16 %v2245
    %v2278 = vunpack.c.l.b16 %v2246
    %v2279 = vunpack.c.l.b16 %v2247
    %v2280 = vunpack.c.l.b16 %v2248
    %v2281 = vunpack.c.l.b16 %v2249
    %v2282 = vpack.c.b16 %v2267, %v2266
    %v2283 = vpack.c.b16 %v2269, %v2268
    %v2284 = vpack.c.b16 %v2271, %v2270
    %v2285 = vpack.c.b16 %v2273, %v2272
    %v2286 = vpack.c.b16 %v2275, %v2274
    %v2287 = vpack.c.b16 %v2277, %v2276
    %v2288 = vpack.c.b16 %v2279, %v2278
    %v2289 = vpack.c.b16 %v2281, %v2280
    %2298 = vmatpush.bf16.msra.mxu0 %v2289
    %2299 = vmatpush.bf16.msra.mxu0 %v2288
    %2300 = vmatpush.bf16.msra.mxu0 %v2287
    %2301 = vmatpush.bf16.msra.mxu0 %v2286
    %2302 = vmatpush.bf16.msra.mxu0 %v2285
    %2303 = vmatpush.bf16.msra.mxu0 %v2284
    %2304 = vmatpush.bf16.msra.mxu0 %v2283
    %2305 = vmatpush.bf16.msra.mxu0 %v2282
    %2306 = vmatmul.bf16.gmra.mxu0 %v2232
    %v2307 = vpop.f32.mrf.mxu0
    %v2308 = vadd.f32 0.0, %v2307
    %v2309 = vpop.f32.mrf.mxu0
    %v2310 = vadd.f32 0.0, %v2309
    %2311 = vdwg.mxu0
    %v2312 = vmul.f32 %v2308, %v2230
    %v2313 = vmul.f32 %v2310, %v2231
    %s2314 = scalar_lea.vmem [#allocation5], 136
    %2315 = vst [vmem:[%s2314] sm:$0xff] %v2312
    %2316 = vst [vmem:[%s2314 + $0xb8] sm:$0xff] %v2313
    %s2317 = sadd.s32 %s34, 18
    %p2318 = scmp.lt.s32.totalorder %s2317, 22
    %s2319 = scalar_select %p2318, %s2317, 22
    %s2320 = scalar_lea.vmem %s0, 288
    %v2321 = vld [vmem:[%s2320] sm:$0xff]
    %v2322 = vld [vmem:[%s2320 + $0x8] sm:$0xff]
    %s2323 = scalar_lea.vmem %s1, %s2319
    %v2324 = vld [vmem:[%s2323] sm:$0x1]
    %s2325 = scalar_lea.vmem %s2, %s2319
    %v2326 = vld [vmem:[%s2325] sm:$0x1]
    %2328 = vset.pattern.permute.xlu0 0
    %2329 = vperm.xlu0 %2328, %v2321
    %v2330 = vpop.permute.xlu0 %2329
    %2333 = vset.pattern.permute.xlu0 0
    %2334 = vperm.xlu0 %2333, %v2322
    %v2335 = vpop.permute.xlu0 %2334
    %v2337 = vperm.slane %v2324, 0
    %v2338 = vsub.f32 %v2330, %v2337
    %v2339 = vsub.f32 %v2335, %v2337
    %v2340 = vmul.f32 %v2338, %v2338
    %v2341 = vmul.f32 %v2339, %v2339
    %v2342 = vperm.slane %v2326, 0
    %v2343 = vmul.f32 %v2340, %v2342
    %v2344 = vmul.f32 %v2341, %v2342
    %v2345 = vmul.f32 %v2343, 1.442695
    %v2346 = vpow.pop %v2345
    %v2347 = vmul.f32 %v2344, 1.442695
    %v2348 = vpow.pop %v2347
    %v2349 = vmul.f32 %v2346, 1.442695
    %v2350 = vpow.pop %v2349
    %v2351 = vmul.f32 %v2348, 1.442695
    %v2352 = vpow.pop %v2351
    %2353 = vadd.xlane.f32.xlu0 %v2350
    %v2354 = vpop.xlane.xlu0 %2353
    %2355 = vadd.xlane.f32.xlu0 %v2352
    %v2356 = vpop.xlane.xlu0 %2355
    %v2357 = vrcp.pop %v2354
    %v2358 = vrcp.pop %v2356
    %v2359 = vpack.c.bf16 %v2352, %v2350
    %s2360 = scalar_lea.vmem [#allocation2], 1152
    %v2361 = vld [vmem:[%s2360] sm:$0xf]
    %v2362 = vld [vmem:[%s2360 + $0x4] sm:$0xf]
    %v2363 = vld [vmem:[%s2360 + $0x8] sm:$0xf]
    %v2364 = vld [vmem:[%s2360 + $0xc] sm:$0xf]
    %v2365 = vld [vmem:[%s2360 + $0x10] sm:$0xf]
    %v2366 = vld [vmem:[%s2360 + $0x14] sm:$0xf]
    %v2367 = vld [vmem:[%s2360 + $0x18] sm:$0xf]
    %v2368 = vld [vmem:[%s2360 + $0x1c] sm:$0xf]
    %v2369 = vld [vmem:[%s2360 + $0x20] sm:$0xf]
    %v2370 = vld [vmem:[%s2360 + $0x24] sm:$0xf]
    %v2371 = vld [vmem:[%s2360 + $0x28] sm:$0xf]
    %v2372 = vld [vmem:[%s2360 + $0x2c] sm:$0xf]
    %v2373 = vld [vmem:[%s2360 + $0x30] sm:$0xf]
    %v2374 = vld [vmem:[%s2360 + $0x34] sm:$0xf]
    %v2375 = vld [vmem:[%s2360 + $0x38] sm:$0xf]
    %v2376 = vld [vmem:[%s2360 + $0x3c] sm:$0xf]
    %v2393 = vunpack.c.l.b16 %v2361
    %v2394 = vunpack.c.l.b16 %v2362
    %v2395 = vunpack.c.l.b16 %v2363
    %v2396 = vunpack.c.l.b16 %v2364
    %v2397 = vunpack.c.l.b16 %v2365
    %v2398 = vunpack.c.l.b16 %v2366
    %v2399 = vunpack.c.l.b16 %v2367
    %v2400 = vunpack.c.l.b16 %v2368
    %v2401 = vunpack.c.l.b16 %v2369
    %v2402 = vunpack.c.l.b16 %v2370
    %v2403 = vunpack.c.l.b16 %v2371
    %v2404 = vunpack.c.l.b16 %v2372
    %v2405 = vunpack.c.l.b16 %v2373
    %v2406 = vunpack.c.l.b16 %v2374
    %v2407 = vunpack.c.l.b16 %v2375
    %v2408 = vunpack.c.l.b16 %v2376
    %v2409 = vpack.c.b16 %v2394, %v2393
    %v2410 = vpack.c.b16 %v2396, %v2395
    %v2411 = vpack.c.b16 %v2398, %v2397
    %v2412 = vpack.c.b16 %v2400, %v2399
    %v2413 = vpack.c.b16 %v2402, %v2401
    %v2414 = vpack.c.b16 %v2404, %v2403
    %v2415 = vpack.c.b16 %v2406, %v2405
    %v2416 = vpack.c.b16 %v2408, %v2407
    %2425 = vmatpush.bf16.msra.mxu0 %v2416
    %2426 = vmatpush.bf16.msra.mxu0 %v2415
    %2427 = vmatpush.bf16.msra.mxu0 %v2414
    %2428 = vmatpush.bf16.msra.mxu0 %v2413
    %2429 = vmatpush.bf16.msra.mxu0 %v2412
    %2430 = vmatpush.bf16.msra.mxu0 %v2411
    %2431 = vmatpush.bf16.msra.mxu0 %v2410
    %2432 = vmatpush.bf16.msra.mxu0 %v2409
    %2433 = vmatmul.bf16.gmra.mxu0 %v2359
    %v2434 = vpop.f32.mrf.mxu0
    %v2435 = vadd.f32 0.0, %v2434
    %v2436 = vpop.f32.mrf.mxu0
    %v2437 = vadd.f32 0.0, %v2436
    %2438 = vdwg.mxu0
    %v2439 = vmul.f32 %v2435, %v2357
    %v2440 = vmul.f32 %v2437, %v2358
    %s2441 = scalar_lea.vmem [#allocation5], 144
    %2442 = vst [vmem:[%s2441] sm:$0xff] %v2439
    %2443 = vst [vmem:[%s2441 + $0xb8] sm:$0xff] %v2440
    %s2444 = sadd.s32 %s34, 19
    %p2445 = scmp.lt.s32.totalorder %s2444, 22
    %s2446 = scalar_select %p2445, %s2444, 22
    %s2447 = scalar_lea.vmem %s0, 304
    %v2448 = vld [vmem:[%s2447] sm:$0xff]
    %v2449 = vld [vmem:[%s2447 + $0x8] sm:$0xff]
    %s2450 = scalar_lea.vmem %s1, %s2446
    %v2451 = vld [vmem:[%s2450] sm:$0x1]
    %s2452 = scalar_lea.vmem %s2, %s2446
    %v2453 = vld [vmem:[%s2452] sm:$0x1]
    %2455 = vset.pattern.permute.xlu0 0
    %2456 = vperm.xlu0 %2455, %v2448
    %v2457 = vpop.permute.xlu0 %2456
    %2460 = vset.pattern.permute.xlu0 0
    %2461 = vperm.xlu0 %2460, %v2449
    %v2462 = vpop.permute.xlu0 %2461
    %v2464 = vperm.slane %v2451, 0
    %v2465 = vsub.f32 %v2457, %v2464
    %v2466 = vsub.f32 %v2462, %v2464
    %v2467 = vmul.f32 %v2465, %v2465
    %v2468 = vmul.f32 %v2466, %v2466
    %v2469 = vperm.slane %v2453, 0
    %v2470 = vmul.f32 %v2467, %v2469
    %v2471 = vmul.f32 %v2468, %v2469
    %v2472 = vmul.f32 %v2470, 1.442695
    %v2473 = vpow.pop %v2472
    %v2474 = vmul.f32 %v2471, 1.442695
    %v2475 = vpow.pop %v2474
    %v2476 = vmul.f32 %v2473, 1.442695
    %v2477 = vpow.pop %v2476
    %v2478 = vmul.f32 %v2475, 1.442695
    %v2479 = vpow.pop %v2478
    %2480 = vadd.xlane.f32.xlu0 %v2477
    %v2481 = vpop.xlane.xlu0 %2480
    %2482 = vadd.xlane.f32.xlu0 %v2479
    %v2483 = vpop.xlane.xlu0 %2482
    %v2484 = vrcp.pop %v2481
    %v2485 = vrcp.pop %v2483
    %v2486 = vpack.c.bf16 %v2479, %v2477
    %s2487 = scalar_lea.vmem [#allocation2], 1216
    %v2488 = vld [vmem:[%s2487] sm:$0xf]
    %v2489 = vld [vmem:[%s2487 + $0x4] sm:$0xf]
    %v2490 = vld [vmem:[%s2487 + $0x8] sm:$0xf]
    %v2491 = vld [vmem:[%s2487 + $0xc] sm:$0xf]
    %v2492 = vld [vmem:[%s2487 + $0x10] sm:$0xf]
    %v2493 = vld [vmem:[%s2487 + $0x14] sm:$0xf]
    %v2494 = vld [vmem:[%s2487 + $0x18] sm:$0xf]
    %v2495 = vld [vmem:[%s2487 + $0x1c] sm:$0xf]
    %v2496 = vld [vmem:[%s2487 + $0x20] sm:$0xf]
    %v2497 = vld [vmem:[%s2487 + $0x24] sm:$0xf]
    %v2498 = vld [vmem:[%s2487 + $0x28] sm:$0xf]
    %v2499 = vld [vmem:[%s2487 + $0x2c] sm:$0xf]
    %v2500 = vld [vmem:[%s2487 + $0x30] sm:$0xf]
    %v2501 = vld [vmem:[%s2487 + $0x34] sm:$0xf]
    %v2502 = vld [vmem:[%s2487 + $0x38] sm:$0xf]
    %v2503 = vld [vmem:[%s2487 + $0x3c] sm:$0xf]
    %v2520 = vunpack.c.l.b16 %v2488
    %v2521 = vunpack.c.l.b16 %v2489
    %v2522 = vunpack.c.l.b16 %v2490
    %v2523 = vunpack.c.l.b16 %v2491
    %v2524 = vunpack.c.l.b16 %v2492
    %v2525 = vunpack.c.l.b16 %v2493
    %v2526 = vunpack.c.l.b16 %v2494
    %v2527 = vunpack.c.l.b16 %v2495
    %v2528 = vunpack.c.l.b16 %v2496
    %v2529 = vunpack.c.l.b16 %v2497
    %v2530 = vunpack.c.l.b16 %v2498
    %v2531 = vunpack.c.l.b16 %v2499
    %v2532 = vunpack.c.l.b16 %v2500
    %v2533 = vunpack.c.l.b16 %v2501
    %v2534 = vunpack.c.l.b16 %v2502
    %v2535 = vunpack.c.l.b16 %v2503
    %v2536 = vpack.c.b16 %v2521, %v2520
    %v2537 = vpack.c.b16 %v2523, %v2522
    %v2538 = vpack.c.b16 %v2525, %v2524
    %v2539 = vpack.c.b16 %v2527, %v2526
    %v2540 = vpack.c.b16 %v2529, %v2528
    %v2541 = vpack.c.b16 %v2531, %v2530
    %v2542 = vpack.c.b16 %v2533, %v2532
    %v2543 = vpack.c.b16 %v2535, %v2534
    %2552 = vmatpush.bf16.msra.mxu0 %v2543
    %2553 = vmatpush.bf16.msra.mxu0 %v2542
    %2554 = vmatpush.bf16.msra.mxu0 %v2541
    %2555 = vmatpush.bf16.msra.mxu0 %v2540
    %2556 = vmatpush.bf16.msra.mxu0 %v2539
    %2557 = vmatpush.bf16.msra.mxu0 %v2538
    %2558 = vmatpush.bf16.msra.mxu0 %v2537
    %2559 = vmatpush.bf16.msra.mxu0 %v2536
    %2560 = vmatmul.bf16.gmra.mxu0 %v2486
    %v2561 = vpop.f32.mrf.mxu0
    %v2562 = vadd.f32 0.0, %v2561
    %v2563 = vpop.f32.mrf.mxu0
    %v2564 = vadd.f32 0.0, %v2563
    %2565 = vdwg.mxu0
    %v2566 = vmul.f32 %v2562, %v2484
    %v2567 = vmul.f32 %v2564, %v2485
    %s2568 = scalar_lea.vmem [#allocation5], 152
    %2569 = vst [vmem:[%s2568] sm:$0xff] %v2566
    %2570 = vst [vmem:[%s2568 + $0xb8] sm:$0xff] %v2567
    %s2571 = sadd.s32 %s34, 20
    %p2572 = scmp.lt.s32.totalorder %s2571, 22
    %s2573 = scalar_select %p2572, %s2571, 22
    %s2574 = scalar_lea.vmem %s0, 320
    %v2575 = vld [vmem:[%s2574] sm:$0xff]
    %v2576 = vld [vmem:[%s2574 + $0x8] sm:$0xff]
    %s2577 = scalar_lea.vmem %s1, %s2573
    %v2578 = vld [vmem:[%s2577] sm:$0x1]
    %s2579 = scalar_lea.vmem %s2, %s2573
    %v2580 = vld [vmem:[%s2579] sm:$0x1]
    %2582 = vset.pattern.permute.xlu0 0
    %2583 = vperm.xlu0 %2582, %v2575
    %v2584 = vpop.permute.xlu0 %2583
    %2587 = vset.pattern.permute.xlu0 0
    %2588 = vperm.xlu0 %2587, %v2576
    %v2589 = vpop.permute.xlu0 %2588
    %v2591 = vperm.slane %v2578, 0
    %v2592 = vsub.f32 %v2584, %v2591
    %v2593 = vsub.f32 %v2589, %v2591
    %v2594 = vmul.f32 %v2592, %v2592
    %v2595 = vmul.f32 %v2593, %v2593
    %v2596 = vperm.slane %v2580, 0
    %v2597 = vmul.f32 %v2594, %v2596
    %v2598 = vmul.f32 %v2595, %v2596
    %v2599 = vmul.f32 %v2597, 1.442695
    %v2600 = vpow.pop %v2599
    %v2601 = vmul.f32 %v2598, 1.442695
    %v2602 = vpow.pop %v2601
    %v2603 = vmul.f32 %v2600, 1.442695
    %v2604 = vpow.pop %v2603
    %v2605 = vmul.f32 %v2602, 1.442695
    %v2606 = vpow.pop %v2605
    %2607 = vadd.xlane.f32.xlu0 %v2604
    %v2608 = vpop.xlane.xlu0 %2607
    %2609 = vadd.xlane.f32.xlu0 %v2606
    %v2610 = vpop.xlane.xlu0 %2609
    %v2611 = vrcp.pop %v2608
    %v2612 = vrcp.pop %v2610
    %v2613 = vpack.c.bf16 %v2606, %v2604
    %s2614 = scalar_lea.vmem [#allocation2], 1280
    %v2615 = vld [vmem:[%s2614] sm:$0xf]
    %v2616 = vld [vmem:[%s2614 + $0x4] sm:$0xf]
    %v2617 = vld [vmem:[%s2614 + $0x8] sm:$0xf]
    %v2618 = vld [vmem:[%s2614 + $0xc] sm:$0xf]
    %v2619 = vld [vmem:[%s2614 + $0x10] sm:$0xf]
    %v2620 = vld [vmem:[%s2614 + $0x14] sm:$0xf]
    %v2621 = vld [vmem:[%s2614 + $0x18] sm:$0xf]
    %v2622 = vld [vmem:[%s2614 + $0x1c] sm:$0xf]
    %v2623 = vld [vmem:[%s2614 + $0x20] sm:$0xf]
    %v2624 = vld [vmem:[%s2614 + $0x24] sm:$0xf]
    %v2625 = vld [vmem:[%s2614 + $0x28] sm:$0xf]
    %v2626 = vld [vmem:[%s2614 + $0x2c] sm:$0xf]
    %v2627 = vld [vmem:[%s2614 + $0x30] sm:$0xf]
    %v2628 = vld [vmem:[%s2614 + $0x34] sm:$0xf]
    %v2629 = vld [vmem:[%s2614 + $0x38] sm:$0xf]
    %v2630 = vld [vmem:[%s2614 + $0x3c] sm:$0xf]
    %v2647 = vunpack.c.l.b16 %v2615
    %v2648 = vunpack.c.l.b16 %v2616
    %v2649 = vunpack.c.l.b16 %v2617
    %v2650 = vunpack.c.l.b16 %v2618
    %v2651 = vunpack.c.l.b16 %v2619
    %v2652 = vunpack.c.l.b16 %v2620
    %v2653 = vunpack.c.l.b16 %v2621
    %v2654 = vunpack.c.l.b16 %v2622
    %v2655 = vunpack.c.l.b16 %v2623
    %v2656 = vunpack.c.l.b16 %v2624
    %v2657 = vunpack.c.l.b16 %v2625
    %v2658 = vunpack.c.l.b16 %v2626
    %v2659 = vunpack.c.l.b16 %v2627
    %v2660 = vunpack.c.l.b16 %v2628
    %v2661 = vunpack.c.l.b16 %v2629
    %v2662 = vunpack.c.l.b16 %v2630
    %v2663 = vpack.c.b16 %v2648, %v2647
    %v2664 = vpack.c.b16 %v2650, %v2649
    %v2665 = vpack.c.b16 %v2652, %v2651
    %v2666 = vpack.c.b16 %v2654, %v2653
    %v2667 = vpack.c.b16 %v2656, %v2655
    %v2668 = vpack.c.b16 %v2658, %v2657
    %v2669 = vpack.c.b16 %v2660, %v2659
    %v2670 = vpack.c.b16 %v2662, %v2661
    %2679 = vmatpush.bf16.msra.mxu0 %v2670
    %2680 = vmatpush.bf16.msra.mxu0 %v2669
    %2681 = vmatpush.bf16.msra.mxu0 %v2668
    %2682 = vmatpush.bf16.msra.mxu0 %v2667
    %2683 = vmatpush.bf16.msra.mxu0 %v2666
    %2684 = vmatpush.bf16.msra.mxu0 %v2665
    %2685 = vmatpush.bf16.msra.mxu0 %v2664
    %2686 = vmatpush.bf16.msra.mxu0 %v2663
    %2687 = vmatmul.bf16.gmra.mxu0 %v2613
    %v2688 = vpop.f32.mrf.mxu0
    %v2689 = vadd.f32 0.0, %v2688
    %v2690 = vpop.f32.mrf.mxu0
    %v2691 = vadd.f32 0.0, %v2690
    %2692 = vdwg.mxu0
    %v2693 = vmul.f32 %v2689, %v2611
    %v2694 = vmul.f32 %v2691, %v2612
    %s2695 = scalar_lea.vmem [#allocation5], 160
    %2696 = vst [vmem:[%s2695] sm:$0xff] %v2693
    %2697 = vst [vmem:[%s2695 + $0xb8] sm:$0xff] %v2694
    %s2698 = sadd.s32 %s34, 21
    %p2699 = scmp.lt.s32.totalorder %s2698, 22
    %s2700 = scalar_select %p2699, %s2698, 22
    %s2701 = scalar_lea.vmem %s0, 336
    %v2702 = vld [vmem:[%s2701] sm:$0xff]
    %v2703 = vld [vmem:[%s2701 + $0x8] sm:$0xff]
    %s2704 = scalar_lea.vmem %s1, %s2700
    %v2705 = vld [vmem:[%s2704] sm:$0x1]
    %s2706 = scalar_lea.vmem %s2, %s2700
    %v2707 = vld [vmem:[%s2706] sm:$0x1]
    %2709 = vset.pattern.permute.xlu0 0
    %2710 = vperm.xlu0 %2709, %v2702
    %v2711 = vpop.permute.xlu0 %2710
    %2714 = vset.pattern.permute.xlu0 0
    %2715 = vperm.xlu0 %2714, %v2703
    %v2716 = vpop.permute.xlu0 %2715
    %v2718 = vperm.slane %v2705, 0
    %v2719 = vsub.f32 %v2711, %v2718
    %v2720 = vsub.f32 %v2716, %v2718
    %v2721 = vmul.f32 %v2719, %v2719
    %v2722 = vmul.f32 %v2720, %v2720
    %v2723 = vperm.slane %v2707, 0
    %v2724 = vmul.f32 %v2721, %v2723
    %v2725 = vmul.f32 %v2722, %v2723
    %v2726 = vmul.f32 %v2724, 1.442695
    %v2727 = vpow.pop %v2726
    %v2728 = vmul.f32 %v2725, 1.442695
    %v2729 = vpow.pop %v2728
    %v2730 = vmul.f32 %v2727, 1.442695
    %v2731 = vpow.pop %v2730
    %v2732 = vmul.f32 %v2729, 1.442695
    %v2733 = vpow.pop %v2732
    %2734 = vadd.xlane.f32.xlu0 %v2731
    %v2735 = vpop.xlane.xlu0 %2734
    %2736 = vadd.xlane.f32.xlu0 %v2733
    %v2737 = vpop.xlane.xlu0 %2736
    %v2738 = vrcp.pop %v2735
    %v2739 = vrcp.pop %v2737
    %v2740 = vpack.c.bf16 %v2733, %v2731
    %s2741 = scalar_lea.vmem [#allocation2], 1344
    %v2742 = vld [vmem:[%s2741] sm:$0xf]
    %v2743 = vld [vmem:[%s2741 + $0x4] sm:$0xf]
    %v2744 = vld [vmem:[%s2741 + $0x8] sm:$0xf]
    %v2745 = vld [vmem:[%s2741 + $0xc] sm:$0xf]
    %v2746 = vld [vmem:[%s2741 + $0x10] sm:$0xf]
    %v2747 = vld [vmem:[%s2741 + $0x14] sm:$0xf]
    %v2748 = vld [vmem:[%s2741 + $0x18] sm:$0xf]
    %v2749 = vld [vmem:[%s2741 + $0x1c] sm:$0xf]
    %v2750 = vld [vmem:[%s2741 + $0x20] sm:$0xf]
    %v2751 = vld [vmem:[%s2741 + $0x24] sm:$0xf]
    %v2752 = vld [vmem:[%s2741 + $0x28] sm:$0xf]
    %v2753 = vld [vmem:[%s2741 + $0x2c] sm:$0xf]
    %v2754 = vld [vmem:[%s2741 + $0x30] sm:$0xf]
    %v2755 = vld [vmem:[%s2741 + $0x34] sm:$0xf]
    %v2756 = vld [vmem:[%s2741 + $0x38] sm:$0xf]
    %v2757 = vld [vmem:[%s2741 + $0x3c] sm:$0xf]
    %v2774 = vunpack.c.l.b16 %v2742
    %v2775 = vunpack.c.l.b16 %v2743
    %v2776 = vunpack.c.l.b16 %v2744
    %v2777 = vunpack.c.l.b16 %v2745
    %v2778 = vunpack.c.l.b16 %v2746
    %v2779 = vunpack.c.l.b16 %v2747
    %v2780 = vunpack.c.l.b16 %v2748
    %v2781 = vunpack.c.l.b16 %v2749
    %v2782 = vunpack.c.l.b16 %v2750
    %v2783 = vunpack.c.l.b16 %v2751
    %v2784 = vunpack.c.l.b16 %v2752
    %v2785 = vunpack.c.l.b16 %v2753
    %v2786 = vunpack.c.l.b16 %v2754
    %v2787 = vunpack.c.l.b16 %v2755
    %v2788 = vunpack.c.l.b16 %v2756
    %v2789 = vunpack.c.l.b16 %v2757
    %v2790 = vpack.c.b16 %v2775, %v2774
    %v2791 = vpack.c.b16 %v2777, %v2776
    %v2792 = vpack.c.b16 %v2779, %v2778
    %v2793 = vpack.c.b16 %v2781, %v2780
    %v2794 = vpack.c.b16 %v2783, %v2782
    %v2795 = vpack.c.b16 %v2785, %v2784
    %v2796 = vpack.c.b16 %v2787, %v2786
    %v2797 = vpack.c.b16 %v2789, %v2788
    %2806 = vmatpush.bf16.msra.mxu0 %v2797
    %2807 = vmatpush.bf16.msra.mxu0 %v2796
    %2808 = vmatpush.bf16.msra.mxu0 %v2795
    %2809 = vmatpush.bf16.msra.mxu0 %v2794
    %2810 = vmatpush.bf16.msra.mxu0 %v2793
    %2811 = vmatpush.bf16.msra.mxu0 %v2792
    %2812 = vmatpush.bf16.msra.mxu0 %v2791
    %2813 = vmatpush.bf16.msra.mxu0 %v2790
    %2814 = vmatmul.bf16.gmra.mxu0 %v2740
    %v2815 = vpop.f32.mrf.mxu0
    %v2816 = vadd.f32 0.0, %v2815
    %v2817 = vpop.f32.mrf.mxu0
    %v2818 = vadd.f32 0.0, %v2817
    %2819 = vdwg.mxu0
    %v2820 = vmul.f32 %v2816, %v2738
    %v2821 = vmul.f32 %v2818, %v2739
    %s2822 = scalar_lea.vmem [#allocation5], 168
    %2823 = vst [vmem:[%s2822] sm:$0xff] %v2820
    %2824 = vst [vmem:[%s2822 + $0xb8] sm:$0xff] %v2821
    %s2825 = sadd.s32 %s34, 22
    %p2826 = scmp.lt.s32.totalorder %s2825, 22
    %s2827 = scalar_select %p2826, %s2825, 22
    %s2828 = scalar_lea.vmem %s0, 352
    %v2829 = vld [vmem:[%s2828] sm:$0xff]
    %v2830 = vld [vmem:[%s2828 + $0x8] sm:$0xff]
    %s2831 = scalar_lea.vmem %s1, %s2827
    %v2832 = vld [vmem:[%s2831] sm:$0x1]
    %s2833 = scalar_lea.vmem %s2, %s2827
    %v2834 = vld [vmem:[%s2833] sm:$0x1]
    %2836 = vset.pattern.permute.xlu0 0
    %2837 = vperm.xlu0 %2836, %v2829
    %v2838 = vpop.permute.xlu0 %2837
    %2841 = vset.pattern.permute.xlu0 0
    %2842 = vperm.xlu0 %2841, %v2830
    %v2843 = vpop.permute.xlu0 %2842
    %v2845 = vperm.slane %v2832, 0
    %v2846 = vsub.f32 %v2838, %v2845
    %v2847 = vsub.f32 %v2843, %v2845
    %v2848 = vmul.f32 %v2846, %v2846
    %v2849 = vmul.f32 %v2847, %v2847
    %v2850 = vperm.slane %v2834, 0
    %v2851 = vmul.f32 %v2848, %v2850
    %v2852 = vmul.f32 %v2849, %v2850
    %v2853 = vmul.f32 %v2851, 1.442695
    %v2854 = vpow.pop %v2853
    %v2855 = vmul.f32 %v2852, 1.442695
    %v2856 = vpow.pop %v2855
    %v2857 = vmul.f32 %v2854, 1.442695
    %v2858 = vpow.pop %v2857
    %v2859 = vmul.f32 %v2856, 1.442695
    %v2860 = vpow.pop %v2859
    %2861 = vadd.xlane.f32.xlu0 %v2858
    %v2862 = vpop.xlane.xlu0 %2861
    %2863 = vadd.xlane.f32.xlu0 %v2860
    %v2864 = vpop.xlane.xlu0 %2863
    %v2865 = vrcp.pop %v2862
    %v2866 = vrcp.pop %v2864
    %v2867 = vpack.c.bf16 %v2860, %v2858
    %s2868 = scalar_lea.vmem [#allocation2], 1408
    %v2869 = vld [vmem:[%s2868] sm:$0xf]
    %v2870 = vld [vmem:[%s2868 + $0x4] sm:$0xf]
    %v2871 = vld [vmem:[%s2868 + $0x8] sm:$0xf]
    %v2872 = vld [vmem:[%s2868 + $0xc] sm:$0xf]
    %v2873 = vld [vmem:[%s2868 + $0x10] sm:$0xf]
    %v2874 = vld [vmem:[%s2868 + $0x14] sm:$0xf]
    %v2875 = vld [vmem:[%s2868 + $0x18] sm:$0xf]
    %v2876 = vld [vmem:[%s2868 + $0x1c] sm:$0xf]
    %v2877 = vld [vmem:[%s2868 + $0x20] sm:$0xf]
    %v2878 = vld [vmem:[%s2868 + $0x24] sm:$0xf]
    %v2879 = vld [vmem:[%s2868 + $0x28] sm:$0xf]
    %v2880 = vld [vmem:[%s2868 + $0x2c] sm:$0xf]
    %v2881 = vld [vmem:[%s2868 + $0x30] sm:$0xf]
    %v2882 = vld [vmem:[%s2868 + $0x34] sm:$0xf]
    %v2883 = vld [vmem:[%s2868 + $0x38] sm:$0xf]
    %v2884 = vld [vmem:[%s2868 + $0x3c] sm:$0xf]
    %v2901 = vunpack.c.l.b16 %v2869
    %v2902 = vunpack.c.l.b16 %v2870
    %v2903 = vunpack.c.l.b16 %v2871
    %v2904 = vunpack.c.l.b16 %v2872
    %v2905 = vunpack.c.l.b16 %v2873
    %v2906 = vunpack.c.l.b16 %v2874
    %v2907 = vunpack.c.l.b16 %v2875
    %v2908 = vunpack.c.l.b16 %v2876
    %v2909 = vunpack.c.l.b16 %v2877
    %v2910 = vunpack.c.l.b16 %v2878
    %v2911 = vunpack.c.l.b16 %v2879
    %v2912 = vunpack.c.l.b16 %v2880
    %v2913 = vunpack.c.l.b16 %v2881
    %v2914 = vunpack.c.l.b16 %v2882
    %v2915 = vunpack.c.l.b16 %v2883
    %v2916 = vunpack.c.l.b16 %v2884
    %v2917 = vpack.c.b16 %v2902, %v2901
    %v2918 = vpack.c.b16 %v2904, %v2903
    %v2919 = vpack.c.b16 %v2906, %v2905
    %v2920 = vpack.c.b16 %v2908, %v2907
    %v2921 = vpack.c.b16 %v2910, %v2909
    %v2922 = vpack.c.b16 %v2912, %v2911
    %v2923 = vpack.c.b16 %v2914, %v2913
    %v2924 = vpack.c.b16 %v2916, %v2915
    %2933 = vmatpush.bf16.msra.mxu0 %v2924
    %2934 = vmatpush.bf16.msra.mxu0 %v2923
    %2935 = vmatpush.bf16.msra.mxu0 %v2922
    %2936 = vmatpush.bf16.msra.mxu0 %v2921
    %2937 = vmatpush.bf16.msra.mxu0 %v2920
    %2938 = vmatpush.bf16.msra.mxu0 %v2919
    %2939 = vmatpush.bf16.msra.mxu0 %v2918
    %2940 = vmatpush.bf16.msra.mxu0 %v2917
    %2941 = vmatmul.bf16.gmra.mxu0 %v2867
    %v2942 = vpop.f32.mrf.mxu0
    %v2943 = vadd.f32 0.0, %v2942
    %v2944 = vpop.f32.mrf.mxu0
    %v2945 = vadd.f32 0.0, %v2944
    %2946 = vdwg.mxu0
    %v2947 = vmul.f32 %v2943, %v2865
    %v2948 = vmul.f32 %v2945, %v2866
    %s2949 = scalar_lea.vmem [#allocation5], 176
    %2950 = vst [vmem:[%s2949] sm:$0xff] %v2947
    %2951 = vst [vmem:[%s2949 + $0xb8] sm:$0xff] %v2948
    // Predicated region
    $region22: #{tpu_custom_call.1} parent=1 // pred_check
      _
    $region23: #{tpu_custom_call.1} parent=1 // pred_check_branch
      %2953 = sbr.rel (0) target = $region25
    $region24: #{tpu_custom_call.1} parent=1 // pred_region
      %2955 = vsyncadd [#allocation4], 0
      %s2956 = sshll.u32 [#allocation5], 4
      %s2957 = int_to_ptr.vmem [resolvable:$true] %s2956
      %s2958 = sshll.u32 %s4, 4
      %s2959 = int_to_ptr.hbm [resolvable:$true] %s2958
      %2964 = dma.vmem_to_hbm [thread:$0]  %s2957, 5888, %s2959, [#allocation4], 128, 128, 8
    $region25: #{tpu_custom_call.1} parent=1 // pred_fallthru
      _
    // Predicated region
    $region26: #{tpu_custom_call.1} parent=1 // pred_check
      _
    $region27: #{tpu_custom_call.1} parent=1 // pred_check_branch
      %2966 = sbr.rel (0) target = $region29
    $region28: #{tpu_custom_call.1} parent=1 // pred_region
      %2968 = dma.done [#allocation4], 5888
    $region29: #{tpu_custom_call.1} parent=1 // pred_fallthru
      _
    %2969 = vsyncpa [#allocation3], 1
    %2970 = vsyncpa [#allocation4], 1

</llo_original>
